<compile_context>
chip_gen: v5e
topology: v5e:2x2
jax: 0.10.0
libtpu: 0.0.40
codegen_flags: <defaults>
</compile_context>

<pallas_src>
import math
import jax
import jax.numpy as jnp
from jax.experimental import pallas as pl
from jax.experimental.pallas import tpu as pltpu

# ---- model hyperparameters (small, consistent with the module) ----
D_MODEL = 32
N_HEADS = 4
HEAD_DIM = D_MODEL // N_HEADS
FFN_DIM = 64
N_LAYERS = 2
LN_EPS = 1e-5


def _layernorm(x, gamma, beta):
    mean = jnp.mean(x, axis=-1, keepdims=True)
    var = jnp.mean((x - mean) ** 2, axis=-1, keepdims=True)
    inv = jax.lax.rsqrt(var + LN_EPS)
    return (x - mean) * inv * gamma + beta


def _make_encoder_kernel(B, S, apply_final_norm):
    BS = B * S

    def kernel(x_ref, mask_ref,
               wq_ref, bq_ref, wk_ref, bk_ref, wv_ref, bv_ref,
               wo_ref, bo_ref, w1_ref, b1_ref, w2_ref, b2_ref,
               ln1g_ref, ln1b_ref, ln2g_ref, ln2b_ref,
               fng_ref, fnb_ref, out_ref):
        # Whole batch resident in VMEM; fold batch into the matmul M dimension.
        # (S == 8 so the (B,S,D)<->(B*S,D) reshapes are sublane-tile no-ops.)
        x = x_ref[...].astype(jnp.float32).reshape(BS, D_MODEL)   # (B*S, D)
        mask = mask_ref[...].astype(jnp.float32)                  # (S, S)

        for l in range(N_LAYERS):            # static unroll; weights stay in VMEM
            # weights already (in, out); wq/bq pre-scaled by 1/sqrt(head_dim)
            wq, bq = wq_ref[l], bq_ref[l]
            wk, bk = wk_ref[l], bk_ref[l]
            wv, bv = wv_ref[l], bv_ref[l]
            wo, bo = wo_ref[l], bo_ref[l]
            w1, b1 = w1_ref[l], b1_ref[l]
            w2, b2 = w2_ref[l], b2_ref[l]

            # ---- multi-head self-attention: batched QKV projections (M = B*S) ----
            q = jnp.dot(x, wq, preferred_element_type=jnp.float32) + bq
            k = jnp.dot(x, wk, preferred_element_type=jnp.float32) + bk
            v = jnp.dot(x, wv, preferred_element_type=jnp.float32) + bv
            q3 = q.reshape(B, S, D_MODEL)
            k3 = k.reshape(B, S, D_MODEL)
            v3 = v.reshape(B, S, D_MODEL)

            # Per-head scores/softmax batched over B; each head's context is
            # pushed through the matching rows of W_o and accumulated, which is
            # mathematically identical to concat(heads) @ W_o but avoids the
            # lane-shuffle concatenate.
            attn = jnp.zeros((BS, D_MODEL), jnp.float32)
            for h in range(N_HEADS):         # static unroll over heads
                sl = slice(h * HEAD_DIM, (h + 1) * HEAD_DIM)
                s = jnp.einsum('bqd,bkd->bqk', q3[:, :, sl], k3[:, :, sl],
                               preferred_element_type=jnp.float32) + mask[None]
                s = s - jnp.max(s, axis=-1, keepdims=True)
                p = jnp.exp(s)
                p = p / jnp.sum(p, axis=-1, keepdims=True)
                ctx = jnp.einsum('bqk,bkd->bqd', p, v3[:, :, sl],
                                 preferred_element_type=jnp.float32)
                attn = attn + jnp.dot(ctx.reshape(BS, HEAD_DIM), wo[sl, :],
                                      preferred_element_type=jnp.float32)
            attn = attn + bo

            # ---- residual + layernorm 1 ----
            x = _layernorm(x + attn, ln1g_ref[l], ln1b_ref[l])

            # ---- feed-forward (ReLU) ----
            h1 = jnp.dot(x, w1, preferred_element_type=jnp.float32) + b1
            h1 = jnp.maximum(h1, 0.0)
            h2 = jnp.dot(h1, w2, preferred_element_type=jnp.float32) + b2

            # ---- residual + layernorm 2 ----
            x = _layernorm(x + h2, ln2g_ref[l], ln2b_ref[l])

        if apply_final_norm:
            x = _layernorm(x, fng_ref[...], fnb_ref[...])

        out_ref[...] = x.reshape(B, S, D_MODEL).astype(out_ref.dtype)

    return kernel


def _prep_params(layer_params, norm_params):
    """Stack per-layer params on a leading layer axis, transpose weights to
    (in, out), and fold the attention scale into W_q / b_q (all host-side)."""
    scale = 1.0 / math.sqrt(HEAD_DIM)

    def stack(i):
        return jnp.stack([p[i] for p in layer_params], axis=0)

    def stack_t(i, s=1.0):
        return jnp.stack([jnp.transpose(p[i]) * s for p in layer_params], axis=0)

    wq = stack_t(0, scale)            # (L, D, D)   pre-scaled
    bq = stack(1) * scale             # (L, 1, D)   pre-scaled
    wk = stack_t(2); bk = stack(3)
    wv = stack_t(4); bv = stack(5)
    wo = stack_t(6); bo = stack(7)
    w1 = stack_t(8); b1 = stack(9)    # (L, D, F), (L, 1, F)
    w2 = stack_t(10); b2 = stack(11)  # (L, F, D), (L, 1, D)
    ln1g, ln1b = stack(12), stack(13)
    ln2g, ln2b = stack(14), stack(15)
    if norm_params is not None:
        fng, fnb = norm_params
    else:  # dummies; kernel is traced with apply_final_norm=False and skips them
        fng = jnp.ones((1, D_MODEL), jnp.float32)
        fnb = jnp.zeros((1, D_MODEL), jnp.float32)
    return (wq, bq, wk, bk, wv, bv, wo, bo, w1, b1, w2, b2,
            ln1g, ln1b, ln2g, ln2b, fng, fnb)


def transformer_encoder(src, mask, layer_params, norm_params):
    """Mirrors TransformerEncoder.forward: stacked layers then optional norm,
    fused into a single Pallas kernel invocation (weights resident in VMEM)."""
    B, S, D = src.shape
    assert D == D_MODEL and len(layer_params) == N_LAYERS
    params = _prep_params(layer_params, norm_params)
    kernel = _make_encoder_kernel(B, S, norm_params is not None)
    # Single grid-less invocation: everything fits VMEM on v5e/v6e/v7x.
    # TODO(synk): on v7x a 2-wide "parallel" batch grid would engage both
    # TensorCores; at B=2, S=8 the extra grid steps cost more than they save
    # on v5e/v6e, so a single block is used.
    return pl.pallas_call(
        kernel,
        out_shape=jax.ShapeDtypeStruct((B, S, D), src.dtype),
    )(src, mask, *params)


# ---- pure-JAX reference for correctness checking ----
def _ref_layer(x, mask, p):
    (wq, bq, wk, bk, wv, bv, wo, bo, w1, b1, w2, b2,
     ln1g, ln1b, ln2g, ln2b) = p
    q = x @ wq.T + bq
    k = x @ wk.T + bk
    v = x @ wv.T + bv
    scale = 1.0 / math.sqrt(HEAD_DIM)
    outs = []
    for h in range(N_HEADS):
        sl = slice(h * HEAD_DIM, (h + 1) * HEAD_DIM)
        s = q[:, :, sl] @ jnp.swapaxes(k[:, :, sl], -1, -2) * scale + mask
        p_ = jax.nn.softmax(s, axis=-1)
        outs.append(p_ @ v[:, :, sl])
    attn = jnp.concatenate(outs, axis=-1) @ wo.T + bo
    x = _layernorm(x + attn, ln1g, ln1b)
    h2 = jnp.maximum(x @ w1.T + b1, 0.0) @ w2.T + b2
    return _layernorm(x + h2, ln2g, ln2b)


def _ref_encoder(x, mask, layer_params, norm_params):
    for p in layer_params:
        x = _ref_layer(x, mask, p)
    if norm_params is not None:
        x = _layernorm(x, norm_params[0], norm_params[1])
    return x


def _init_params(key):
    def lin(k, out_d, in_d):
        kw, kb = jax.random.split(k)
        lim = 1.0 / math.sqrt(in_d)
        w = jax.random.uniform(kw, (out_d, in_d), jnp.float32, -lim, lim)
        b = jax.random.uniform(kb, (1, out_d), jnp.float32, -lim, lim)
        return w, b

    layer_params = []
    for i in range(N_LAYERS):
        ks = jax.random.split(jax.random.fold_in(key, i), 6)
        wq, bq = lin(ks[0], D_MODEL, D_MODEL)
        wk, bk = lin(ks[1], D_MODEL, D_MODEL)
        wv, bv = lin(ks[2], D_MODEL, D_MODEL)
        wo, bo = lin(ks[3], D_MODEL, D_MODEL)
        w1, b1 = lin(ks[4], FFN_DIM, D_MODEL)
        w2, b2 = lin(ks[5], D_MODEL, FFN_DIM)
        ln1g = jnp.ones((1, D_MODEL), jnp.float32)
        ln1b = jnp.zeros((1, D_MODEL), jnp.float32)
        ln2g = jnp.ones((1, D_MODEL), jnp.float32)
        ln2b = jnp.zeros((1, D_MODEL), jnp.float32)
        layer_params.append((wq, bq, wk, bk, wv, bv, wo, bo,
                             w1, b1, w2, b2, ln1g, ln1b, ln2g, ln2b))
    norm_params = (jnp.ones((1, D_MODEL), jnp.float32),
                   jnp.zeros((1, D_MODEL), jnp.float32))
    return layer_params, norm_params


if __name__ == "__main__":
    B, S = 2, 8
    key = jax.random.PRNGKey(0)
    k_src, k_par = jax.random.split(key)
    src = jax.random.normal(k_src, (B, S, D_MODEL), jnp.float32)
    mask = jnp.zeros((S, S), jnp.float32)  # additive self-attention mask (no masking)

    layer_params, norm_params = _init_params(k_par)

    out = transformer_encoder(src, mask, layer_params, norm_params)
    out = jax.block_until_ready(out)

    ref = _ref_encoder(src, mask, layer_params, norm_params)
    assert out.shape == (B, S, D_MODEL)
    assert jnp.all(jnp.isfinite(out))
    assert jnp.allclose(out, ref, rtol=1e-2, atol=1e-2)
    print("KERNEL_OK")
</pallas_src>

<mosaic_0001>
module attributes {stable_mosaic.version = 11 : i64} {
  func.func @kernel(%arg0: memref<2x8x32xf32, #tpu.memory_space<vmem>>, %arg1: memref<8x8xf32, #tpu.memory_space<vmem>>, %arg2: memref<2x32x32xf32, #tpu.memory_space<vmem>>, %arg3: memref<2x1x32xf32, #tpu.memory_space<vmem>>, %arg4: memref<2x32x32xf32, #tpu.memory_space<vmem>>, %arg5: memref<2x1x32xf32, #tpu.memory_space<vmem>>, %arg6: memref<2x32x32xf32, #tpu.memory_space<vmem>>, %arg7: memref<2x1x32xf32, #tpu.memory_space<vmem>>, %arg8: memref<2x32x32xf32, #tpu.memory_space<vmem>>, %arg9: memref<2x1x32xf32, #tpu.memory_space<vmem>>, %arg10: memref<2x32x64xf32, #tpu.memory_space<vmem>>, %arg11: memref<2x1x64xf32, #tpu.memory_space<vmem>>, %arg12: memref<2x64x32xf32, #tpu.memory_space<vmem>>, %arg13: memref<2x1x32xf32, #tpu.memory_space<vmem>>, %arg14: memref<2x1x32xf32, #tpu.memory_space<vmem>>, %arg15: memref<2x1x32xf32, #tpu.memory_space<vmem>>, %arg16: memref<2x1x32xf32, #tpu.memory_space<vmem>>, %arg17: memref<2x1x32xf32, #tpu.memory_space<vmem>>, %arg18: memref<1x32xf32, #tpu.memory_space<vmem>>, %arg19: memref<1x32xf32, #tpu.memory_space<vmem>>, %arg20: memref<2x8x32xf32, #tpu.memory_space<vmem>>) attributes {dimension_semantics = [], scalar_prefetch = 0 : i64, scratch_operands = 0 : i64, tpu.core_type = #tpu.core_type<tc>} {
    %c0 = arith.constant 0 : index
    %c0_0 = arith.constant 0 : index
    %c0_1 = arith.constant 0 : index
    %0 = vector.load %arg0[%c0, %c0_0, %c0_1] : memref<2x8x32xf32, #tpu.memory_space<vmem>>, vector<2x8x32xf32>
    %1 = vector.shape_cast %0 : vector<2x8x32xf32> to vector<16x32xf32>
    %c0_2 = arith.constant 0 : index
    %c0_3 = arith.constant 0 : index
    %2 = vector.load %arg1[%c0_2, %c0_3] : memref<8x8xf32, #tpu.memory_space<vmem>>, vector<8x8xf32>
    %c0_4 = arith.constant 0 : index
    %c0_5 = arith.constant 0 : index
    %c0_6 = arith.constant 0 : index
    %3 = vector.load %arg2[%c0_4, %c0_5, %c0_6] : memref<2x32x32xf32, #tpu.memory_space<vmem>>, vector<1x32x32xf32>
    %4 = vector.shape_cast %3 : vector<1x32x32xf32> to vector<32x32xf32>
    %c0_7 = arith.constant 0 : index
    %c0_8 = arith.constant 0 : index
    %c0_9 = arith.constant 0 : index
    %5 = vector.load %arg3[%c0_7, %c0_8, %c0_9] : memref<2x1x32xf32, #tpu.memory_space<vmem>>, vector<1x1x32xf32>
    %6 = vector.shape_cast %5 : vector<1x1x32xf32> to vector<1x32xf32>
    %c0_10 = arith.constant 0 : index
    %c0_11 = arith.constant 0 : index
    %c0_12 = arith.constant 0 : index
    %7 = vector.load %arg4[%c0_10, %c0_11, %c0_12] : memref<2x32x32xf32, #tpu.memory_space<vmem>>, vector<1x32x32xf32>
    %8 = vector.shape_cast %7 : vector<1x32x32xf32> to vector<32x32xf32>
    %c0_13 = arith.constant 0 : index
    %c0_14 = arith.constant 0 : index
    %c0_15 = arith.constant 0 : index
    %9 = vector.load %arg5[%c0_13, %c0_14, %c0_15] : memref<2x1x32xf32, #tpu.memory_space<vmem>>, vector<1x1x32xf32>
    %10 = vector.shape_cast %9 : vector<1x1x32xf32> to vector<1x32xf32>
    %c0_16 = arith.constant 0 : index
    %c0_17 = arith.constant 0 : index
    %c0_18 = arith.constant 0 : index
    %11 = vector.load %arg6[%c0_16, %c0_17, %c0_18] : memref<2x32x32xf32, #tpu.memory_space<vmem>>, vector<1x32x32xf32>
    %12 = vector.shape_cast %11 : vector<1x32x32xf32> to vector<32x32xf32>
    %c0_19 = arith.constant 0 : index
    %c0_20 = arith.constant 0 : index
    %c0_21 = arith.constant 0 : index
    %13 = vector.load %arg7[%c0_19, %c0_20, %c0_21] : memref<2x1x32xf32, #tpu.memory_space<vmem>>, vector<1x1x32xf32>
    %14 = vector.shape_cast %13 : vector<1x1x32xf32> to vector<1x32xf32>
    %c0_22 = arith.constant 0 : index
    %c0_23 = arith.constant 0 : index
    %c0_24 = arith.constant 0 : index
    %15 = vector.load %arg8[%c0_22, %c0_23, %c0_24] : memref<2x32x32xf32, #tpu.memory_space<vmem>>, vector<1x32x32xf32>
    %16 = vector.shape_cast %15 : vector<1x32x32xf32> to vector<32x32xf32>
    %c0_25 = arith.constant 0 : index
    %c0_26 = arith.constant 0 : index
    %c0_27 = arith.constant 0 : index
    %17 = vector.load %arg9[%c0_25, %c0_26, %c0_27] : memref<2x1x32xf32, #tpu.memory_space<vmem>>, vector<1x1x32xf32>
    %18 = vector.shape_cast %17 : vector<1x1x32xf32> to vector<1x32xf32>
    %c0_28 = arith.constant 0 : index
    %c0_29 = arith.constant 0 : index
    %c0_30 = arith.constant 0 : index
    %19 = vector.load %arg10[%c0_28, %c0_29, %c0_30] : memref<2x32x64xf32, #tpu.memory_space<vmem>>, vector<1x32x64xf32>
    %20 = vector.shape_cast %19 : vector<1x32x64xf32> to vector<32x64xf32>
    %c0_31 = arith.constant 0 : index
    %c0_32 = arith.constant 0 : index
    %c0_33 = arith.constant 0 : index
    %21 = vector.load %arg11[%c0_31, %c0_32, %c0_33] : memref<2x1x64xf32, #tpu.memory_space<vmem>>, vector<1x1x64xf32>
    %22 = vector.shape_cast %21 : vector<1x1x64xf32> to vector<1x64xf32>
    %c0_34 = arith.constant 0 : index
    %c0_35 = arith.constant 0 : index
    %c0_36 = arith.constant 0 : index
    %23 = vector.load %arg12[%c0_34, %c0_35, %c0_36] : memref<2x64x32xf32, #tpu.memory_space<vmem>>, vector<1x64x32xf32>
    %24 = vector.shape_cast %23 : vector<1x64x32xf32> to vector<64x32xf32>
    %c0_37 = arith.constant 0 : index
    %c0_38 = arith.constant 0 : index
    %c0_39 = arith.constant 0 : index
    %25 = vector.load %arg13[%c0_37, %c0_38, %c0_39] : memref<2x1x32xf32, #tpu.memory_space<vmem>>, vector<1x1x32xf32>
    %26 = vector.shape_cast %25 : vector<1x1x32xf32> to vector<1x32xf32>
    %cst = arith.constant dense<0.000000e+00> : vector<16x32xf32>
    %27 = tpu.matmul %1, %4, %cst {dimension_numbers = #tpu.dot_dimension_numbers<[1], [0], [0], [1], [0, 0, 1, 1], [], []>} : vector<16x32xf32>, vector<32x32xf32>, vector<16x32xf32> -> vector<16x32xf32>
    %28 = vector.broadcast %6 : vector<1x32xf32> to vector<16x32xf32>
    %29 = arith.addf %27, %28 : vector<16x32xf32>
    %cst_40 = arith.constant dense<0.000000e+00> : vector<16x32xf32>
    %30 = tpu.matmul %1, %8, %cst_40 {dimension_numbers = #tpu.dot_dimension_numbers<[1], [0], [0], [1], [0, 0, 1, 1], [], []>} : vector<16x32xf32>, vector<32x32xf32>, vector<16x32xf32> -> vector<16x32xf32>
    %31 = vector.broadcast %10 : vector<1x32xf32> to vector<16x32xf32>
    %32 = arith.addf %30, %31 : vector<16x32xf32>
    %cst_41 = arith.constant dense<0.000000e+00> : vector<16x32xf32>
    %33 = tpu.matmul %1, %12, %cst_41 {dimension_numbers = #tpu.dot_dimension_numbers<[1], [0], [0], [1], [0, 0, 1, 1], [], []>} : vector<16x32xf32>, vector<32x32xf32>, vector<16x32xf32> -> vector<16x32xf32>
    %34 = vector.broadcast %14 : vector<1x32xf32> to vector<16x32xf32>
    %35 = arith.addf %33, %34 : vector<16x32xf32>
    %36 = vector.shape_cast %29 : vector<16x32xf32> to vector<2x8x32xf32>
    %37 = vector.shape_cast %32 : vector<16x32xf32> to vector<2x8x32xf32>
    %38 = vector.shape_cast %35 : vector<16x32xf32> to vector<2x8x32xf32>
    %cst_42 = arith.constant 0.000000e+00 : f32
    %39 = vector.broadcast %cst_42 : f32 to vector<16x32xf32>
    %40 = vector.extract_strided_slice %36 {offsets = [0, 0, 0], sizes = [2, 8, 8], strides = [1, 1, 1]} : vector<2x8x32xf32> to vector<2x8x8xf32>
    %41 = vector.extract_strided_slice %37 {offsets = [0, 0, 0], sizes = [2, 8, 8], strides = [1, 1, 1]} : vector<2x8x32xf32> to vector<2x8x8xf32>
    "tpu.trace_start"() <{level = 10 : i32, message = "bqd,bkd->bqk"}> : () -> ()
    %cst_43 = arith.constant dense<0.000000e+00> : vector<2x8x8xf32>
    %42 = tpu.matmul %40, %41, %cst_43 {dimension_numbers = #tpu.dot_dimension_numbers<[2], [2], [1], [1], [0, 0, 0, 1, 1, 1], [0], [0]>} : vector<2x8x8xf32>, vector<2x8x8xf32>, vector<2x8x8xf32> -> vector<2x8x8xf32>
    "tpu.trace_stop"() : () -> ()
    %43 = vector.shape_cast %2 : vector<8x8xf32> to vector<1x8x8xf32>
    %44 = vector.broadcast %43 : vector<1x8x8xf32> to vector<2x8x8xf32>
    %45 = arith.addf %42, %44 : vector<2x8x8xf32>
    %cst_44 = arith.constant dense<0xFF800000> : vector<2x8xf32>
    %46 = vector.multi_reduction <maximumf>, %45, %cst_44 [2] : vector<2x8x8xf32> to vector<2x8xf32>
    %47 = vector.shape_cast %46 : vector<2x8xf32> to vector<2x8x1xf32>
    %48 = vector.broadcast %47 : vector<2x8x1xf32> to vector<2x8x8xf32>
    %49 = arith.subf %45, %48 : vector<2x8x8xf32>
    %50 = math.exp %49 : vector<2x8x8xf32>
    %cst_45 = arith.constant dense<0.000000e+00> : vector<2x8xf32>
    %51 = vector.multi_reduction <add>, %50, %cst_45 [2] : vector<2x8x8xf32> to vector<2x8xf32>
    %52 = vector.shape_cast %51 : vector<2x8xf32> to vector<2x8x1xf32>
    %53 = vector.broadcast %52 : vector<2x8x1xf32> to vector<2x8x8xf32>
    %54 = arith.divf %50, %53 : vector<2x8x8xf32>
    %55 = vector.extract_strided_slice %38 {offsets = [0, 0, 0], sizes = [2, 8, 8], strides = [1, 1, 1]} : vector<2x8x32xf32> to vector<2x8x8xf32>
    "tpu.trace_start"() <{level = 10 : i32, message = "bqk,bkd->bqd"}> : () -> ()
    %cst_46 = arith.constant dense<0.000000e+00> : vector<2x8x8xf32>
    %56 = tpu.matmul %54, %55, %cst_46 {dimension_numbers = #tpu.dot_dimension_numbers<[2], [1], [1], [2], [0, 0, 0, 1, 1, 2], [0], [0]>} : vector<2x8x8xf32>, vector<2x8x8xf32>, vector<2x8x8xf32> -> vector<2x8x8xf32>
    "tpu.trace_stop"() : () -> ()
    %57 = vector.shape_cast %56 : vector<2x8x8xf32> to vector<16x8xf32>
    %58 = vector.extract_strided_slice %16 {offsets = [0, 0], sizes = [8, 32], strides = [1, 1]} : vector<32x32xf32> to vector<8x32xf32>
    %cst_47 = arith.constant dense<0.000000e+00> : vector<16x32xf32>
    %59 = tpu.matmul %57, %58, %cst_47 {dimension_numbers = #tpu.dot_dimension_numbers<[1], [0], [0], [1], [0, 0, 1, 1], [], []>} : vector<16x8xf32>, vector<8x32xf32>, vector<16x32xf32> -> vector<16x32xf32>
    %60 = arith.addf %39, %59 : vector<16x32xf32>
    %61 = vector.extract_strided_slice %36 {offsets = [0, 0, 8], sizes = [2, 8, 8], strides = [1, 1, 1]} : vector<2x8x32xf32> to vector<2x8x8xf32>
    %62 = vector.extract_strided_slice %37 {offsets = [0, 0, 8], sizes = [2, 8, 8], strides = [1, 1, 1]} : vector<2x8x32xf32> to vector<2x8x8xf32>
    "tpu.trace_start"() <{level = 10 : i32, message = "bqd,bkd->bqk"}> : () -> ()
    %cst_48 = arith.constant dense<0.000000e+00> : vector<2x8x8xf32>
    %63 = tpu.matmul %61, %62, %cst_48 {dimension_numbers = #tpu.dot_dimension_numbers<[2], [2], [1], [1], [0, 0, 0, 1, 1, 1], [0], [0]>} : vector<2x8x8xf32>, vector<2x8x8xf32>, vector<2x8x8xf32> -> vector<2x8x8xf32>
    "tpu.trace_stop"() : () -> ()
    %64 = vector.shape_cast %2 : vector<8x8xf32> to vector<1x8x8xf32>
    %65 = vector.broadcast %64 : vector<1x8x8xf32> to vector<2x8x8xf32>
    %66 = arith.addf %63, %65 : vector<2x8x8xf32>
    %cst_49 = arith.constant dense<0xFF800000> : vector<2x8xf32>
    %67 = vector.multi_reduction <maximumf>, %66, %cst_49 [2] : vector<2x8x8xf32> to vector<2x8xf32>
    %68 = vector.shape_cast %67 : vector<2x8xf32> to vector<2x8x1xf32>
    %69 = vector.broadcast %68 : vector<2x8x1xf32> to vector<2x8x8xf32>
    %70 = arith.subf %66, %69 : vector<2x8x8xf32>
    %71 = math.exp %70 : vector<2x8x8xf32>
    %cst_50 = arith.constant dense<0.000000e+00> : vector<2x8xf32>
    %72 = vector.multi_reduction <add>, %71, %cst_50 [2] : vector<2x8x8xf32> to vector<2x8xf32>
    %73 = vector.shape_cast %72 : vector<2x8xf32> to vector<2x8x1xf32>
    %74 = vector.broadcast %73 : vector<2x8x1xf32> to vector<2x8x8xf32>
    %75 = arith.divf %71, %74 : vector<2x8x8xf32>
    %76 = vector.extract_strided_slice %38 {offsets = [0, 0, 8], sizes = [2, 8, 8], strides = [1, 1, 1]} : vector<2x8x32xf32> to vector<2x8x8xf32>
    "tpu.trace_start"() <{level = 10 : i32, message = "bqk,bkd->bqd"}> : () -> ()
    %cst_51 = arith.constant dense<0.000000e+00> : vector<2x8x8xf32>
    %77 = tpu.matmul %75, %76, %cst_51 {dimension_numbers = #tpu.dot_dimension_numbers<[2], [1], [1], [2], [0, 0, 0, 1, 1, 2], [0], [0]>} : vector<2x8x8xf32>, vector<2x8x8xf32>, vector<2x8x8xf32> -> vector<2x8x8xf32>
    "tpu.trace_stop"() : () -> ()
    %78 = vector.shape_cast %77 : vector<2x8x8xf32> to vector<16x8xf32>
    %79 = vector.extract_strided_slice %16 {offsets = [8, 0], sizes = [8, 32], strides = [1, 1]} : vector<32x32xf32> to vector<8x32xf32>
    %cst_52 = arith.constant dense<0.000000e+00> : vector<16x32xf32>
    %80 = tpu.matmul %78, %79, %cst_52 {dimension_numbers = #tpu.dot_dimension_numbers<[1], [0], [0], [1], [0, 0, 1, 1], [], []>} : vector<16x8xf32>, vector<8x32xf32>, vector<16x32xf32> -> vector<16x32xf32>
    %81 = arith.addf %60, %80 : vector<16x32xf32>
    %82 = vector.extract_strided_slice %36 {offsets = [0, 0, 16], sizes = [2, 8, 8], strides = [1, 1, 1]} : vector<2x8x32xf32> to vector<2x8x8xf32>
    %83 = vector.extract_strided_slice %37 {offsets = [0, 0, 16], sizes = [2, 8, 8], strides = [1, 1, 1]} : vector<2x8x32xf32> to vector<2x8x8xf32>
    "tpu.trace_start"() <{level = 10 : i32, message = "bqd,bkd->bqk"}> : () -> ()
    %cst_53 = arith.constant dense<0.000000e+00> : vector<2x8x8xf32>
    %84 = tpu.matmul %82, %83, %cst_53 {dimension_numbers = #tpu.dot_dimension_numbers<[2], [2], [1], [1], [0, 0, 0, 1, 1, 1], [0], [0]>} : vector<2x8x8xf32>, vector<2x8x8xf32>, vector<2x8x8xf32> -> vector<2x8x8xf32>
    "tpu.trace_stop"() : () -> ()
    %85 = vector.shape_cast %2 : vector<8x8xf32> to vector<1x8x8xf32>
    %86 = vector.broadcast %85 : vector<1x8x8xf32> to vector<2x8x8xf32>
    %87 = arith.addf %84, %86 : vector<2x8x8xf32>
    %cst_54 = arith.constant dense<0xFF800000> : vector<2x8xf32>
    %88 = vector.multi_reduction <maximumf>, %87, %cst_54 [2] : vector<2x8x8xf32> to vector<2x8xf32>
    %89 = vector.shape_cast %88 : vector<2x8xf32> to vector<2x8x1xf32>
    %90 = vector.broadcast %89 : vector<2x8x1xf32> to vector<2x8x8xf32>
    %91 = arith.subf %87, %90 : vector<2x8x8xf32>
    %92 = math.exp %91 : vector<2x8x8xf32>
    %cst_55 = arith.constant dense<0.000000e+00> : vector<2x8xf32>
    %93 = vector.multi_reduction <add>, %92, %cst_55 [2] : vector<2x8x8xf32> to vector<2x8xf32>
    %94 = vector.shape_cast %93 : vector<2x8xf32> to vector<2x8x1xf32>
    %95 = vector.broadcast %94 : vector<2x8x1xf32> to vector<2x8x8xf32>
    %96 = arith.divf %92, %95 : vector<2x8x8xf32>
    %97 = vector.extract_strided_slice %38 {offsets = [0, 0, 16], sizes = [2, 8, 8], strides = [1, 1, 1]} : vector<2x8x32xf32> to vector<2x8x8xf32>
    "tpu.trace_start"() <{level = 10 : i32, message = "bqk,bkd->bqd"}> : () -> ()
    %cst_56 = arith.constant dense<0.000000e+00> : vector<2x8x8xf32>
    %98 = tpu.matmul %96, %97, %cst_56 {dimension_numbers = #tpu.dot_dimension_numbers<[2], [1], [1], [2], [0, 0, 0, 1, 1, 2], [0], [0]>} : vector<2x8x8xf32>, vector<2x8x8xf32>, vector<2x8x8xf32> -> vector<2x8x8xf32>
    "tpu.trace_stop"() : () -> ()
    %99 = vector.shape_cast %98 : vector<2x8x8xf32> to vector<16x8xf32>
    %100 = vector.extract_strided_slice %16 {offsets = [16, 0], sizes = [8, 32], strides = [1, 1]} : vector<32x32xf32> to vector<8x32xf32>
    %cst_57 = arith.constant dense<0.000000e+00> : vector<16x32xf32>
    %101 = tpu.matmul %99, %100, %cst_57 {dimension_numbers = #tpu.dot_dimension_numbers<[1], [0], [0], [1], [0, 0, 1, 1], [], []>} : vector<16x8xf32>, vector<8x32xf32>, vector<16x32xf32> -> vector<16x32xf32>
    %102 = arith.addf %81, %101 : vector<16x32xf32>
    %103 = vector.extract_strided_slice %36 {offsets = [0, 0, 24], sizes = [2, 8, 8], strides = [1, 1, 1]} : vector<2x8x32xf32> to vector<2x8x8xf32>
    %104 = vector.extract_strided_slice %37 {offsets = [0, 0, 24], sizes = [2, 8, 8], strides = [1, 1, 1]} : vector<2x8x32xf32> to vector<2x8x8xf32>
    "tpu.trace_start"() <{level = 10 : i32, message = "bqd,bkd->bqk"}> : () -> ()
    %cst_58 = arith.constant dense<0.000000e+00> : vector<2x8x8xf32>
    %105 = tpu.matmul %103, %104, %cst_58 {dimension_numbers = #tpu.dot_dimension_numbers<[2], [2], [1], [1], [0, 0, 0, 1, 1, 1], [0], [0]>} : vector<2x8x8xf32>, vector<2x8x8xf32>, vector<2x8x8xf32> -> vector<2x8x8xf32>
    "tpu.trace_stop"() : () -> ()
    %106 = vector.shape_cast %2 : vector<8x8xf32> to vector<1x8x8xf32>
    %107 = vector.broadcast %106 : vector<1x8x8xf32> to vector<2x8x8xf32>
    %108 = arith.addf %105, %107 : vector<2x8x8xf32>
    %cst_59 = arith.constant dense<0xFF800000> : vector<2x8xf32>
    %109 = vector.multi_reduction <maximumf>, %108, %cst_59 [2] : vector<2x8x8xf32> to vector<2x8xf32>
    %110 = vector.shape_cast %109 : vector<2x8xf32> to vector<2x8x1xf32>
    %111 = vector.broadcast %110 : vector<2x8x1xf32> to vector<2x8x8xf32>
    %112 = arith.subf %108, %111 : vector<2x8x8xf32>
    %113 = math.exp %112 : vector<2x8x8xf32>
    %cst_60 = arith.constant dense<0.000000e+00> : vector<2x8xf32>
    %114 = vector.multi_reduction <add>, %113, %cst_60 [2] : vector<2x8x8xf32> to vector<2x8xf32>
    %115 = vector.shape_cast %114 : vector<2x8xf32> to vector<2x8x1xf32>
    %116 = vector.broadcast %115 : vector<2x8x1xf32> to vector<2x8x8xf32>
    %117 = arith.divf %113, %116 : vector<2x8x8xf32>
    %118 = vector.extract_strided_slice %38 {offsets = [0, 0, 24], sizes = [2, 8, 8], strides = [1, 1, 1]} : vector<2x8x32xf32> to vector<2x8x8xf32>
    "tpu.trace_start"() <{level = 10 : i32, message = "bqk,bkd->bqd"}> : () -> ()
    %cst_61 = arith.constant dense<0.000000e+00> : vector<2x8x8xf32>
    %119 = tpu.matmul %117, %118, %cst_61 {dimension_numbers = #tpu.dot_dimension_numbers<[2], [1], [1], [2], [0, 0, 0, 1, 1, 2], [0], [0]>} : vector<2x8x8xf32>, vector<2x8x8xf32>, vector<2x8x8xf32> -> vector<2x8x8xf32>
    "tpu.trace_stop"() : () -> ()
    %120 = vector.shape_cast %119 : vector<2x8x8xf32> to vector<16x8xf32>
    %121 = vector.extract_strided_slice %16 {offsets = [24, 0], sizes = [8, 32], strides = [1, 1]} : vector<32x32xf32> to vector<8x32xf32>
    %cst_62 = arith.constant dense<0.000000e+00> : vector<16x32xf32>
    %122 = tpu.matmul %120, %121, %cst_62 {dimension_numbers = #tpu.dot_dimension_numbers<[1], [0], [0], [1], [0, 0, 1, 1], [], []>} : vector<16x8xf32>, vector<8x32xf32>, vector<16x32xf32> -> vector<16x32xf32>
    %123 = arith.addf %102, %122 : vector<16x32xf32>
    %124 = vector.broadcast %18 : vector<1x32xf32> to vector<16x32xf32>
    %125 = arith.addf %123, %124 : vector<16x32xf32>
    %126 = arith.addf %1, %125 : vector<16x32xf32>
    %c0_63 = arith.constant 0 : index
    %c0_64 = arith.constant 0 : index
    %c0_65 = arith.constant 0 : index
    %127 = vector.load %arg14[%c0_63, %c0_64, %c0_65] : memref<2x1x32xf32, #tpu.memory_space<vmem>>, vector<1x1x32xf32>
    %128 = vector.shape_cast %127 : vector<1x1x32xf32> to vector<1x32xf32>
    %c0_66 = arith.constant 0 : index
    %c0_67 = arith.constant 0 : index
    %c0_68 = arith.constant 0 : index
    %129 = vector.load %arg15[%c0_66, %c0_67, %c0_68] : memref<2x1x32xf32, #tpu.memory_space<vmem>>, vector<1x1x32xf32>
    %130 = vector.shape_cast %129 : vector<1x1x32xf32> to vector<1x32xf32>
    %cst_69 = arith.constant dense<0.000000e+00> : vector<16xf32>
    %131 = vector.multi_reduction <add>, %126, %cst_69 [1] : vector<16x32xf32> to vector<16xf32>
    %132 = vector.shape_cast %131 : vector<16xf32> to vector<16x1xf32>
    %cst_70 = arith.constant 3.200000e+01 : f32
    %133 = vector.broadcast %cst_70 : f32 to vector<16x1xf32>
    %134 = arith.divf %132, %133 : vector<16x1xf32>
    %135 = vector.broadcast %134 : vector<16x1xf32> to vector<16x32xf32>
    %136 = arith.subf %126, %135 : vector<16x32xf32>
    %137 = arith.mulf %136, %136 : vector<16x32xf32>
    %cst_71 = arith.constant dense<0.000000e+00> : vector<16xf32>
    %138 = vector.multi_reduction <add>, %137, %cst_71 [1] : vector<16x32xf32> to vector<16xf32>
    %139 = vector.shape_cast %138 : vector<16xf32> to vector<16x1xf32>
    %cst_72 = arith.constant 3.200000e+01 : f32
    %140 = vector.broadcast %cst_72 : f32 to vector<16x1xf32>
    %141 = arith.divf %139, %140 : vector<16x1xf32>
    %cst_73 = arith.constant 9.99999974E-6 : f32
    %142 = vector.broadcast %cst_73 : f32 to vector<16x1xf32>
    %143 = arith.addf %141, %142 : vector<16x1xf32>
    %144 = math.rsqrt %143 : vector<16x1xf32>
    %145 = vector.broadcast %134 : vector<16x1xf32> to vector<16x32xf32>
    %146 = arith.subf %126, %145 : vector<16x32xf32>
    %147 = vector.broadcast %144 : vector<16x1xf32> to vector<16x32xf32>
    %148 = arith.mulf %146, %147 : vector<16x32xf32>
    %149 = vector.broadcast %128 : vector<1x32xf32> to vector<16x32xf32>
    %150 = arith.mulf %148, %149 : vector<16x32xf32>
    %151 = vector.broadcast %130 : vector<1x32xf32> to vector<16x32xf32>
    %152 = arith.addf %150, %151 : vector<16x32xf32>
    %cst_74 = arith.constant dense<0.000000e+00> : vector<16x64xf32>
    %153 = tpu.matmul %152, %20, %cst_74 {dimension_numbers = #tpu.dot_dimension_numbers<[1], [0], [0], [1], [0, 0, 1, 1], [], []>} : vector<16x32xf32>, vector<32x64xf32>, vector<16x64xf32> -> vector<16x64xf32>
    %154 = vector.broadcast %22 : vector<1x64xf32> to vector<16x64xf32>
    %155 = arith.addf %153, %154 : vector<16x64xf32>
    %cst_75 = arith.constant 0.000000e+00 : f32
    %156 = vector.broadcast %cst_75 : f32 to vector<16x64xf32>
    %157 = arith.maximumf %155, %156 : vector<16x64xf32>
    %cst_76 = arith.constant dense<0.000000e+00> : vector<16x32xf32>
    %158 = tpu.matmul %157, %24, %cst_76 {dimension_numbers = #tpu.dot_dimension_numbers<[1], [0], [0], [1], [0, 0, 1, 1], [], []>} : vector<16x64xf32>, vector<64x32xf32>, vector<16x32xf32> -> vector<16x32xf32>
    %159 = vector.broadcast %26 : vector<1x32xf32> to vector<16x32xf32>
    %160 = arith.addf %158, %159 : vector<16x32xf32>
    %161 = arith.addf %152, %160 : vector<16x32xf32>
    %c0_77 = arith.constant 0 : index
    %c0_78 = arith.constant 0 : index
    %c0_79 = arith.constant 0 : index
    %162 = vector.load %arg16[%c0_77, %c0_78, %c0_79] : memref<2x1x32xf32, #tpu.memory_space<vmem>>, vector<1x1x32xf32>
    %163 = vector.shape_cast %162 : vector<1x1x32xf32> to vector<1x32xf32>
    %c0_80 = arith.constant 0 : index
    %c0_81 = arith.constant 0 : index
    %c0_82 = arith.constant 0 : index
    %164 = vector.load %arg17[%c0_80, %c0_81, %c0_82] : memref<2x1x32xf32, #tpu.memory_space<vmem>>, vector<1x1x32xf32>
    %165 = vector.shape_cast %164 : vector<1x1x32xf32> to vector<1x32xf32>
    %cst_83 = arith.constant dense<0.000000e+00> : vector<16xf32>
    %166 = vector.multi_reduction <add>, %161, %cst_83 [1] : vector<16x32xf32> to vector<16xf32>
    %167 = vector.shape_cast %166 : vector<16xf32> to vector<16x1xf32>
    %cst_84 = arith.constant 3.200000e+01 : f32
    %168 = vector.broadcast %cst_84 : f32 to vector<16x1xf32>
    %169 = arith.divf %167, %168 : vector<16x1xf32>
    %170 = vector.broadcast %169 : vector<16x1xf32> to vector<16x32xf32>
    %171 = arith.subf %161, %170 : vector<16x32xf32>
    %172 = arith.mulf %171, %171 : vector<16x32xf32>
    %cst_85 = arith.constant dense<0.000000e+00> : vector<16xf32>
    %173 = vector.multi_reduction <add>, %172, %cst_85 [1] : vector<16x32xf32> to vector<16xf32>
    %174 = vector.shape_cast %173 : vector<16xf32> to vector<16x1xf32>
    %cst_86 = arith.constant 3.200000e+01 : f32
    %175 = vector.broadcast %cst_86 : f32 to vector<16x1xf32>
    %176 = arith.divf %174, %175 : vector<16x1xf32>
    %cst_87 = arith.constant 9.99999974E-6 : f32
    %177 = vector.broadcast %cst_87 : f32 to vector<16x1xf32>
    %178 = arith.addf %176, %177 : vector<16x1xf32>
    %179 = math.rsqrt %178 : vector<16x1xf32>
    %180 = vector.broadcast %169 : vector<16x1xf32> to vector<16x32xf32>
    %181 = arith.subf %161, %180 : vector<16x32xf32>
    %182 = vector.broadcast %179 : vector<16x1xf32> to vector<16x32xf32>
    %183 = arith.mulf %181, %182 : vector<16x32xf32>
    %184 = vector.broadcast %163 : vector<1x32xf32> to vector<16x32xf32>
    %185 = arith.mulf %183, %184 : vector<16x32xf32>
    %186 = vector.broadcast %165 : vector<1x32xf32> to vector<16x32xf32>
    %187 = arith.addf %185, %186 : vector<16x32xf32>
    %c1 = arith.constant 1 : index
    %c0_88 = arith.constant 0 : index
    %c0_89 = arith.constant 0 : index
    %188 = vector.load %arg2[%c1, %c0_88, %c0_89] : memref<2x32x32xf32, #tpu.memory_space<vmem>>, vector<1x32x32xf32>
    %189 = vector.shape_cast %188 : vector<1x32x32xf32> to vector<32x32xf32>
    %c1_90 = arith.constant 1 : index
    %c0_91 = arith.constant 0 : index
    %c0_92 = arith.constant 0 : index
    %190 = vector.load %arg3[%c1_90, %c0_91, %c0_92] : memref<2x1x32xf32, #tpu.memory_space<vmem>>, vector<1x1x32xf32>
    %191 = vector.shape_cast %190 : vector<1x1x32xf32> to vector<1x32xf32>
    %c1_93 = arith.constant 1 : index
    %c0_94 = arith.constant 0 : index
    %c0_95 = arith.constant 0 : index
    %192 = vector.load %arg4[%c1_93, %c0_94, %c0_95] : memref<2x32x32xf32, #tpu.memory_space<vmem>>, vector<1x32x32xf32>
    %193 = vector.shape_cast %192 : vector<1x32x32xf32> to vector<32x32xf32>
    %c1_96 = arith.constant 1 : index
    %c0_97 = arith.constant 0 : index
    %c0_98 = arith.constant 0 : index
    %194 = vector.load %arg5[%c1_96, %c0_97, %c0_98] : memref<2x1x32xf32, #tpu.memory_space<vmem>>, vector<1x1x32xf32>
    %195 = vector.shape_cast %194 : vector<1x1x32xf32> to vector<1x32xf32>
    %c1_99 = arith.constant 1 : index
    %c0_100 = arith.constant 0 : index
    %c0_101 = arith.constant 0 : index
    %196 = vector.load %arg6[%c1_99, %c0_100, %c0_101] : memref<2x32x32xf32, #tpu.memory_space<vmem>>, vector<1x32x32xf32>
    %197 = vector.shape_cast %196 : vector<1x32x32xf32> to vector<32x32xf32>
    %c1_102 = arith.constant 1 : index
    %c0_103 = arith.constant 0 : index
    %c0_104 = arith.constant 0 : index
    %198 = vector.load %arg7[%c1_102, %c0_103, %c0_104] : memref<2x1x32xf32, #tpu.memory_space<vmem>>, vector<1x1x32xf32>
    %199 = vector.shape_cast %198 : vector<1x1x32xf32> to vector<1x32xf32>
    %c1_105 = arith.constant 1 : index
    %c0_106 = arith.constant 0 : index
    %c0_107 = arith.constant 0 : index
    %200 = vector.load %arg8[%c1_105, %c0_106, %c0_107] : memref<2x32x32xf32, #tpu.memory_space<vmem>>, vector<1x32x32xf32>
    %201 = vector.shape_cast %200 : vector<1x32x32xf32> to vector<32x32xf32>
    %c1_108 = arith.constant 1 : index
    %c0_109 = arith.constant 0 : index
    %c0_110 = arith.constant 0 : index
    %202 = vector.load %arg9[%c1_108, %c0_109, %c0_110] : memref<2x1x32xf32, #tpu.memory_space<vmem>>, vector<1x1x32xf32>
    %203 = vector.shape_cast %202 : vector<1x1x32xf32> to vector<1x32xf32>
    %c1_111 = arith.constant 1 : index
    %c0_112 = arith.constant 0 : index
    %c0_113 = arith.constant 0 : index
    %204 = vector.load %arg10[%c1_111, %c0_112, %c0_113] : memref<2x32x64xf32, #tpu.memory_space<vmem>>, vector<1x32x64xf32>
    %205 = vector.shape_cast %204 : vector<1x32x64xf32> to vector<32x64xf32>
    %c1_114 = arith.constant 1 : index
    %c0_115 = arith.constant 0 : index
    %c0_116 = arith.constant 0 : index
    %206 = vector.load %arg11[%c1_114, %c0_115, %c0_116] : memref<2x1x64xf32, #tpu.memory_space<vmem>>, vector<1x1x64xf32>
    %207 = vector.shape_cast %206 : vector<1x1x64xf32> to vector<1x64xf32>
    %c1_117 = arith.constant 1 : index
    %c0_118 = arith.constant 0 : index
    %c0_119 = arith.constant 0 : index
    %208 = vector.load %arg12[%c1_117, %c0_118, %c0_119] : memref<2x64x32xf32, #tpu.memory_space<vmem>>, vector<1x64x32xf32>
    %209 = vector.shape_cast %208 : vector<1x64x32xf32> to vector<64x32xf32>
    %c1_120 = arith.constant 1 : index
    %c0_121 = arith.constant 0 : index
    %c0_122 = arith.constant 0 : index
    %210 = vector.load %arg13[%c1_120, %c0_121, %c0_122] : memref<2x1x32xf32, #tpu.memory_space<vmem>>, vector<1x1x32xf32>
    %211 = vector.shape_cast %210 : vector<1x1x32xf32> to vector<1x32xf32>
    %cst_123 = arith.constant dense<0.000000e+00> : vector<16x32xf32>
    %212 = tpu.matmul %187, %189, %cst_123 {dimension_numbers = #tpu.dot_dimension_numbers<[1], [0], [0], [1], [0, 0, 1, 1], [], []>} : vector<16x32xf32>, vector<32x32xf32>, vector<16x32xf32> -> vector<16x32xf32>
    %213 = vector.broadcast %191 : vector<1x32xf32> to vector<16x32xf32>
    %214 = arith.addf %212, %213 : vector<16x32xf32>
    %cst_124 = arith.constant dense<0.000000e+00> : vector<16x32xf32>
    %215 = tpu.matmul %187, %193, %cst_124 {dimension_numbers = #tpu.dot_dimension_numbers<[1], [0], [0], [1], [0, 0, 1, 1], [], []>} : vector<16x32xf32>, vector<32x32xf32>, vector<16x32xf32> -> vector<16x32xf32>
    %216 = vector.broadcast %195 : vector<1x32xf32> to vector<16x32xf32>
    %217 = arith.addf %215, %216 : vector<16x32xf32>
    %cst_125 = arith.constant dense<0.000000e+00> : vector<16x32xf32>
    %218 = tpu.matmul %187, %197, %cst_125 {dimension_numbers = #tpu.dot_dimension_numbers<[1], [0], [0], [1], [0, 0, 1, 1], [], []>} : vector<16x32xf32>, vector<32x32xf32>, vector<16x32xf32> -> vector<16x32xf32>
    %219 = vector.broadcast %199 : vector<1x32xf32> to vector<16x32xf32>
    %220 = arith.addf %218, %219 : vector<16x32xf32>
    %221 = vector.shape_cast %214 : vector<16x32xf32> to vector<2x8x32xf32>
    %222 = vector.shape_cast %217 : vector<16x32xf32> to vector<2x8x32xf32>
    %223 = vector.shape_cast %220 : vector<16x32xf32> to vector<2x8x32xf32>
    %cst_126 = arith.constant 0.000000e+00 : f32
    %224 = vector.broadcast %cst_126 : f32 to vector<16x32xf32>
    %225 = vector.extract_strided_slice %221 {offsets = [0, 0, 0], sizes = [2, 8, 8], strides = [1, 1, 1]} : vector<2x8x32xf32> to vector<2x8x8xf32>
    %226 = vector.extract_strided_slice %222 {offsets = [0, 0, 0], sizes = [2, 8, 8], strides = [1, 1, 1]} : vector<2x8x32xf32> to vector<2x8x8xf32>
    "tpu.trace_start"() <{level = 10 : i32, message = "bqd,bkd->bqk"}> : () -> ()
    %cst_127 = arith.constant dense<0.000000e+00> : vector<2x8x8xf32>
    %227 = tpu.matmul %225, %226, %cst_127 {dimension_numbers = #tpu.dot_dimension_numbers<[2], [2], [1], [1], [0, 0, 0, 1, 1, 1], [0], [0]>} : vector<2x8x8xf32>, vector<2x8x8xf32>, vector<2x8x8xf32> -> vector<2x8x8xf32>
    "tpu.trace_stop"() : () -> ()
    %228 = vector.shape_cast %2 : vector<8x8xf32> to vector<1x8x8xf32>
    %229 = vector.broadcast %228 : vector<1x8x8xf32> to vector<2x8x8xf32>
    %230 = arith.addf %227, %229 : vector<2x8x8xf32>
    %cst_128 = arith.constant dense<0xFF800000> : vector<2x8xf32>
    %231 = vector.multi_reduction <maximumf>, %230, %cst_128 [2] : vector<2x8x8xf32> to vector<2x8xf32>
    %232 = vector.shape_cast %231 : vector<2x8xf32> to vector<2x8x1xf32>
    %233 = vector.broadcast %232 : vector<2x8x1xf32> to vector<2x8x8xf32>
    %234 = arith.subf %230, %233 : vector<2x8x8xf32>
    %235 = math.exp %234 : vector<2x8x8xf32>
    %cst_129 = arith.constant dense<0.000000e+00> : vector<2x8xf32>
    %236 = vector.multi_reduction <add>, %235, %cst_129 [2] : vector<2x8x8xf32> to vector<2x8xf32>
    %237 = vector.shape_cast %236 : vector<2x8xf32> to vector<2x8x1xf32>
    %238 = vector.broadcast %237 : vector<2x8x1xf32> to vector<2x8x8xf32>
    %239 = arith.divf %235, %238 : vector<2x8x8xf32>
    %240 = vector.extract_strided_slice %223 {offsets = [0, 0, 0], sizes = [2, 8, 8], strides = [1, 1, 1]} : vector<2x8x32xf32> to vector<2x8x8xf32>
    "tpu.trace_start"() <{level = 10 : i32, message = "bqk,bkd->bqd"}> : () -> ()
    %cst_130 = arith.constant dense<0.000000e+00> : vector<2x8x8xf32>
    %241 = tpu.matmul %239, %240, %cst_130 {dimension_numbers = #tpu.dot_dimension_numbers<[2], [1], [1], [2], [0, 0, 0, 1, 1, 2], [0], [0]>} : vector<2x8x8xf32>, vector<2x8x8xf32>, vector<2x8x8xf32> -> vector<2x8x8xf32>
    "tpu.trace_stop"() : () -> ()
    %242 = vector.shape_cast %241 : vector<2x8x8xf32> to vector<16x8xf32>
    %243 = vector.extract_strided_slice %201 {offsets = [0, 0], sizes = [8, 32], strides = [1, 1]} : vector<32x32xf32> to vector<8x32xf32>
    %cst_131 = arith.constant dense<0.000000e+00> : vector<16x32xf32>
    %244 = tpu.matmul %242, %243, %cst_131 {dimension_numbers = #tpu.dot_dimension_numbers<[1], [0], [0], [1], [0, 0, 1, 1], [], []>} : vector<16x8xf32>, vector<8x32xf32>, vector<16x32xf32> -> vector<16x32xf32>
    %245 = arith.addf %224, %244 : vector<16x32xf32>
    %246 = vector.extract_strided_slice %221 {offsets = [0, 0, 8], sizes = [2, 8, 8], strides = [1, 1, 1]} : vector<2x8x32xf32> to vector<2x8x8xf32>
    %247 = vector.extract_strided_slice %222 {offsets = [0, 0, 8], sizes = [2, 8, 8], strides = [1, 1, 1]} : vector<2x8x32xf32> to vector<2x8x8xf32>
    "tpu.trace_start"() <{level = 10 : i32, message = "bqd,bkd->bqk"}> : () -> ()
    %cst_132 = arith.constant dense<0.000000e+00> : vector<2x8x8xf32>
    %248 = tpu.matmul %246, %247, %cst_132 {dimension_numbers = #tpu.dot_dimension_numbers<[2], [2], [1], [1], [0, 0, 0, 1, 1, 1], [0], [0]>} : vector<2x8x8xf32>, vector<2x8x8xf32>, vector<2x8x8xf32> -> vector<2x8x8xf32>
    "tpu.trace_stop"() : () -> ()
    %249 = vector.shape_cast %2 : vector<8x8xf32> to vector<1x8x8xf32>
    %250 = vector.broadcast %249 : vector<1x8x8xf32> to vector<2x8x8xf32>
    %251 = arith.addf %248, %250 : vector<2x8x8xf32>
    %cst_133 = arith.constant dense<0xFF800000> : vector<2x8xf32>
    %252 = vector.multi_reduction <maximumf>, %251, %cst_133 [2] : vector<2x8x8xf32> to vector<2x8xf32>
    %253 = vector.shape_cast %252 : vector<2x8xf32> to vector<2x8x1xf32>
    %254 = vector.broadcast %253 : vector<2x8x1xf32> to vector<2x8x8xf32>
    %255 = arith.subf %251, %254 : vector<2x8x8xf32>
    %256 = math.exp %255 : vector<2x8x8xf32>
    %cst_134 = arith.constant dense<0.000000e+00> : vector<2x8xf32>
    %257 = vector.multi_reduction <add>, %256, %cst_134 [2] : vector<2x8x8xf32> to vector<2x8xf32>
    %258 = vector.shape_cast %257 : vector<2x8xf32> to vector<2x8x1xf32>
    %259 = vector.broadcast %258 : vector<2x8x1xf32> to vector<2x8x8xf32>
    %260 = arith.divf %256, %259 : vector<2x8x8xf32>
    %261 = vector.extract_strided_slice %223 {offsets = [0, 0, 8], sizes = [2, 8, 8], strides = [1, 1, 1]} : vector<2x8x32xf32> to vector<2x8x8xf32>
    "tpu.trace_start"() <{level = 10 : i32, message = "bqk,bkd->bqd"}> : () -> ()
    %cst_135 = arith.constant dense<0.000000e+00> : vector<2x8x8xf32>
    %262 = tpu.matmul %260, %261, %cst_135 {dimension_numbers = #tpu.dot_dimension_numbers<[2], [1], [1], [2], [0, 0, 0, 1, 1, 2], [0], [0]>} : vector<2x8x8xf32>, vector<2x8x8xf32>, vector<2x8x8xf32> -> vector<2x8x8xf32>
    "tpu.trace_stop"() : () -> ()
    %263 = vector.shape_cast %262 : vector<2x8x8xf32> to vector<16x8xf32>
    %264 = vector.extract_strided_slice %201 {offsets = [8, 0], sizes = [8, 32], strides = [1, 1]} : vector<32x32xf32> to vector<8x32xf32>
    %cst_136 = arith.constant dense<0.000000e+00> : vector<16x32xf32>
    %265 = tpu.matmul %263, %264, %cst_136 {dimension_numbers = #tpu.dot_dimension_numbers<[1], [0], [0], [1], [0, 0, 1, 1], [], []>} : vector<16x8xf32>, vector<8x32xf32>, vector<16x32xf32> -> vector<16x32xf32>
    %266 = arith.addf %245, %265 : vector<16x32xf32>
    %267 = vector.extract_strided_slice %221 {offsets = [0, 0, 16], sizes = [2, 8, 8], strides = [1, 1, 1]} : vector<2x8x32xf32> to vector<2x8x8xf32>
    %268 = vector.extract_strided_slice %222 {offsets = [0, 0, 16], sizes = [2, 8, 8], strides = [1, 1, 1]} : vector<2x8x32xf32> to vector<2x8x8xf32>
    "tpu.trace_start"() <{level = 10 : i32, message = "bqd,bkd->bqk"}> : () -> ()
    %cst_137 = arith.constant dense<0.000000e+00> : vector<2x8x8xf32>
    %269 = tpu.matmul %267, %268, %cst_137 {dimension_numbers = #tpu.dot_dimension_numbers<[2], [2], [1], [1], [0, 0, 0, 1, 1, 1], [0], [0]>} : vector<2x8x8xf32>, vector<2x8x8xf32>, vector<2x8x8xf32> -> vector<2x8x8xf32>
    "tpu.trace_stop"() : () -> ()
    %270 = vector.shape_cast %2 : vector<8x8xf32> to vector<1x8x8xf32>
    %271 = vector.broadcast %270 : vector<1x8x8xf32> to vector<2x8x8xf32>
    %272 = arith.addf %269, %271 : vector<2x8x8xf32>
    %cst_138 = arith.constant dense<0xFF800000> : vector<2x8xf32>
    %273 = vector.multi_reduction <maximumf>, %272, %cst_138 [2] : vector<2x8x8xf32> to vector<2x8xf32>
    %274 = vector.shape_cast %273 : vector<2x8xf32> to vector<2x8x1xf32>
    %275 = vector.broadcast %274 : vector<2x8x1xf32> to vector<2x8x8xf32>
    %276 = arith.subf %272, %275 : vector<2x8x8xf32>
    %277 = math.exp %276 : vector<2x8x8xf32>
    %cst_139 = arith.constant dense<0.000000e+00> : vector<2x8xf32>
    %278 = vector.multi_reduction <add>, %277, %cst_139 [2] : vector<2x8x8xf32> to vector<2x8xf32>
    %279 = vector.shape_cast %278 : vector<2x8xf32> to vector<2x8x1xf32>
    %280 = vector.broadcast %279 : vector<2x8x1xf32> to vector<2x8x8xf32>
    %281 = arith.divf %277, %280 : vector<2x8x8xf32>
    %282 = vector.extract_strided_slice %223 {offsets = [0, 0, 16], sizes = [2, 8, 8], strides = [1, 1, 1]} : vector<2x8x32xf32> to vector<2x8x8xf32>
    "tpu.trace_start"() <{level = 10 : i32, message = "bqk,bkd->bqd"}> : () -> ()
    %cst_140 = arith.constant dense<0.000000e+00> : vector<2x8x8xf32>
    %283 = tpu.matmul %281, %282, %cst_140 {dimension_numbers = #tpu.dot_dimension_numbers<[2], [1], [1], [2], [0, 0, 0, 1, 1, 2], [0], [0]>} : vector<2x8x8xf32>, vector<2x8x8xf32>, vector<2x8x8xf32> -> vector<2x8x8xf32>
    "tpu.trace_stop"() : () -> ()
    %284 = vector.shape_cast %283 : vector<2x8x8xf32> to vector<16x8xf32>
    %285 = vector.extract_strided_slice %201 {offsets = [16, 0], sizes = [8, 32], strides = [1, 1]} : vector<32x32xf32> to vector<8x32xf32>
    %cst_141 = arith.constant dense<0.000000e+00> : vector<16x32xf32>
    %286 = tpu.matmul %284, %285, %cst_141 {dimension_numbers = #tpu.dot_dimension_numbers<[1], [0], [0], [1], [0, 0, 1, 1], [], []>} : vector<16x8xf32>, vector<8x32xf32>, vector<16x32xf32> -> vector<16x32xf32>
    %287 = arith.addf %266, %286 : vector<16x32xf32>
    %288 = vector.extract_strided_slice %221 {offsets = [0, 0, 24], sizes = [2, 8, 8], strides = [1, 1, 1]} : vector<2x8x32xf32> to vector<2x8x8xf32>
    %289 = vector.extract_strided_slice %222 {offsets = [0, 0, 24], sizes = [2, 8, 8], strides = [1, 1, 1]} : vector<2x8x32xf32> to vector<2x8x8xf32>
    "tpu.trace_start"() <{level = 10 : i32, message = "bqd,bkd->bqk"}> : () -> ()
    %cst_142 = arith.constant dense<0.000000e+00> : vector<2x8x8xf32>
    %290 = tpu.matmul %288, %289, %cst_142 {dimension_numbers = #tpu.dot_dimension_numbers<[2], [2], [1], [1], [0, 0, 0, 1, 1, 1], [0], [0]>} : vector<2x8x8xf32>, vector<2x8x8xf32>, vector<2x8x8xf32> -> vector<2x8x8xf32>
    "tpu.trace_stop"() : () -> ()
    %291 = vector.shape_cast %2 : vector<8x8xf32> to vector<1x8x8xf32>
    %292 = vector.broadcast %291 : vector<1x8x8xf32> to vector<2x8x8xf32>
    %293 = arith.addf %290, %292 : vector<2x8x8xf32>
    %cst_143 = arith.constant dense<0xFF800000> : vector<2x8xf32>
    %294 = vector.multi_reduction <maximumf>, %293, %cst_143 [2] : vector<2x8x8xf32> to vector<2x8xf32>
    %295 = vector.shape_cast %294 : vector<2x8xf32> to vector<2x8x1xf32>
    %296 = vector.broadcast %295 : vector<2x8x1xf32> to vector<2x8x8xf32>
    %297 = arith.subf %293, %296 : vector<2x8x8xf32>
    %298 = math.exp %297 : vector<2x8x8xf32>
    %cst_144 = arith.constant dense<0.000000e+00> : vector<2x8xf32>
    %299 = vector.multi_reduction <add>, %298, %cst_144 [2] : vector<2x8x8xf32> to vector<2x8xf32>
    %300 = vector.shape_cast %299 : vector<2x8xf32> to vector<2x8x1xf32>
    %301 = vector.broadcast %300 : vector<2x8x1xf32> to vector<2x8x8xf32>
    %302 = arith.divf %298, %301 : vector<2x8x8xf32>
    %303 = vector.extract_strided_slice %223 {offsets = [0, 0, 24], sizes = [2, 8, 8], strides = [1, 1, 1]} : vector<2x8x32xf32> to vector<2x8x8xf32>
    "tpu.trace_start"() <{level = 10 : i32, message = "bqk,bkd->bqd"}> : () -> ()
    %cst_145 = arith.constant dense<0.000000e+00> : vector<2x8x8xf32>
    %304 = tpu.matmul %302, %303, %cst_145 {dimension_numbers = #tpu.dot_dimension_numbers<[2], [1], [1], [2], [0, 0, 0, 1, 1, 2], [0], [0]>} : vector<2x8x8xf32>, vector<2x8x8xf32>, vector<2x8x8xf32> -> vector<2x8x8xf32>
    "tpu.trace_stop"() : () -> ()
    %305 = vector.shape_cast %304 : vector<2x8x8xf32> to vector<16x8xf32>
    %306 = vector.extract_strided_slice %201 {offsets = [24, 0], sizes = [8, 32], strides = [1, 1]} : vector<32x32xf32> to vector<8x32xf32>
    %cst_146 = arith.constant dense<0.000000e+00> : vector<16x32xf32>
    %307 = tpu.matmul %305, %306, %cst_146 {dimension_numbers = #tpu.dot_dimension_numbers<[1], [0], [0], [1], [0, 0, 1, 1], [], []>} : vector<16x8xf32>, vector<8x32xf32>, vector<16x32xf32> -> vector<16x32xf32>
    %308 = arith.addf %287, %307 : vector<16x32xf32>
    %309 = vector.broadcast %203 : vector<1x32xf32> to vector<16x32xf32>
    %310 = arith.addf %308, %309 : vector<16x32xf32>
    %311 = arith.addf %187, %310 : vector<16x32xf32>
    %c1_147 = arith.constant 1 : index
    %c0_148 = arith.constant 0 : index
    %c0_149 = arith.constant 0 : index
    %312 = vector.load %arg14[%c1_147, %c0_148, %c0_149] : memref<2x1x32xf32, #tpu.memory_space<vmem>>, vector<1x1x32xf32>
    %313 = vector.shape_cast %312 : vector<1x1x32xf32> to vector<1x32xf32>
    %c1_150 = arith.constant 1 : index
    %c0_151 = arith.constant 0 : index
    %c0_152 = arith.constant 0 : index
    %314 = vector.load %arg15[%c1_150, %c0_151, %c0_152] : memref<2x1x32xf32, #tpu.memory_space<vmem>>, vector<1x1x32xf32>
    %315 = vector.shape_cast %314 : vector<1x1x32xf32> to vector<1x32xf32>
    %cst_153 = arith.constant dense<0.000000e+00> : vector<16xf32>
    %316 = vector.multi_reduction <add>, %311, %cst_153 [1] : vector<16x32xf32> to vector<16xf32>
    %317 = vector.shape_cast %316 : vector<16xf32> to vector<16x1xf32>
    %cst_154 = arith.constant 3.200000e+01 : f32
    %318 = vector.broadcast %cst_154 : f32 to vector<16x1xf32>
    %319 = arith.divf %317, %318 : vector<16x1xf32>
    %320 = vector.broadcast %319 : vector<16x1xf32> to vector<16x32xf32>
    %321 = arith.subf %311, %320 : vector<16x32xf32>
    %322 = arith.mulf %321, %321 : vector<16x32xf32>
    %cst_155 = arith.constant dense<0.000000e+00> : vector<16xf32>
    %323 = vector.multi_reduction <add>, %322, %cst_155 [1] : vector<16x32xf32> to vector<16xf32>
    %324 = vector.shape_cast %323 : vector<16xf32> to vector<16x1xf32>
    %cst_156 = arith.constant 3.200000e+01 : f32
    %325 = vector.broadcast %cst_156 : f32 to vector<16x1xf32>
    %326 = arith.divf %324, %325 : vector<16x1xf32>
    %cst_157 = arith.constant 9.99999974E-6 : f32
    %327 = vector.broadcast %cst_157 : f32 to vector<16x1xf32>
    %328 = arith.addf %326, %327 : vector<16x1xf32>
    %329 = math.rsqrt %328 : vector<16x1xf32>
    %330 = vector.broadcast %319 : vector<16x1xf32> to vector<16x32xf32>
    %331 = arith.subf %311, %330 : vector<16x32xf32>
    %332 = vector.broadcast %329 : vector<16x1xf32> to vector<16x32xf32>
    %333 = arith.mulf %331, %332 : vector<16x32xf32>
    %334 = vector.broadcast %313 : vector<1x32xf32> to vector<16x32xf32>
    %335 = arith.mulf %333, %334 : vector<16x32xf32>
    %336 = vector.broadcast %315 : vector<1x32xf32> to vector<16x32xf32>
    %337 = arith.addf %335, %336 : vector<16x32xf32>
    %cst_158 = arith.constant dense<0.000000e+00> : vector<16x64xf32>
    %338 = tpu.matmul %337, %205, %cst_158 {dimension_numbers = #tpu.dot_dimension_numbers<[1], [0], [0], [1], [0, 0, 1, 1], [], []>} : vector<16x32xf32>, vector<32x64xf32>, vector<16x64xf32> -> vector<16x64xf32>
    %339 = vector.broadcast %207 : vector<1x64xf32> to vector<16x64xf32>
    %340 = arith.addf %338, %339 : vector<16x64xf32>
    %cst_159 = arith.constant 0.000000e+00 : f32
    %341 = vector.broadcast %cst_159 : f32 to vector<16x64xf32>
    %342 = arith.maximumf %340, %341 : vector<16x64xf32>
    %cst_160 = arith.constant dense<0.000000e+00> : vector<16x32xf32>
    %343 = tpu.matmul %342, %209, %cst_160 {dimension_numbers = #tpu.dot_dimension_numbers<[1], [0], [0], [1], [0, 0, 1, 1], [], []>} : vector<16x64xf32>, vector<64x32xf32>, vector<16x32xf32> -> vector<16x32xf32>
    %344 = vector.broadcast %211 : vector<1x32xf32> to vector<16x32xf32>
    %345 = arith.addf %343, %344 : vector<16x32xf32>
    %346 = arith.addf %337, %345 : vector<16x32xf32>
    %c1_161 = arith.constant 1 : index
    %c0_162 = arith.constant 0 : index
    %c0_163 = arith.constant 0 : index
    %347 = vector.load %arg16[%c1_161, %c0_162, %c0_163] : memref<2x1x32xf32, #tpu.memory_space<vmem>>, vector<1x1x32xf32>
    %348 = vector.shape_cast %347 : vector<1x1x32xf32> to vector<1x32xf32>
    %c1_164 = arith.constant 1 : index
    %c0_165 = arith.constant 0 : index
    %c0_166 = arith.constant 0 : index
    %349 = vector.load %arg17[%c1_164, %c0_165, %c0_166] : memref<2x1x32xf32, #tpu.memory_space<vmem>>, vector<1x1x32xf32>
    %350 = vector.shape_cast %349 : vector<1x1x32xf32> to vector<1x32xf32>
    %cst_167 = arith.constant dense<0.000000e+00> : vector<16xf32>
    %351 = vector.multi_reduction <add>, %346, %cst_167 [1] : vector<16x32xf32> to vector<16xf32>
    %352 = vector.shape_cast %351 : vector<16xf32> to vector<16x1xf32>
    %cst_168 = arith.constant 3.200000e+01 : f32
    %353 = vector.broadcast %cst_168 : f32 to vector<16x1xf32>
    %354 = arith.divf %352, %353 : vector<16x1xf32>
    %355 = vector.broadcast %354 : vector<16x1xf32> to vector<16x32xf32>
    %356 = arith.subf %346, %355 : vector<16x32xf32>
    %357 = arith.mulf %356, %356 : vector<16x32xf32>
    %cst_169 = arith.constant dense<0.000000e+00> : vector<16xf32>
    %358 = vector.multi_reduction <add>, %357, %cst_169 [1] : vector<16x32xf32> to vector<16xf32>
    %359 = vector.shape_cast %358 : vector<16xf32> to vector<16x1xf32>
    %cst_170 = arith.constant 3.200000e+01 : f32
    %360 = vector.broadcast %cst_170 : f32 to vector<16x1xf32>
    %361 = arith.divf %359, %360 : vector<16x1xf32>
    %cst_171 = arith.constant 9.99999974E-6 : f32
    %362 = vector.broadcast %cst_171 : f32 to vector<16x1xf32>
    %363 = arith.addf %361, %362 : vector<16x1xf32>
    %364 = math.rsqrt %363 : vector<16x1xf32>
    %365 = vector.broadcast %354 : vector<16x1xf32> to vector<16x32xf32>
    %366 = arith.subf %346, %365 : vector<16x32xf32>
    %367 = vector.broadcast %364 : vector<16x1xf32> to vector<16x32xf32>
    %368 = arith.mulf %366, %367 : vector<16x32xf32>
    %369 = vector.broadcast %348 : vector<1x32xf32> to vector<16x32xf32>
    %370 = arith.mulf %368, %369 : vector<16x32xf32>
    %371 = vector.broadcast %350 : vector<1x32xf32> to vector<16x32xf32>
    %372 = arith.addf %370, %371 : vector<16x32xf32>
    %c0_172 = arith.constant 0 : index
    %c0_173 = arith.constant 0 : index
    %373 = vector.load %arg18[%c0_172, %c0_173] : memref<1x32xf32, #tpu.memory_space<vmem>>, vector<1x32xf32>
    %c0_174 = arith.constant 0 : index
    %c0_175 = arith.constant 0 : index
    %374 = vector.load %arg19[%c0_174, %c0_175] : memref<1x32xf32, #tpu.memory_space<vmem>>, vector<1x32xf32>
    %cst_176 = arith.constant dense<0.000000e+00> : vector<16xf32>
    %375 = vector.multi_reduction <add>, %372, %cst_176 [1] : vector<16x32xf32> to vector<16xf32>
    %376 = vector.shape_cast %375 : vector<16xf32> to vector<16x1xf32>
    %cst_177 = arith.constant 3.200000e+01 : f32
    %377 = vector.broadcast %cst_177 : f32 to vector<16x1xf32>
    %378 = arith.divf %376, %377 : vector<16x1xf32>
    %379 = vector.broadcast %378 : vector<16x1xf32> to vector<16x32xf32>
    %380 = arith.subf %372, %379 : vector<16x32xf32>
    %381 = arith.mulf %380, %380 : vector<16x32xf32>
    %cst_178 = arith.constant dense<0.000000e+00> : vector<16xf32>
    %382 = vector.multi_reduction <add>, %381, %cst_178 [1] : vector<16x32xf32> to vector<16xf32>
    %383 = vector.shape_cast %382 : vector<16xf32> to vector<16x1xf32>
    %cst_179 = arith.constant 3.200000e+01 : f32
    %384 = vector.broadcast %cst_179 : f32 to vector<16x1xf32>
    %385 = arith.divf %383, %384 : vector<16x1xf32>
    %cst_180 = arith.constant 9.99999974E-6 : f32
    %386 = vector.broadcast %cst_180 : f32 to vector<16x1xf32>
    %387 = arith.addf %385, %386 : vector<16x1xf32>
    %388 = math.rsqrt %387 : vector<16x1xf32>
    %389 = vector.broadcast %378 : vector<16x1xf32> to vector<16x32xf32>
    %390 = arith.subf %372, %389 : vector<16x32xf32>
    %391 = vector.broadcast %388 : vector<16x1xf32> to vector<16x32xf32>
    %392 = arith.mulf %390, %391 : vector<16x32xf32>
    %393 = vector.broadcast %373 : vector<1x32xf32> to vector<16x32xf32>
    %394 = arith.mulf %392, %393 : vector<16x32xf32>
    %395 = vector.broadcast %374 : vector<1x32xf32> to vector<16x32xf32>
    %396 = arith.addf %394, %395 : vector<16x32xf32>
    %397 = vector.shape_cast %396 : vector<16x32xf32> to vector<2x8x32xf32>
    %c0_181 = arith.constant 0 : index
    %c0_182 = arith.constant 0 : index
    %c0_183 = arith.constant 0 : index
    %398 = vector.load %arg20[%c0_181, %c0_182, %c0_183] : memref<2x8x32xf32, #tpu.memory_space<vmem>>, vector<2x8x32xf32>
    tpu.vector_store %arg20[%c0_181, %c0_182, %c0_183], %397 {strides = array<i32>} : memref<2x8x32xf32, #tpu.memory_space<vmem>>, vector<2x8x32xf32>,
    return
  }
}

</mosaic_0001>

<llo_original>
// kernel: tpu_custom_call.1
$region0: #{tpu_custom_call.1}
  #allocation0 [shape = 'u32[]', space=smem, size = 0x4, offset = 0x4, fixed_abs, tag = 'smem constant byte address 0x4 - core index']
  #allocation1 [shape = 'u32[72,128]{1,0:T(1,128)}', space=vmem, size = 0x9000, scoped, tag = 'internal scratch']
  %s0 = inlined_call_operand.hbm [shape: f32[2,8,32], index: 0, kind: input, shape index: {}]
  %s1 = inlined_call_operand.hbm [shape: f32[8,8], index: 1, kind: input, shape index: {}]
  %s2 = inlined_call_operand.vmem [shape: f32[2,32,32], index: 2, kind: input, shape index: {}]
  %s3 = inlined_call_operand.vmem [shape: f32[2,1,32], index: 3, kind: input, shape index: {}]
  %s4 = inlined_call_operand.vmem [shape: f32[2,32,32], index: 4, kind: input, shape index: {}]
  %s5 = inlined_call_operand.hbm [shape: f32[2,1,32], index: 5, kind: input, shape index: {}]
  %s6 = inlined_call_operand.vmem [shape: f32[2,32,32], index: 6, kind: input, shape index: {}]
  %s7 = inlined_call_operand.vmem [shape: f32[2,1,32], index: 7, kind: input, shape index: {}]
  %s8 = inlined_call_operand.hbm [shape: f32[2,32,32], index: 8, kind: input, shape index: {}]
  %s9 = inlined_call_operand.vmem [shape: f32[2,1,32], index: 9, kind: input, shape index: {}]
  %s10 = inlined_call_operand.hbm [shape: f32[2,32,64], index: 10, kind: input, shape index: {}]
  %s11 = inlined_call_operand.vmem [shape: f32[2,1,64], index: 11, kind: input, shape index: {}]
  %s12 = inlined_call_operand.vmem [shape: f32[2,64,32], index: 12, kind: input, shape index: {}]
  %s13 = inlined_call_operand.vmem [shape: f32[2,1,32], index: 13, kind: input, shape index: {}]
  %s14 = inlined_call_operand.hbm [shape: f32[2,1,32], index: 14, kind: input, shape index: {}]
  %s15 = inlined_call_operand.vmem [shape: f32[2,1,32], index: 15, kind: input, shape index: {}]
  %s16 = inlined_call_operand.vmem [shape: f32[2,1,32], index: 16, kind: input, shape index: {}]
  %s17 = inlined_call_operand.hbm [shape: f32[2,1,32], index: 17, kind: input, shape index: {}]
  %s18 = inlined_call_operand.vmem [shape: f32[1,32], index: 18, kind: input, shape index: {}]
  %s19 = inlined_call_operand.vmem [shape: f32[1,32], index: 19, kind: input, shape index: {}]
  %s20 = inlined_call_operand.hbm [shape: f32[2,8,32], index: 20, kind: output, shape index: {}]
  %s21 = sld [smem:[#allocation0]]
  $region118: #{tpu_custom_call.1} parent=0
    _
  %s23 = ssub.s32 1, %s21
  %s24 = scalar_select 0, %s23, %s21
  $region1: #{tpu_custom_call.1} parent=0
    #allocation2 [shape = 'u8[8192]{0}', space=vmem, size = 0x2000, scoped, tag = 'input window, operand 0, single buffered']
    #allocation3 [shape = 's32[1]{0}', space=sflag, size = 0x4, scoped, tag = 'scoped memory for tpu_custom_call.1']
    #allocation4 [shape = 's32[1]{0}', space=sflag, size = 0x4, scoped, tag = 'scoped memory for tpu_custom_call.1']
    #allocation5 [shape = 'u8[4096]{0}', space=vmem, size = 0x1000, scoped, tag = 'input window, operand 1, single buffered']
    #allocation6 [shape = 's32[1]{0}', space=sflag, size = 0x4, scoped, tag = 'scoped memory for tpu_custom_call.1']
    #allocation7 [shape = 'u8[1024]{0}', space=vmem, size = 0x400, scoped, tag = 'input window, operand 5, single buffered']
    #allocation8 [shape = 'u8[32768]{0}', space=vmem, size = 0x8000, scoped, tag = 'input window, operand 8, single buffered']
    #allocation9 [shape = 's32[1]{0}', space=sflag, size = 0x4, scoped, tag = 'scoped memory for tpu_custom_call.1']
    #allocation10 [shape = 'u8[32768]{0}', space=vmem, size = 0x8000, scoped, tag = 'input window, operand 10, single buffered']
    #allocation11 [shape = 'u8[1024]{0}', space=vmem, size = 0x400, scoped, tag = 'input window, operand 14, single buffered']
    #allocation12 [shape = 's32[1]{0}', space=sflag, size = 0x4, scoped, tag = 'scoped memory for tpu_custom_call.1']
    #allocation13 [shape = 'u8[1024]{0}', space=vmem, size = 0x400, scoped, tag = 'input window, operand 17, single buffered']
    #allocation14 [shape = 'u8[8192]{0}', space=vmem, size = 0x2000, scoped, tag = 'output window, operand 0, single buffered']
    %25 = vsyncpa [#allocation3], 0
    %26 = vsyncpa [#allocation6], 0
    %27 = vsyncpa [#allocation9], 0
    %28 = vsyncpa [#allocation12], 0
    %29 = vsyncpa [#allocation4], 0
    // Predicated region
    $region2: #{tpu_custom_call.1} parent=1 // pred_check
      _
    $region3: #{tpu_custom_call.1} parent=1 // pred_check_branch
      %31 = sbr.rel (0) target = $region5
    $region4: #{tpu_custom_call.1} parent=1 // pred_region
      %33 = vsyncadd [#allocation3], 0
      %s34 = sshll.u32 %s0, 4
      %s35 = int_to_ptr.hbm [resolvable:$true] %s34
      %s36 = sshll.u32 [#allocation2], 4
      %s37 = int_to_ptr.vmem [resolvable:$true] %s36
      %42 = dma.hbm_to_vmem [thread:$0]  %s35, 256, %s37, [#allocation3], 128, 128, 8
    $region5: #{tpu_custom_call.1} parent=1 // pred_fallthru
      _
    // Predicated region
    $region6: #{tpu_custom_call.1} parent=1 // pred_check
      _
    $region7: #{tpu_custom_call.1} parent=1 // pred_check_branch
      %44 = sbr.rel (0) target = $region9
    $region8: #{tpu_custom_call.1} parent=1 // pred_region
      %46 = vsyncadd [#allocation6], 0
      %s48 = sshll.u32 %s1, 4
      %s49 = int_to_ptr.hbm [resolvable:$true] %s48
      %s50 = sshll.u32 [#allocation5], 4
      %s51 = int_to_ptr.vmem [resolvable:$true] %s50
      %53 = dma.hbm_to_vmem [thread:$0]  %s49, 128, %s51, [#allocation6]
    $region9: #{tpu_custom_call.1} parent=1 // pred_fallthru
      _
    // Predicated region
    $region10: #{tpu_custom_call.1} parent=1 // pred_check
      _
    $region11: #{tpu_custom_call.1} parent=1 // pred_check_branch
      %55 = sbr.rel (0) target = $region13
    $region12: #{tpu_custom_call.1} parent=1 // pred_region
      _
    $region13: #{tpu_custom_call.1} parent=1 // pred_fallthru
      _
    // Predicated region
    $region14: #{tpu_custom_call.1} parent=1 // pred_check
      _
    $region15: #{tpu_custom_call.1} parent=1 // pred_check_branch
      %57 = sbr.rel (0) target = $region17
    $region16: #{tpu_custom_call.1} parent=1 // pred_region
      _
    $region17: #{tpu_custom_call.1} parent=1 // pred_fallthru
      _
    // Predicated region
    $region18: #{tpu_custom_call.1} parent=1 // pred_check
      _
    $region19: #{tpu_custom_call.1} parent=1 // pred_check_branch
      %59 = sbr.rel (0) target = $region21
    $region20: #{tpu_custom_call.1} parent=1 // pred_region
      _
    $region21: #{tpu_custom_call.1} parent=1 // pred_fallthru
      _
    // Predicated region
    $region22: #{tpu_custom_call.1} parent=1 // pred_check
      _
    $region23: #{tpu_custom_call.1} parent=1 // pred_check_branch
      %61 = sbr.rel (0) target = $region25
    $region24: #{tpu_custom_call.1} parent=1 // pred_region
      %63 = vsyncadd [#allocation6], 0
      %s64 = sshll.u32 %s5, 4
      %s65 = int_to_ptr.hbm [resolvable:$true] %s64
      %s66 = sshll.u32 [#allocation7], 4
      %s67 = int_to_ptr.vmem [resolvable:$true] %s66
      %72 = dma.hbm_to_vmem [thread:$0]  %s65, 32, %s67, [#allocation6], 16, 16, 1
    $region25: #{tpu_custom_call.1} parent=1 // pred_fallthru
      _
    // Predicated region
    $region26: #{tpu_custom_call.1} parent=1 // pred_check
      _
    $region27: #{tpu_custom_call.1} parent=1 // pred_check_branch
      %74 = sbr.rel (0) target = $region29
    $region28: #{tpu_custom_call.1} parent=1 // pred_region
      _
    $region29: #{tpu_custom_call.1} parent=1 // pred_fallthru
      _
    // Predicated region
    $region30: #{tpu_custom_call.1} parent=1 // pred_check
      _
    $region31: #{tpu_custom_call.1} parent=1 // pred_check_branch
      %76 = sbr.rel (0) target = $region33
    $region32: #{tpu_custom_call.1} parent=1 // pred_region
      _
    $region33: #{tpu_custom_call.1} parent=1 // pred_fallthru
      _
    // Predicated region
    $region34: #{tpu_custom_call.1} parent=1 // pred_check
      _
    $region35: #{tpu_custom_call.1} parent=1 // pred_check_branch
      %78 = sbr.rel (0) target = $region37
    $region36: #{tpu_custom_call.1} parent=1 // pred_region
      %80 = vsyncadd [#allocation9], 0
      %s81 = sshll.u32 %s8, 4
      %s82 = int_to_ptr.hbm [resolvable:$true] %s81
      %s83 = sshll.u32 [#allocation8], 4
      %s84 = int_to_ptr.vmem [resolvable:$true] %s83
      %89 = dma.hbm_to_vmem [thread:$0]  %s82, 1024, %s84, [#allocation9], 128, 128, 8
    $region37: #{tpu_custom_call.1} parent=1 // pred_fallthru
      _
    // Predicated region
    $region38: #{tpu_custom_call.1} parent=1 // pred_check
      _
    $region39: #{tpu_custom_call.1} parent=1 // pred_check_branch
      %91 = sbr.rel (0) target = $region41
    $region40: #{tpu_custom_call.1} parent=1 // pred_region
      _
    $region41: #{tpu_custom_call.1} parent=1 // pred_fallthru
      _
    // Predicated region
    $region42: #{tpu_custom_call.1} parent=1 // pred_check
      _
    $region43: #{tpu_custom_call.1} parent=1 // pred_check_branch
      %93 = sbr.rel (0) target = $region45
    $region44: #{tpu_custom_call.1} parent=1 // pred_region
      %95 = vsyncadd [#allocation9], 0
      %s96 = sshll.u32 %s10, 4
      %s97 = int_to_ptr.hbm [resolvable:$true] %s96
      %s98 = sshll.u32 [#allocation10], 4
      %s99 = int_to_ptr.vmem [resolvable:$true] %s98
      %104 = dma.hbm_to_vmem [thread:$0]  %s97, 1024, %s99, [#allocation9], 128, 128, 8
    $region45: #{tpu_custom_call.1} parent=1 // pred_fallthru
      _
    // Predicated region
    $region46: #{tpu_custom_call.1} parent=1 // pred_check
      _
    $region47: #{tpu_custom_call.1} parent=1 // pred_check_branch
      %106 = sbr.rel (0) target = $region49
    $region48: #{tpu_custom_call.1} parent=1 // pred_region
      _
    $region49: #{tpu_custom_call.1} parent=1 // pred_fallthru
      _
    // Predicated region
    $region50: #{tpu_custom_call.1} parent=1 // pred_check
      _
    $region51: #{tpu_custom_call.1} parent=1 // pred_check_branch
      %108 = sbr.rel (0) target = $region53
    $region52: #{tpu_custom_call.1} parent=1 // pred_region
      _
    $region53: #{tpu_custom_call.1} parent=1 // pred_fallthru
      _
    // Predicated region
    $region54: #{tpu_custom_call.1} parent=1 // pred_check
      _
    $region55: #{tpu_custom_call.1} parent=1 // pred_check_branch
      %110 = sbr.rel (0) target = $region57
    $region56: #{tpu_custom_call.1} parent=1 // pred_region
      _
    $region57: #{tpu_custom_call.1} parent=1 // pred_fallthru
      _
    // Predicated region
    $region58: #{tpu_custom_call.1} parent=1 // pred_check
      _
    $region59: #{tpu_custom_call.1} parent=1 // pred_check_branch
      %112 = sbr.rel (0) target = $region61
    $region60: #{tpu_custom_call.1} parent=1 // pred_region
      %114 = vsyncadd [#allocation12], 0
      %s115 = sshll.u32 %s14, 4
      %s116 = int_to_ptr.hbm [resolvable:$true] %s115
      %s117 = sshll.u32 [#allocation11], 4
      %s118 = int_to_ptr.vmem [resolvable:$true] %s117
      %123 = dma.hbm_to_vmem [thread:$0]  %s116, 32, %s118, [#allocation12], 16, 16, 1
    $region61: #{tpu_custom_call.1} parent=1 // pred_fallthru
      _
    // Predicated region
    $region62: #{tpu_custom_call.1} parent=1 // pred_check
      _
    $region63: #{tpu_custom_call.1} parent=1 // pred_check_branch
      %125 = sbr.rel (0) target = $region65
    $region64: #{tpu_custom_call.1} parent=1 // pred_region
      _
    $region65: #{tpu_custom_call.1} parent=1 // pred_fallthru
      _
    // Predicated region
    $region66: #{tpu_custom_call.1} parent=1 // pred_check
      _
    $region67: #{tpu_custom_call.1} parent=1 // pred_check_branch
      %127 = sbr.rel (0) target = $region69
    $region68: #{tpu_custom_call.1} parent=1 // pred_region
      _
    $region69: #{tpu_custom_call.1} parent=1 // pred_fallthru
      _
    // Predicated region
    $region70: #{tpu_custom_call.1} parent=1 // pred_check
      _
    $region71: #{tpu_custom_call.1} parent=1 // pred_check_branch
      %129 = sbr.rel (0) target = $region73
    $region72: #{tpu_custom_call.1} parent=1 // pred_region
      %131 = vsyncadd [#allocation12], 0
      %s132 = sshll.u32 %s17, 4
      %s133 = int_to_ptr.hbm [resolvable:$true] %s132
      %s134 = sshll.u32 [#allocation13], 4
      %s135 = int_to_ptr.vmem [resolvable:$true] %s134
      %140 = dma.hbm_to_vmem [thread:$0]  %s133, 32, %s135, [#allocation12], 16, 16, 1
    $region73: #{tpu_custom_call.1} parent=1 // pred_fallthru
      _
    // Predicated region
    $region74: #{tpu_custom_call.1} parent=1 // pred_check
      _
    $region75: #{tpu_custom_call.1} parent=1 // pred_check_branch
      %142 = sbr.rel (0) target = $region77
    $region76: #{tpu_custom_call.1} parent=1 // pred_region
      _
    $region77: #{tpu_custom_call.1} parent=1 // pred_fallthru
      _
    // Predicated region
    $region78: #{tpu_custom_call.1} parent=1 // pred_check
      _
    $region79: #{tpu_custom_call.1} parent=1 // pred_check_branch
      %144 = sbr.rel (0) target = $region81
    $region80: #{tpu_custom_call.1} parent=1 // pred_region
      _
    $region81: #{tpu_custom_call.1} parent=1 // pred_fallthru
      _
    // Predicated region
    $region82: #{tpu_custom_call.1} parent=1 // pred_check
      _
    $region83: #{tpu_custom_call.1} parent=1 // pred_check_branch
      %146 = sbr.rel (0) target = $region85
    $region84: #{tpu_custom_call.1} parent=1 // pred_region
      %148 = dma.done [#allocation3], 256
    $region85: #{tpu_custom_call.1} parent=1 // pred_fallthru
      _
    // Predicated region
    $region86: #{tpu_custom_call.1} parent=1 // pred_check
      _
    $region87: #{tpu_custom_call.1} parent=1 // pred_check_branch
      %150 = sbr.rel (0) target = $region89
    $region88: #{tpu_custom_call.1} parent=1 // pred_region
      %152 = dma.done [#allocation6], 128
    $region89: #{tpu_custom_call.1} parent=1 // pred_fallthru
      _
    // Predicated region
    $region90: #{tpu_custom_call.1} parent=1 // pred_check
      _
    $region91: #{tpu_custom_call.1} parent=1 // pred_check_branch
      %154 = sbr.rel (0) target = $region93
    $region92: #{tpu_custom_call.1} parent=1 // pred_region
      %156 = dma.done [#allocation6], 32
    $region93: #{tpu_custom_call.1} parent=1 // pred_fallthru
      _
    // Predicated region
    $region94: #{tpu_custom_call.1} parent=1 // pred_check
      _
    $region95: #{tpu_custom_call.1} parent=1 // pred_check_branch
      %158 = sbr.rel (0) target = $region97
    $region96: #{tpu_custom_call.1} parent=1 // pred_region
      %160 = dma.done [#allocation9], 1024
    $region97: #{tpu_custom_call.1} parent=1 // pred_fallthru
      _
    // Predicated region
    $region98: #{tpu_custom_call.1} parent=1 // pred_check
      _
    $region99: #{tpu_custom_call.1} parent=1 // pred_check_branch
      %162 = sbr.rel (0) target = $region101
    $region100: #{tpu_custom_call.1} parent=1 // pred_region
      %164 = dma.done [#allocation9], 1024
    $region101: #{tpu_custom_call.1} parent=1 // pred_fallthru
      _
    // Predicated region
    $region102: #{tpu_custom_call.1} parent=1 // pred_check
      _
    $region103: #{tpu_custom_call.1} parent=1 // pred_check_branch
      %166 = sbr.rel (0) target = $region105
    $region104: #{tpu_custom_call.1} parent=1 // pred_region
      %168 = dma.done [#allocation12], 32
    $region105: #{tpu_custom_call.1} parent=1 // pred_fallthru
      _
    // Predicated region
    $region106: #{tpu_custom_call.1} parent=1 // pred_check
      _
    $region107: #{tpu_custom_call.1} parent=1 // pred_check_branch
      %170 = sbr.rel (0) target = $region109
    $region108: #{tpu_custom_call.1} parent=1 // pred_region
      %172 = dma.done [#allocation12], 32
    $region109: #{tpu_custom_call.1} parent=1 // pred_fallthru
      _
    %v173 = vld [vmem:[#allocation2] sm:$0xff]
    %v174 = vld [vmem:[#allocation2 + $0x8] sm:$0xff]
    %v175 = vld [vmem:[#allocation5] sm:$0xff]
    %v176 = vld [vmem:[%s2] sm:$0xff]
    %v177 = vld [vmem:[%s2 + $0x8] sm:$0xff]
    %v178 = vld [vmem:[%s2 + $0x10] sm:$0xff]
    %v179 = vld [vmem:[%s2 + $0x18] sm:$0xff]
    %v180 = vld [vmem:[%s3] sm:$0x1]
    %v181 = vld [vmem:[%s4] sm:$0xff]
    %v182 = vld [vmem:[%s4 + $0x8] sm:$0xff]
    %v183 = vld [vmem:[%s4 + $0x10] sm:$0xff]
    %v184 = vld [vmem:[%s4 + $0x18] sm:$0xff]
    %v185 = vld [vmem:[#allocation7] sm:$0x1]
    %v186 = vld [vmem:[%s6] sm:$0xff]
    %v187 = vld [vmem:[%s6 + $0x8] sm:$0xff]
    %v188 = vld [vmem:[%s6 + $0x10] sm:$0xff]
    %v189 = vld [vmem:[%s6 + $0x18] sm:$0xff]
    %v190 = vld [vmem:[%s7] sm:$0x1]
    %v191 = vld [vmem:[#allocation8] sm:$0xff]
    %v192 = vld [vmem:[#allocation8 + $0x8] sm:$0xff]
    %v193 = vld [vmem:[#allocation8 + $0x10] sm:$0xff]
    %v194 = vld [vmem:[#allocation8 + $0x18] sm:$0xff]
    %v195 = vld [vmem:[%s9] sm:$0x1]
    %v196 = vld [vmem:[#allocation10] sm:$0xff]
    %v197 = vld [vmem:[#allocation10 + $0x8] sm:$0xff]
    %v198 = vld [vmem:[#allocation10 + $0x10] sm:$0xff]
    %v199 = vld [vmem:[#allocation10 + $0x18] sm:$0xff]
    %v200 = vld [vmem:[%s11] sm:$0x1]
    %v201 = vld [vmem:[%s12] sm:$0xff]
    %v202 = vld [vmem:[%s12 + $0x8] sm:$0xff]
    %v203 = vld [vmem:[%s12 + $0x10] sm:$0xff]
    %v204 = vld [vmem:[%s12 + $0x18] sm:$0xff]
    %v205 = vld [vmem:[%s12 + $0x20] sm:$0xff]
    %v206 = vld [vmem:[%s12 + $0x28] sm:$0xff]
    %v207 = vld [vmem:[%s12 + $0x30] sm:$0xff]
    %v208 = vld [vmem:[%s12 + $0x38] sm:$0xff]
    %v209 = vld [vmem:[%s13] sm:$0x1]
    %v211 = vperm.slane %v180, 0
    %vm213 = vcmask 261120
    %v215 = vsel %vm213, %v173, 0
    %v218 = vsel %vm213, %v174, 0
    %220 = vmatpush.msra.mxu0 0.0
    %221 = vmatpush.msra.mxu0 0.0
    %222 = vmatpush.msra.mxu0 0.0
    %223 = vmatpush.msra.mxu0 0.0
    %224 = vmatpush.msra.mxu0 0.0
    %225 = vmatpush.msra.mxu0 0.0
    %226 = vmatpush.msra.mxu0 0.0
    %227 = vmatpush.msra.mxu0 0.0
    %228 = vmatpush.msra.mxu0 0.0
    %229 = vmatpush.msra.mxu0 0.0
    %230 = vmatpush.msra.mxu0 0.0
    %231 = vmatpush.msra.mxu0 0.0
    %232 = vmatpush.msra.mxu0 %v179
    %233 = vmatpush.msra.mxu0 %v178
    %234 = vmatpush.msra.mxu0 %v177
    %235 = vmatpush.msra.mxu0 %v176
    %236 = vmatmul.f32.gmra.mxu0 %v215
    %v237 = vpop.f32.mrf.mxu0
    %v238 = vadd.f32 %v211, %v237
    %239 = vmatmul.f32.gmra.mxu0 %v218
    %v240 = vpop.f32.mrf.mxu0
    %v241 = vadd.f32 %v211, %v240
    %242 = vdwg.mxu0
    %v244 = vperm.slane %v185, 0
    %246 = vmatpush.msra.mxu0 0.0
    %247 = vmatpush.msra.mxu0 0.0
    %248 = vmatpush.msra.mxu0 0.0
    %249 = vmatpush.msra.mxu0 0.0
    %250 = vmatpush.msra.mxu0 0.0
    %251 = vmatpush.msra.mxu0 0.0
    %252 = vmatpush.msra.mxu0 0.0
    %253 = vmatpush.msra.mxu0 0.0
    %254 = vmatpush.msra.mxu0 0.0
    %255 = vmatpush.msra.mxu0 0.0
    %256 = vmatpush.msra.mxu0 0.0
    %257 = vmatpush.msra.mxu0 0.0
    %258 = vmatpush.msra.mxu0 %v184
    %259 = vmatpush.msra.mxu0 %v183
    %260 = vmatpush.msra.mxu0 %v182
    %261 = vmatpush.msra.mxu0 %v181
    %262 = vmatmul.f32.gmra.mxu0 %v215
    %v263 = vpop.f32.mrf.mxu0
    %v264 = vadd.f32 %v244, %v263
    %265 = vmatmul.f32.gmra.mxu0 %v218
    %v266 = vpop.f32.mrf.mxu0
    %v267 = vadd.f32 %v244, %v266
    %268 = vdwg.mxu0
    %v270 = vperm.slane %v190, 0
    %272 = vmatpush.msra.mxu0 0.0
    %273 = vmatpush.msra.mxu0 0.0
    %274 = vmatpush.msra.mxu0 0.0
    %275 = vmatpush.msra.mxu0 0.0
    %276 = vmatpush.msra.mxu0 0.0
    %277 = vmatpush.msra.mxu0 0.0
    %278 = vmatpush.msra.mxu0 0.0
    %279 = vmatpush.msra.mxu0 0.0
    %280 = vmatpush.msra.mxu0 0.0
    %281 = vmatpush.msra.mxu0 0.0
    %282 = vmatpush.msra.mxu0 0.0
    %283 = vmatpush.msra.mxu0 0.0
    %284 = vmatpush.msra.mxu0 %v189
    %285 = vmatpush.msra.mxu0 %v188
    %286 = vmatpush.msra.mxu0 %v187
    %287 = vmatpush.msra.mxu0 %v186
    %288 = vmatmul.f32.gmra.mxu0 %v215
    %v289 = vpop.f32.mrf.mxu0
    %v290 = vadd.f32 %v270, %v289
    %291 = vmatmul.f32.gmra.mxu0 %v218
    %v292 = vpop.f32.mrf.mxu0
    %v293 = vadd.f32 %v270, %v292
    %294 = vdwg.mxu0
    %vm295 = vcmask 64512
    %v297 = vsel %vm295, %v238, 0
    %v300 = vsel %vm295, %v264, 0
    %302 = vmatpush.xpose.msra.mxu0 0.0
    %303 = vmatpush.xpose.msra.mxu0 0.0
    %304 = vmatpush.xpose.msra.mxu0 0.0
    %305 = vmatpush.xpose.msra.mxu0 0.0
    %306 = vmatpush.xpose.msra.mxu0 0.0
    %307 = vmatpush.xpose.msra.mxu0 0.0
    %308 = vmatpush.xpose.msra.mxu0 0.0
    %309 = vmatpush.xpose.msra.mxu0 0.0
    %310 = vmatpush.xpose.msra.mxu0 0.0
    %311 = vmatpush.xpose.msra.mxu0 0.0
    %312 = vmatpush.xpose.msra.mxu0 0.0
    %313 = vmatpush.xpose.msra.mxu0 0.0
    %314 = vmatpush.xpose.msra.mxu0 0.0
    %315 = vmatpush.xpose.msra.mxu0 0.0
    %316 = vmatpush.xpose.msra.mxu0 0.0
    %317 = vmatpush.xpose.msra.mxu0 %v300
    %318 = vmatmul.f32.gmra.mxu0 %v297
    %v319 = vpop.f32.mrf.mxu0
    %v320 = vadd.f32 %v175, %v319
    %321 = vdwg.mxu0
    %v323 = vsel %vm295, %v241, 0
    %v326 = vsel %vm295, %v267, 0
    %328 = vmatpush.xpose.msra.mxu0 0.0
    %329 = vmatpush.xpose.msra.mxu0 0.0
    %330 = vmatpush.xpose.msra.mxu0 0.0
    %331 = vmatpush.xpose.msra.mxu0 0.0
    %332 = vmatpush.xpose.msra.mxu0 0.0
    %333 = vmatpush.xpose.msra.mxu0 0.0
    %334 = vmatpush.xpose.msra.mxu0 0.0
    %335 = vmatpush.xpose.msra.mxu0 0.0
    %336 = vmatpush.xpose.msra.mxu0 0.0
    %337 = vmatpush.xpose.msra.mxu0 0.0
    %338 = vmatpush.xpose.msra.mxu0 0.0
    %339 = vmatpush.xpose.msra.mxu0 0.0
    %340 = vmatpush.xpose.msra.mxu0 0.0
    %341 = vmatpush.xpose.msra.mxu0 0.0
    %342 = vmatpush.xpose.msra.mxu0 0.0
    %343 = vmatpush.xpose.msra.mxu0 %v326
    %344 = vmatmul.f32.gmra.mxu0 %v323
    %v345 = vpop.f32.mrf.mxu0
    %v346 = vadd.f32 %v175, %v345
    %347 = vdwg.mxu0
    %v348 = vsel %vm295, %v320, -inf
    %349 = vmax.xlane.f32.xlu0 %v348
    %v350 = vpop.xlane.xlu0 %349
    %v351 = vsel %vm295, %v346, -inf
    %352 = vmax.xlane.f32.xlu0 %v351
    %v353 = vpop.xlane.xlu0 %352
    %v354 = vsub.f32 %v320, %v350
    %v355 = vsub.f32 %v346, %v353
    %v356 = vmul.f32 %v354, 1.442695
    %v357 = vpow.pop %v356
    %v358 = vmul.f32 %v355, 1.442695
    %v359 = vpow.pop %v358
    %v360 = vsel %vm295, %v357, 0.0
    %361 = vadd.xlane.f32.xlu0 %v360
    %v362 = vpop.xlane.xlu0 %361
    %v363 = vsel %vm295, %v359, 0.0
    %364 = vadd.xlane.f32.xlu0 %v363
    %v365 = vpop.xlane.xlu0 %364
    %v366 = vrcp.pop %v362
    %v367 = vmul.f32 %v362, %v366
    %v368 = vsub.f32 1.0, %v367
    %v369 = vmul.f32 %v366, %v368
    %v370 = vadd.f32 %v366, %v369
    %vm371 = vweird.f32 %v362
    %vm372 = vweird.f32 %v366
    %vm373 = vmor %vm371, %vm372
    %v374 = vsel %vm373, %v366, %v370
    %v375 = vand.u32 2147483647, %v362
    %vm376 = vcmp.eq.f32.partialorder %v375, 8.507059e+37
    %v377 = vand.u32 %v362, 2147483648
    %v378 = vor.u32 1.1754944e-38, %v377
    %v379 = vsel %vm376, %v378, %v374
    %v380 = vmul.f32 %v357, %v379
    %v381 = vrcp.pop %v365
    %v382 = vmul.f32 %v365, %v381
    %v383 = vsub.f32 1.0, %v382
    %v384 = vmul.f32 %v381, %v383
    %v385 = vadd.f32 %v381, %v384
    %vm386 = vweird.f32 %v365
    %vm387 = vweird.f32 %v381
    %vm388 = vmor %vm386, %vm387
    %v389 = vsel %vm388, %v381, %v385
    %v390 = vand.u32 2147483647, %v365
    %vm391 = vcmp.eq.f32.partialorder %v390, 8.507059e+37
    %v392 = vand.u32 %v365, 2147483648
    %v393 = vor.u32 1.1754944e-38, %v392
    %v394 = vsel %vm391, %v393, %v389
    %v395 = vmul.f32 %v359, %v394
    %v397 = vsel %vm295, %v380, 0
    %399 = vmatpush.msra.mxu0 0.0
    %400 = vmatpush.msra.mxu0 0.0
    %401 = vmatpush.msra.mxu0 0.0
    %402 = vmatpush.msra.mxu0 0.0
    %403 = vmatpush.msra.mxu0 0.0
    %404 = vmatpush.msra.mxu0 0.0
    %405 = vmatpush.msra.mxu0 0.0
    %406 = vmatpush.msra.mxu0 0.0
    %407 = vmatpush.msra.mxu0 0.0
    %408 = vmatpush.msra.mxu0 0.0
    %409 = vmatpush.msra.mxu0 0.0
    %410 = vmatpush.msra.mxu0 0.0
    %411 = vmatpush.msra.mxu0 0.0
    %412 = vmatpush.msra.mxu0 0.0
    %413 = vmatpush.msra.mxu0 0.0
    %414 = vmatpush.msra.mxu0 %v290
    %415 = vmatmul.f32.gmra.mxu0 %v397
    %v416 = vpop.f32.mrf.mxu0
    %v417 = vadd.f32 0.0, %v416
    %418 = vdwg.mxu0
    %v420 = vsel %vm295, %v395, 0
    %422 = vmatpush.msra.mxu0 0.0
    %423 = vmatpush.msra.mxu0 0.0
    %424 = vmatpush.msra.mxu0 0.0
    %425 = vmatpush.msra.mxu0 0.0
    %426 = vmatpush.msra.mxu0 0.0
    %427 = vmatpush.msra.mxu0 0.0
    %428 = vmatpush.msra.mxu0 0.0
    %429 = vmatpush.msra.mxu0 0.0
    %430 = vmatpush.msra.mxu0 0.0
    %431 = vmatpush.msra.mxu0 0.0
    %432 = vmatpush.msra.mxu0 0.0
    %433 = vmatpush.msra.mxu0 0.0
    %434 = vmatpush.msra.mxu0 0.0
    %435 = vmatpush.msra.mxu0 0.0
    %436 = vmatpush.msra.mxu0 0.0
    %437 = vmatpush.msra.mxu0 %v293
    %438 = vmatmul.f32.gmra.mxu0 %v420
    %v439 = vpop.f32.mrf.mxu0
    %v440 = vadd.f32 0.0, %v439
    %441 = vdwg.mxu0
    %442 = vrot.lane.b32.xlu0 %v238, 120
    %v443 = vpop.permute.xlu0 %442
    %444 = vrot.lane.b32.xlu0 %v264, 120
    %v445 = vpop.permute.xlu0 %444
    %v446 = vsel %vm295, %v443, 0
    %v448 = vsel %vm295, %v445, 0
    %450 = vmatpush.xpose.msra.mxu0 0.0
    %451 = vmatpush.xpose.msra.mxu0 0.0
    %452 = vmatpush.xpose.msra.mxu0 0.0
    %453 = vmatpush.xpose.msra.mxu0 0.0
    %454 = vmatpush.xpose.msra.mxu0 0.0
    %455 = vmatpush.xpose.msra.mxu0 0.0
    %456 = vmatpush.xpose.msra.mxu0 0.0
    %457 = vmatpush.xpose.msra.mxu0 0.0
    %458 = vmatpush.xpose.msra.mxu0 0.0
    %459 = vmatpush.xpose.msra.mxu0 0.0
    %460 = vmatpush.xpose.msra.mxu0 0.0
    %461 = vmatpush.xpose.msra.mxu0 0.0
    %462 = vmatpush.xpose.msra.mxu0 0.0
    %463 = vmatpush.xpose.msra.mxu0 0.0
    %464 = vmatpush.xpose.msra.mxu0 0.0
    %465 = vmatpush.xpose.msra.mxu0 %v448
    %466 = vmatmul.f32.gmra.mxu0 %v446
    %v467 = vpop.f32.mrf.mxu0
    %v468 = vadd.f32 %v175, %v467
    %469 = vdwg.mxu0
    %470 = vrot.lane.b32.xlu0 %v241, 120
    %v471 = vpop.permute.xlu0 %470
    %472 = vrot.lane.b32.xlu0 %v267, 120
    %v473 = vpop.permute.xlu0 %472
    %v474 = vsel %vm295, %v471, 0
    %v476 = vsel %vm295, %v473, 0
    %478 = vmatpush.xpose.msra.mxu0 0.0
    %479 = vmatpush.xpose.msra.mxu0 0.0
    %480 = vmatpush.xpose.msra.mxu0 0.0
    %481 = vmatpush.xpose.msra.mxu0 0.0
    %482 = vmatpush.xpose.msra.mxu0 0.0
    %483 = vmatpush.xpose.msra.mxu0 0.0
    %484 = vmatpush.xpose.msra.mxu0 0.0
    %485 = vmatpush.xpose.msra.mxu0 0.0
    %486 = vmatpush.xpose.msra.mxu0 0.0
    %487 = vmatpush.xpose.msra.mxu0 0.0
    %488 = vmatpush.xpose.msra.mxu0 0.0
    %489 = vmatpush.xpose.msra.mxu0 0.0
    %490 = vmatpush.xpose.msra.mxu0 0.0
    %491 = vmatpush.xpose.msra.mxu0 0.0
    %492 = vmatpush.xpose.msra.mxu0 0.0
    %493 = vmatpush.xpose.msra.mxu0 %v476
    %494 = vmatmul.f32.gmra.mxu0 %v474
    %v495 = vpop.f32.mrf.mxu0
    %v496 = vadd.f32 %v175, %v495
    %497 = vdwg.mxu0
    %v498 = vsel %vm295, %v468, -inf
    %499 = vmax.xlane.f32.xlu0 %v498
    %v500 = vpop.xlane.xlu0 %499
    %v501 = vsel %vm295, %v496, -inf
    %502 = vmax.xlane.f32.xlu0 %v501
    %v503 = vpop.xlane.xlu0 %502
    %v504 = vsub.f32 %v468, %v500
    %v505 = vsub.f32 %v496, %v503
    %v506 = vmul.f32 %v504, 1.442695
    %v507 = vpow.pop %v506
    %v508 = vmul.f32 %v505, 1.442695
    %v509 = vpow.pop %v508
    %v510 = vsel %vm295, %v507, 0.0
    %511 = vadd.xlane.f32.xlu0 %v510
    %v512 = vpop.xlane.xlu0 %511
    %v513 = vsel %vm295, %v509, 0.0
    %514 = vadd.xlane.f32.xlu0 %v513
    %v515 = vpop.xlane.xlu0 %514
    %v516 = vrcp.pop %v512
    %v517 = vmul.f32 %v512, %v516
    %v518 = vsub.f32 1.0, %v517
    %v519 = vmul.f32 %v516, %v518
    %v520 = vadd.f32 %v516, %v519
    %vm521 = vweird.f32 %v512
    %vm522 = vweird.f32 %v516
    %vm523 = vmor %vm521, %vm522
    %v524 = vsel %vm523, %v516, %v520
    %v525 = vand.u32 2147483647, %v512
    %vm526 = vcmp.eq.f32.partialorder %v525, 8.507059e+37
    %v527 = vand.u32 %v512, 2147483648
    %v528 = vor.u32 1.1754944e-38, %v527
    %v529 = vsel %vm526, %v528, %v524
    %v530 = vmul.f32 %v507, %v529
    %v531 = vrcp.pop %v515
    %v532 = vmul.f32 %v515, %v531
    %v533 = vsub.f32 1.0, %v532
    %v534 = vmul.f32 %v531, %v533
    %v535 = vadd.f32 %v531, %v534
    %vm536 = vweird.f32 %v515
    %vm537 = vweird.f32 %v531
    %vm538 = vmor %vm536, %vm537
    %v539 = vsel %vm538, %v531, %v535
    %v540 = vand.u32 2147483647, %v515
    %vm541 = vcmp.eq.f32.partialorder %v540, 8.507059e+37
    %v542 = vand.u32 %v515, 2147483648
    %v543 = vor.u32 1.1754944e-38, %v542
    %v544 = vsel %vm541, %v543, %v539
    %v545 = vmul.f32 %v509, %v544
    %547 = vrot.lane.b32.xlu0 %v290, 120
    %v548 = vpop.permute.xlu0 %547
    %v551 = vsel %vm295, %v530, 0
    %553 = vmatpush.msra.mxu0 0.0
    %554 = vmatpush.msra.mxu0 0.0
    %555 = vmatpush.msra.mxu0 0.0
    %556 = vmatpush.msra.mxu0 0.0
    %557 = vmatpush.msra.mxu0 0.0
    %558 = vmatpush.msra.mxu0 0.0
    %559 = vmatpush.msra.mxu0 0.0
    %560 = vmatpush.msra.mxu0 0.0
    %561 = vmatpush.msra.mxu0 0.0
    %562 = vmatpush.msra.mxu0 0.0
    %563 = vmatpush.msra.mxu0 0.0
    %564 = vmatpush.msra.mxu0 0.0
    %565 = vmatpush.msra.mxu0 0.0
    %566 = vmatpush.msra.mxu0 0.0
    %567 = vmatpush.msra.mxu0 0.0
    %568 = vmatpush.msra.mxu0 %v548
    %569 = vmatmul.f32.gmra.mxu0 %v551
    %v570 = vpop.f32.mrf.mxu0
    %v571 = vadd.f32 0.0, %v570
    %572 = vdwg.mxu0
    %574 = vrot.lane.b32.xlu0 %v293, 120
    %v575 = vpop.permute.xlu0 %574
    %v578 = vsel %vm295, %v545, 0
    %580 = vmatpush.msra.mxu0 0.0
    %581 = vmatpush.msra.mxu0 0.0
    %582 = vmatpush.msra.mxu0 0.0
    %583 = vmatpush.msra.mxu0 0.0
    %584 = vmatpush.msra.mxu0 0.0
    %585 = vmatpush.msra.mxu0 0.0
    %586 = vmatpush.msra.mxu0 0.0
    %587 = vmatpush.msra.mxu0 0.0
    %588 = vmatpush.msra.mxu0 0.0
    %589 = vmatpush.msra.mxu0 0.0
    %590 = vmatpush.msra.mxu0 0.0
    %591 = vmatpush.msra.mxu0 0.0
    %592 = vmatpush.msra.mxu0 0.0
    %593 = vmatpush.msra.mxu0 0.0
    %594 = vmatpush.msra.mxu0 0.0
    %595 = vmatpush.msra.mxu0 %v575
    %596 = vmatmul.f32.gmra.mxu0 %v578
    %v597 = vpop.f32.mrf.mxu0
    %v598 = vadd.f32 0.0, %v597
    %599 = vdwg.mxu0
    %v601 = vsel %vm295, %v571, 0
    %v604 = vsel %vm295, %v598, 0
    %606 = vmatpush.msra.mxu0 0.0
    %607 = vmatpush.msra.mxu0 0.0
    %608 = vmatpush.msra.mxu0 0.0
    %609 = vmatpush.msra.mxu0 0.0
    %610 = vmatpush.msra.mxu0 0.0
    %611 = vmatpush.msra.mxu0 0.0
    %612 = vmatpush.msra.mxu0 0.0
    %613 = vmatpush.msra.mxu0 0.0
    %614 = vmatpush.msra.mxu0 0.0
    %615 = vmatpush.msra.mxu0 0.0
    %616 = vmatpush.msra.mxu0 0.0
    %617 = vmatpush.msra.mxu0 0.0
    %618 = vmatpush.msra.mxu0 0.0
    %619 = vmatpush.msra.mxu0 0.0
    %620 = vmatpush.msra.mxu0 0.0
    %621 = vmatpush.msra.mxu0 %v192
    %622 = vmatmul.f32.gmra.mxu0 %v601
    %v623 = vpop.f32.mrf.mxu0
    %v624 = vadd.f32 0.0, %v623
    %625 = vmatmul.f32.gmra.mxu0 %v604
    %v626 = vpop.f32.mrf.mxu0
    %v627 = vadd.f32 0.0, %v626
    %628 = vdwg.mxu0
    %v630 = vsel %vm295, %v417, 0
    %v633 = vsel %vm295, %v440, 0
    %635 = vmatpush.msra.mxu0 0.0
    %636 = vmatpush.msra.mxu0 0.0
    %637 = vmatpush.msra.mxu0 0.0
    %638 = vmatpush.msra.mxu0 0.0
    %639 = vmatpush.msra.mxu0 0.0
    %640 = vmatpush.msra.mxu0 0.0
    %641 = vmatpush.msra.mxu0 0.0
    %642 = vmatpush.msra.mxu0 0.0
    %643 = vmatpush.msra.mxu0 0.0
    %644 = vmatpush.msra.mxu0 0.0
    %645 = vmatpush.msra.mxu0 0.0
    %646 = vmatpush.msra.mxu0 0.0
    %647 = vmatpush.msra.mxu0 0.0
    %648 = vmatpush.msra.mxu0 0.0
    %649 = vmatpush.msra.mxu0 0.0
    %650 = vmatpush.msra.mxu0 %v191
    %651 = vmatmul.f32.gmra.mxu0 %v630
    %v652 = vpop.f32.mrf.mxu0
    %v653 = vadd.f32 %v624, %v652
    %654 = vmatmul.f32.gmra.mxu0 %v633
    %v655 = vpop.f32.mrf.mxu0
    %v656 = vadd.f32 %v627, %v655
    %657 = vdwg.mxu0
    %658 = vrot.lane.b32.xlu0 %v238, 112
    %v659 = vpop.permute.xlu0 %658
    %660 = vrot.lane.b32.xlu0 %v264, 112
    %v661 = vpop.permute.xlu0 %660
    %v662 = vsel %vm295, %v659, 0
    %v664 = vsel %vm295, %v661, 0
    %666 = vmatpush.xpose.msra.mxu0 0.0
    %667 = vmatpush.xpose.msra.mxu0 0.0
    %668 = vmatpush.xpose.msra.mxu0 0.0
    %669 = vmatpush.xpose.msra.mxu0 0.0
    %670 = vmatpush.xpose.msra.mxu0 0.0
    %671 = vmatpush.xpose.msra.mxu0 0.0
    %672 = vmatpush.xpose.msra.mxu0 0.0
    %673 = vmatpush.xpose.msra.mxu0 0.0
    %674 = vmatpush.xpose.msra.mxu0 0.0
    %675 = vmatpush.xpose.msra.mxu0 0.0
    %676 = vmatpush.xpose.msra.mxu0 0.0
    %677 = vmatpush.xpose.msra.mxu0 0.0
    %678 = vmatpush.xpose.msra.mxu0 0.0
    %679 = vmatpush.xpose.msra.mxu0 0.0
    %680 = vmatpush.xpose.msra.mxu0 0.0
    %681 = vmatpush.xpose.msra.mxu0 %v664
    %682 = vmatmul.f32.gmra.mxu0 %v662
    %v683 = vpop.f32.mrf.mxu0
    %v684 = vadd.f32 %v175, %v683
    %685 = vdwg.mxu0
    %686 = vrot.lane.b32.xlu0 %v241, 112
    %v687 = vpop.permute.xlu0 %686
    %688 = vrot.lane.b32.xlu0 %v267, 112
    %v689 = vpop.permute.xlu0 %688
    %v690 = vsel %vm295, %v687, 0
    %v692 = vsel %vm295, %v689, 0
    %694 = vmatpush.xpose.msra.mxu0 0.0
    %695 = vmatpush.xpose.msra.mxu0 0.0
    %696 = vmatpush.xpose.msra.mxu0 0.0
    %697 = vmatpush.xpose.msra.mxu0 0.0
    %698 = vmatpush.xpose.msra.mxu0 0.0
    %699 = vmatpush.xpose.msra.mxu0 0.0
    %700 = vmatpush.xpose.msra.mxu0 0.0
    %701 = vmatpush.xpose.msra.mxu0 0.0
    %702 = vmatpush.xpose.msra.mxu0 0.0
    %703 = vmatpush.xpose.msra.mxu0 0.0
    %704 = vmatpush.xpose.msra.mxu0 0.0
    %705 = vmatpush.xpose.msra.mxu0 0.0
    %706 = vmatpush.xpose.msra.mxu0 0.0
    %707 = vmatpush.xpose.msra.mxu0 0.0
    %708 = vmatpush.xpose.msra.mxu0 0.0
    %709 = vmatpush.xpose.msra.mxu0 %v692
    %710 = vmatmul.f32.gmra.mxu0 %v690
    %v711 = vpop.f32.mrf.mxu0
    %v712 = vadd.f32 %v175, %v711
    %713 = vdwg.mxu0
    %v714 = vsel %vm295, %v684, -inf
    %715 = vmax.xlane.f32.xlu0 %v714
    %v716 = vpop.xlane.xlu0 %715
    %v717 = vsel %vm295, %v712, -inf
    %718 = vmax.xlane.f32.xlu0 %v717
    %v719 = vpop.xlane.xlu0 %718
    %v720 = vsub.f32 %v684, %v716
    %v721 = vsub.f32 %v712, %v719
    %v722 = vmul.f32 %v720, 1.442695
    %v723 = vpow.pop %v722
    %v724 = vmul.f32 %v721, 1.442695
    %v725 = vpow.pop %v724
    %v726 = vsel %vm295, %v723, 0.0
    %727 = vadd.xlane.f32.xlu0 %v726
    %v728 = vpop.xlane.xlu0 %727
    %v729 = vsel %vm295, %v725, 0.0
    %730 = vadd.xlane.f32.xlu0 %v729
    %v731 = vpop.xlane.xlu0 %730
    %v732 = vrcp.pop %v728
    %v733 = vmul.f32 %v728, %v732
    %v734 = vsub.f32 1.0, %v733
    %v735 = vmul.f32 %v732, %v734
    %v736 = vadd.f32 %v732, %v735
    %vm737 = vweird.f32 %v728
    %vm738 = vweird.f32 %v732
    %vm739 = vmor %vm737, %vm738
    %v740 = vsel %vm739, %v732, %v736
    %v741 = vand.u32 2147483647, %v728
    %vm742 = vcmp.eq.f32.partialorder %v741, 8.507059e+37
    %v743 = vand.u32 %v728, 2147483648
    %v744 = vor.u32 1.1754944e-38, %v743
    %v745 = vsel %vm742, %v744, %v740
    %v746 = vmul.f32 %v723, %v745
    %v747 = vrcp.pop %v731
    %v748 = vmul.f32 %v731, %v747
    %v749 = vsub.f32 1.0, %v748
    %v750 = vmul.f32 %v747, %v749
    %v751 = vadd.f32 %v747, %v750
    %vm752 = vweird.f32 %v731
    %vm753 = vweird.f32 %v747
    %vm754 = vmor %vm752, %vm753
    %v755 = vsel %vm754, %v747, %v751
    %v756 = vand.u32 2147483647, %v731
    %vm757 = vcmp.eq.f32.partialorder %v756, 8.507059e+37
    %v758 = vand.u32 %v731, 2147483648
    %v759 = vor.u32 1.1754944e-38, %v758
    %v760 = vsel %vm757, %v759, %v755
    %v761 = vmul.f32 %v725, %v760
    %762 = vrot.lane.b32.xlu0 %v290, 112
    %v763 = vpop.permute.xlu0 %762
    %v766 = vsel %vm295, %v746, 0
    %768 = vmatpush.msra.mxu0 0.0
    %769 = vmatpush.msra.mxu0 0.0
    %770 = vmatpush.msra.mxu0 0.0
    %771 = vmatpush.msra.mxu0 0.0
    %772 = vmatpush.msra.mxu0 0.0
    %773 = vmatpush.msra.mxu0 0.0
    %774 = vmatpush.msra.mxu0 0.0
    %775 = vmatpush.msra.mxu0 0.0
    %776 = vmatpush.msra.mxu0 0.0
    %777 = vmatpush.msra.mxu0 0.0
    %778 = vmatpush.msra.mxu0 0.0
    %779 = vmatpush.msra.mxu0 0.0
    %780 = vmatpush.msra.mxu0 0.0
    %781 = vmatpush.msra.mxu0 0.0
    %782 = vmatpush.msra.mxu0 0.0
    %783 = vmatpush.msra.mxu0 %v763
    %784 = vmatmul.f32.gmra.mxu0 %v766
    %v785 = vpop.f32.mrf.mxu0
    %v786 = vadd.f32 0.0, %v785
    %787 = vdwg.mxu0
    %788 = vrot.lane.b32.xlu0 %v293, 112
    %v789 = vpop.permute.xlu0 %788
    %v792 = vsel %vm295, %v761, 0
    %794 = vmatpush.msra.mxu0 0.0
    %795 = vmatpush.msra.mxu0 0.0
    %796 = vmatpush.msra.mxu0 0.0
    %797 = vmatpush.msra.mxu0 0.0
    %798 = vmatpush.msra.mxu0 0.0
    %799 = vmatpush.msra.mxu0 0.0
    %800 = vmatpush.msra.mxu0 0.0
    %801 = vmatpush.msra.mxu0 0.0
    %802 = vmatpush.msra.mxu0 0.0
    %803 = vmatpush.msra.mxu0 0.0
    %804 = vmatpush.msra.mxu0 0.0
    %805 = vmatpush.msra.mxu0 0.0
    %806 = vmatpush.msra.mxu0 0.0
    %807 = vmatpush.msra.mxu0 0.0
    %808 = vmatpush.msra.mxu0 0.0
    %809 = vmatpush.msra.mxu0 %v789
    %810 = vmatmul.f32.gmra.mxu0 %v792
    %v811 = vpop.f32.mrf.mxu0
    %v812 = vadd.f32 0.0, %v811
    %813 = vdwg.mxu0
    %v815 = vsel %vm295, %v786, 0
    %v818 = vsel %vm295, %v812, 0
    %820 = vmatpush.msra.mxu0 0.0
    %821 = vmatpush.msra.mxu0 0.0
    %822 = vmatpush.msra.mxu0 0.0
    %823 = vmatpush.msra.mxu0 0.0
    %824 = vmatpush.msra.mxu0 0.0
    %825 = vmatpush.msra.mxu0 0.0
    %826 = vmatpush.msra.mxu0 0.0
    %827 = vmatpush.msra.mxu0 0.0
    %828 = vmatpush.msra.mxu0 0.0
    %829 = vmatpush.msra.mxu0 0.0
    %830 = vmatpush.msra.mxu0 0.0
    %831 = vmatpush.msra.mxu0 0.0
    %832 = vmatpush.msra.mxu0 0.0
    %833 = vmatpush.msra.mxu0 0.0
    %834 = vmatpush.msra.mxu0 0.0
    %835 = vmatpush.msra.mxu0 %v193
    %836 = vmatmul.f32.gmra.mxu0 %v815
    %v837 = vpop.f32.mrf.mxu0
    %v838 = vadd.f32 0.0, %v837
    %839 = vmatmul.f32.gmra.mxu0 %v818
    %v840 = vpop.f32.mrf.mxu0
    %v841 = vadd.f32 0.0, %v840
    %842 = vdwg.mxu0
    %v843 = vadd.f32 %v653, %v838
    %v844 = vadd.f32 %v656, %v841
    %845 = vrot.lane.b32.xlu0 %v238, 104
    %v846 = vpop.permute.xlu0 %845
    %847 = vrot.lane.b32.xlu0 %v264, 104
    %v848 = vpop.permute.xlu0 %847
    %v849 = vsel %vm295, %v846, 0
    %v851 = vsel %vm295, %v848, 0
    %853 = vmatpush.xpose.msra.mxu0 0.0
    %854 = vmatpush.xpose.msra.mxu0 0.0
    %855 = vmatpush.xpose.msra.mxu0 0.0
    %856 = vmatpush.xpose.msra.mxu0 0.0
    %857 = vmatpush.xpose.msra.mxu0 0.0
    %858 = vmatpush.xpose.msra.mxu0 0.0
    %859 = vmatpush.xpose.msra.mxu0 0.0
    %860 = vmatpush.xpose.msra.mxu0 0.0
    %861 = vmatpush.xpose.msra.mxu0 0.0
    %862 = vmatpush.xpose.msra.mxu0 0.0
    %863 = vmatpush.xpose.msra.mxu0 0.0
    %864 = vmatpush.xpose.msra.mxu0 0.0
    %865 = vmatpush.xpose.msra.mxu0 0.0
    %866 = vmatpush.xpose.msra.mxu0 0.0
    %867 = vmatpush.xpose.msra.mxu0 0.0
    %868 = vmatpush.xpose.msra.mxu0 %v851
    %869 = vmatmul.f32.gmra.mxu0 %v849
    %v870 = vpop.f32.mrf.mxu0
    %v871 = vadd.f32 %v175, %v870
    %872 = vdwg.mxu0
    %873 = vrot.lane.b32.xlu0 %v241, 104
    %v874 = vpop.permute.xlu0 %873
    %875 = vrot.lane.b32.xlu0 %v267, 104
    %v876 = vpop.permute.xlu0 %875
    %v877 = vsel %vm295, %v874, 0
    %v879 = vsel %vm295, %v876, 0
    %881 = vmatpush.xpose.msra.mxu0 0.0
    %882 = vmatpush.xpose.msra.mxu0 0.0
    %883 = vmatpush.xpose.msra.mxu0 0.0
    %884 = vmatpush.xpose.msra.mxu0 0.0
    %885 = vmatpush.xpose.msra.mxu0 0.0
    %886 = vmatpush.xpose.msra.mxu0 0.0
    %887 = vmatpush.xpose.msra.mxu0 0.0
    %888 = vmatpush.xpose.msra.mxu0 0.0
    %889 = vmatpush.xpose.msra.mxu0 0.0
    %890 = vmatpush.xpose.msra.mxu0 0.0
    %891 = vmatpush.xpose.msra.mxu0 0.0
    %892 = vmatpush.xpose.msra.mxu0 0.0
    %893 = vmatpush.xpose.msra.mxu0 0.0
    %894 = vmatpush.xpose.msra.mxu0 0.0
    %895 = vmatpush.xpose.msra.mxu0 0.0
    %896 = vmatpush.xpose.msra.mxu0 %v879
    %897 = vmatmul.f32.gmra.mxu0 %v877
    %v898 = vpop.f32.mrf.mxu0
    %v899 = vadd.f32 %v175, %v898
    %900 = vdwg.mxu0
    %v901 = vsel %vm295, %v871, -inf
    %902 = vmax.xlane.f32.xlu0 %v901
    %v903 = vpop.xlane.xlu0 %902
    %v904 = vsel %vm295, %v899, -inf
    %905 = vmax.xlane.f32.xlu0 %v904
    %v906 = vpop.xlane.xlu0 %905
    %v907 = vsub.f32 %v871, %v903
    %v908 = vsub.f32 %v899, %v906
    %v909 = vmul.f32 %v907, 1.442695
    %v910 = vpow.pop %v909
    %v911 = vmul.f32 %v908, 1.442695
    %v912 = vpow.pop %v911
    %v913 = vsel %vm295, %v910, 0.0
    %914 = vadd.xlane.f32.xlu0 %v913
    %v915 = vpop.xlane.xlu0 %914
    %v916 = vsel %vm295, %v912, 0.0
    %917 = vadd.xlane.f32.xlu0 %v916
    %v918 = vpop.xlane.xlu0 %917
    %v919 = vrcp.pop %v915
    %v920 = vmul.f32 %v915, %v919
    %v921 = vsub.f32 1.0, %v920
    %v922 = vmul.f32 %v919, %v921
    %v923 = vadd.f32 %v919, %v922
    %vm924 = vweird.f32 %v915
    %vm925 = vweird.f32 %v919
    %vm926 = vmor %vm924, %vm925
    %v927 = vsel %vm926, %v919, %v923
    %v928 = vand.u32 2147483647, %v915
    %vm929 = vcmp.eq.f32.partialorder %v928, 8.507059e+37
    %v930 = vand.u32 %v915, 2147483648
    %v931 = vor.u32 1.1754944e-38, %v930
    %v932 = vsel %vm929, %v931, %v927
    %v933 = vmul.f32 %v910, %v932
    %v934 = vrcp.pop %v918
    %v935 = vmul.f32 %v918, %v934
    %v936 = vsub.f32 1.0, %v935
    %v937 = vmul.f32 %v934, %v936
    %v938 = vadd.f32 %v934, %v937
    %vm939 = vweird.f32 %v918
    %vm940 = vweird.f32 %v934
    %vm941 = vmor %vm939, %vm940
    %v942 = vsel %vm941, %v934, %v938
    %v943 = vand.u32 2147483647, %v918
    %vm944 = vcmp.eq.f32.partialorder %v943, 8.507059e+37
    %v945 = vand.u32 %v918, 2147483648
    %v946 = vor.u32 1.1754944e-38, %v945
    %v947 = vsel %vm944, %v946, %v942
    %v948 = vmul.f32 %v912, %v947
    %949 = vrot.lane.b32.xlu0 %v290, 104
    %v950 = vpop.permute.xlu0 %949
    %v953 = vsel %vm295, %v933, 0
    %955 = vmatpush.msra.mxu0 0.0
    %956 = vmatpush.msra.mxu0 0.0
    %957 = vmatpush.msra.mxu0 0.0
    %958 = vmatpush.msra.mxu0 0.0
    %959 = vmatpush.msra.mxu0 0.0
    %960 = vmatpush.msra.mxu0 0.0
    %961 = vmatpush.msra.mxu0 0.0
    %962 = vmatpush.msra.mxu0 0.0
    %963 = vmatpush.msra.mxu0 0.0
    %964 = vmatpush.msra.mxu0 0.0
    %965 = vmatpush.msra.mxu0 0.0
    %966 = vmatpush.msra.mxu0 0.0
    %967 = vmatpush.msra.mxu0 0.0
    %968 = vmatpush.msra.mxu0 0.0
    %969 = vmatpush.msra.mxu0 0.0
    %970 = vmatpush.msra.mxu0 %v950
    %971 = vmatmul.f32.gmra.mxu0 %v953
    %v972 = vpop.f32.mrf.mxu0
    %v973 = vadd.f32 0.0, %v972
    %974 = vdwg.mxu0
    %975 = vrot.lane.b32.xlu0 %v293, 104
    %v976 = vpop.permute.xlu0 %975
    %v979 = vsel %vm295, %v948, 0
    %981 = vmatpush.msra.mxu0 0.0
    %982 = vmatpush.msra.mxu0 0.0
    %983 = vmatpush.msra.mxu0 0.0
    %984 = vmatpush.msra.mxu0 0.0
    %985 = vmatpush.msra.mxu0 0.0
    %986 = vmatpush.msra.mxu0 0.0
    %987 = vmatpush.msra.mxu0 0.0
    %988 = vmatpush.msra.mxu0 0.0
    %989 = vmatpush.msra.mxu0 0.0
    %990 = vmatpush.msra.mxu0 0.0
    %991 = vmatpush.msra.mxu0 0.0
    %992 = vmatpush.msra.mxu0 0.0
    %993 = vmatpush.msra.mxu0 0.0
    %994 = vmatpush.msra.mxu0 0.0
    %995 = vmatpush.msra.mxu0 0.0
    %996 = vmatpush.msra.mxu0 %v976
    %997 = vmatmul.f32.gmra.mxu0 %v979
    %v998 = vpop.f32.mrf.mxu0
    %v999 = vadd.f32 0.0, %v998
    %1000 = vdwg.mxu0
    %v1002 = vsel %vm295, %v973, 0
    %v1005 = vsel %vm295, %v999, 0
    %1007 = vmatpush.msra.mxu0 0.0
    %1008 = vmatpush.msra.mxu0 0.0
    %1009 = vmatpush.msra.mxu0 0.0
    %1010 = vmatpush.msra.mxu0 0.0
    %1011 = vmatpush.msra.mxu0 0.0
    %1012 = vmatpush.msra.mxu0 0.0
    %1013 = vmatpush.msra.mxu0 0.0
    %1014 = vmatpush.msra.mxu0 0.0
    %1015 = vmatpush.msra.mxu0 0.0
    %1016 = vmatpush.msra.mxu0 0.0
    %1017 = vmatpush.msra.mxu0 0.0
    %1018 = vmatpush.msra.mxu0 0.0
    %1019 = vmatpush.msra.mxu0 0.0
    %1020 = vmatpush.msra.mxu0 0.0
    %1021 = vmatpush.msra.mxu0 0.0
    %1022 = vmatpush.msra.mxu0 %v194
    %1023 = vmatmul.f32.gmra.mxu0 %v1002
    %v1024 = vpop.f32.mrf.mxu0
    %v1025 = vadd.f32 0.0, %v1024
    %1026 = vmatmul.f32.gmra.mxu0 %v1005
    %v1027 = vpop.f32.mrf.mxu0
    %v1028 = vadd.f32 0.0, %v1027
    %1029 = vdwg.mxu0
    %v1030 = vadd.f32 %v843, %v1025
    %v1031 = vadd.f32 %v844, %v1028
    %v1033 = vperm.slane %v195, 0
    %v1035 = vadd.f32 %v1030, %v1033
    %v1036 = vadd.f32 %v1031, %v1033
    %v1037 = vadd.f32 %v173, %v1035
    %v1038 = vadd.f32 %v174, %v1036
    %v1039 = vld [vmem:[#allocation11] sm:$0x1]
    %v1040 = vld [vmem:[%s15] sm:$0x1]
    %v1041 = vsel %vm213, %v1037, 0.0
    %1042 = vadd.xlane.f32.xlu0 %v1041
    %v1043 = vpop.xlane.xlu0 %1042
    %v1044 = vsel %vm213, %v1038, 0.0
    %1045 = vadd.xlane.f32.xlu0 %v1044
    %v1046 = vpop.xlane.xlu0 %1045
    %v1047 = vrcp.pop 32.0
    %v1048 = vmul.f32 32.0, %v1047
    %v1049 = vsub.f32 1.0, %v1048
    %v1050 = vmul.f32 %v1047, %v1049
    %v1051 = vadd.f32 %v1047, %v1050
    %vm1052 = vweird.f32 %v1047
    %v1053 = vsel %vm1052, %v1047, %v1051
    %v1054 = vmul.f32 %v1043, %v1053
    %v1055 = vmul.f32 %v1046, %v1053
    %v1056 = vsub.f32 %v1037, %v1054
    %v1057 = vsub.f32 %v1038, %v1055
    %v1058 = vmul.f32 %v1056, %v1056
    %v1059 = vmul.f32 %v1057, %v1057
    %v1060 = vsel %vm213, %v1058, 0.0
    %1061 = vadd.xlane.f32.xlu0 %v1060
    %v1062 = vpop.xlane.xlu0 %1061
    %v1063 = vsel %vm213, %v1059, 0.0
    %1064 = vadd.xlane.f32.xlu0 %v1063
    %v1065 = vpop.xlane.xlu0 %1064
    %v1066 = vmul.f32 %v1062, %v1053
    %v1067 = vmul.f32 %v1065, %v1053
    %v1068 = vadd.f32 %v1066, 1e-05
    %v1069 = vadd.f32 %v1067, 1e-05
    %v1070 = vrsqrt.pop %v1068
    %v1071 = vmul.f32 %v1070, %v1068
    %v1072 = vmul.f32 %v1071, %v1070
    %v1073 = vmul.f32 0.5, %v1072
    %v1074 = vsub.f32 1.5, %v1073
    %v1075 = vmul.f32 %v1070, %v1074
    %vm1076 = vweird.f32 %v1068
    %vm1077 = vweird.f32 %v1070
    %vm1078 = vmor %vm1076, %vm1077
    %v1079 = vsel %vm1078, %v1070, %v1075
    %v1080 = vrsqrt.pop %v1069
    %v1081 = vmul.f32 %v1080, %v1069
    %v1082 = vmul.f32 %v1081, %v1080
    %v1083 = vmul.f32 0.5, %v1082
    %v1084 = vsub.f32 1.5, %v1083
    %v1085 = vmul.f32 %v1080, %v1084
    %vm1086 = vweird.f32 %v1069
    %vm1087 = vweird.f32 %v1080
    %vm1088 = vmor %vm1086, %vm1087
    %v1089 = vsel %vm1088, %v1080, %v1085
    %v1090 = vmul.f32 %v1056, %v1079
    %v1091 = vmul.f32 %v1057, %v1089
    %v1093 = vperm.slane %v1039, 0
    %v1095 = vmul.f32 %v1090, %v1093
    %v1096 = vmul.f32 %v1091, %v1093
    %v1098 = vperm.slane %v1040, 0
    %v1100 = vadd.f32 %v1095, %v1098
    %v1101 = vadd.f32 %v1096, %v1098
    %v1103 = vperm.slane %v200, 0
    %v1106 = vsel %vm213, %v1100, 0
    %v1109 = vsel %vm213, %v1101, 0
    %1111 = vmatpush.msra.mxu0 0.0
    %1112 = vmatpush.msra.mxu0 0.0
    %1113 = vmatpush.msra.mxu0 0.0
    %1114 = vmatpush.msra.mxu0 0.0
    %1115 = vmatpush.msra.mxu0 0.0
    %1116 = vmatpush.msra.mxu0 0.0
    %1117 = vmatpush.msra.mxu0 0.0
    %1118 = vmatpush.msra.mxu0 0.0
    %1119 = vmatpush.msra.mxu0 0.0
    %1120 = vmatpush.msra.mxu0 0.0
    %1121 = vmatpush.msra.mxu0 0.0
    %1122 = vmatpush.msra.mxu0 0.0
    %1123 = vmatpush.msra.mxu0 %v199
    %1124 = vmatpush.msra.mxu0 %v198
    %1125 = vmatpush.msra.mxu0 %v197
    %1126 = vmatpush.msra.mxu0 %v196
    %1127 = vmatmul.f32.gmra.mxu0 %v1106
    %v1128 = vpop.f32.mrf.mxu0
    %v1129 = vadd.f32 %v1103, %v1128
    %1130 = vmatmul.f32.gmra.mxu0 %v1109
    %v1131 = vpop.f32.mrf.mxu0
    %v1132 = vadd.f32 %v1103, %v1131
    %1133 = vdwg.mxu0
    %v1134 = vmax.f32 %v1129, 0.0
    %v1135 = vmax.f32 %v1132, 0.0
    %v1137 = vperm.slane %v209, 0
    %vm1139 = vcmask 523264
    %v1141 = vsel %vm1139, %v1134, 0
    %v1144 = vsel %vm1139, %v1135, 0
    %1146 = vmatpush.msra.mxu0 0.0
    %1147 = vmatpush.msra.mxu0 0.0
    %1148 = vmatpush.msra.mxu0 0.0
    %1149 = vmatpush.msra.mxu0 0.0
    %1150 = vmatpush.msra.mxu0 0.0
    %1151 = vmatpush.msra.mxu0 0.0
    %1152 = vmatpush.msra.mxu0 0.0
    %1153 = vmatpush.msra.mxu0 0.0
    %1154 = vmatpush.msra.mxu0 %v208
    %1155 = vmatpush.msra.mxu0 %v207
    %1156 = vmatpush.msra.mxu0 %v206
    %1157 = vmatpush.msra.mxu0 %v205
    %1158 = vmatpush.msra.mxu0 %v204
    %1159 = vmatpush.msra.mxu0 %v203
    %1160 = vmatpush.msra.mxu0 %v202
    %1161 = vmatpush.msra.mxu0 %v201
    %1162 = vmatmul.f32.gmra.mxu0 %v1141
    %v1163 = vpop.f32.mrf.mxu0
    %v1164 = vadd.f32 %v1137, %v1163
    %1165 = vmatmul.f32.gmra.mxu0 %v1144
    %v1166 = vpop.f32.mrf.mxu0
    %v1167 = vadd.f32 %v1137, %v1166
    %1168 = vdwg.mxu0
    %v1169 = vadd.f32 %v1100, %v1164
    %v1170 = vadd.f32 %v1101, %v1167
    %v1171 = vld [vmem:[%s16] sm:$0x1]
    %v1172 = vld [vmem:[#allocation13] sm:$0x1]
    %v1173 = vsel %vm213, %v1169, 0.0
    %1174 = vadd.xlane.f32.xlu0 %v1173
    %v1175 = vpop.xlane.xlu0 %1174
    %v1176 = vsel %vm213, %v1170, 0.0
    %1177 = vadd.xlane.f32.xlu0 %v1176
    %v1178 = vpop.xlane.xlu0 %1177
    %v1179 = vmul.f32 %v1175, %v1053
    %v1180 = vmul.f32 %v1178, %v1053
    %v1181 = vsub.f32 %v1169, %v1179
    %v1182 = vsub.f32 %v1170, %v1180
    %v1183 = vmul.f32 %v1181, %v1181
    %v1184 = vmul.f32 %v1182, %v1182
    %v1185 = vsel %vm213, %v1183, 0.0
    %1186 = vadd.xlane.f32.xlu0 %v1185
    %v1187 = vpop.xlane.xlu0 %1186
    %v1188 = vsel %vm213, %v1184, 0.0
    %1189 = vadd.xlane.f32.xlu0 %v1188
    %v1190 = vpop.xlane.xlu0 %1189
    %v1191 = vmul.f32 %v1187, %v1053
    %v1192 = vmul.f32 %v1190, %v1053
    %v1193 = vadd.f32 %v1191, 1e-05
    %v1194 = vadd.f32 %v1192, 1e-05
    %v1195 = vrsqrt.pop %v1193
    %v1196 = vmul.f32 %v1195, %v1193
    %v1197 = vmul.f32 %v1196, %v1195
    %v1198 = vmul.f32 0.5, %v1197
    %v1199 = vsub.f32 1.5, %v1198
    %v1200 = vmul.f32 %v1195, %v1199
    %vm1201 = vweird.f32 %v1193
    %vm1202 = vweird.f32 %v1195
    %vm1203 = vmor %vm1201, %vm1202
    %v1204 = vsel %vm1203, %v1195, %v1200
    %v1205 = vrsqrt.pop %v1194
    %v1206 = vmul.f32 %v1205, %v1194
    %v1207 = vmul.f32 %v1206, %v1205
    %v1208 = vmul.f32 0.5, %v1207
    %v1209 = vsub.f32 1.5, %v1208
    %v1210 = vmul.f32 %v1205, %v1209
    %vm1211 = vweird.f32 %v1194
    %vm1212 = vweird.f32 %v1205
    %vm1213 = vmor %vm1211, %vm1212
    %v1214 = vsel %vm1213, %v1205, %v1210
    %v1215 = vmul.f32 %v1181, %v1204
    %v1216 = vmul.f32 %v1182, %v1214
    %v1218 = vperm.slane %v1171, 0
    %v1220 = vmul.f32 %v1215, %v1218
    %v1221 = vmul.f32 %v1216, %v1218
    %v1223 = vperm.slane %v1172, 0
    %v1225 = vadd.f32 %v1220, %v1223
    %v1226 = vadd.f32 %v1221, %v1223
    %s1227 = scalar_lea.vmem %s2, 32
    %v1228 = vld [vmem:[%s1227] sm:$0xff]
    %v1229 = vld [vmem:[%s1227 + $0x8] sm:$0xff]
    %v1230 = vld [vmem:[%s1227 + $0x10] sm:$0xff]
    %v1231 = vld [vmem:[%s1227 + $0x18] sm:$0xff]
    %s1232 = scalar_lea.vmem %s3, 1
    %v1233 = vld [vmem:[%s1232] sm:$0x1]
    %s1234 = scalar_lea.vmem %s4, 32
    %v1235 = vld [vmem:[%s1234] sm:$0xff]
    %v1236 = vld [vmem:[%s1234 + $0x8] sm:$0xff]
    %v1237 = vld [vmem:[%s1234 + $0x10] sm:$0xff]
    %v1238 = vld [vmem:[%s1234 + $0x18] sm:$0xff]
    %s1239 = scalar_lea.vmem [#allocation7], 1
    %v1240 = vld [vmem:[%s1239] sm:$0x1]
    %s1241 = scalar_lea.vmem %s6, 32
    %v1242 = vld [vmem:[%s1241] sm:$0xff]
    %v1243 = vld [vmem:[%s1241 + $0x8] sm:$0xff]
    %v1244 = vld [vmem:[%s1241 + $0x10] sm:$0xff]
    %v1245 = vld [vmem:[%s1241 + $0x18] sm:$0xff]
    %s1246 = scalar_lea.vmem %s7, 1
    %v1247 = vld [vmem:[%s1246] sm:$0x1]
    %s1248 = scalar_lea.vmem [#allocation8], 32
    %v1249 = vld [vmem:[%s1248] sm:$0xff]
    %v1250 = vld [vmem:[%s1248 + $0x8] sm:$0xff]
    %v1251 = vld [vmem:[%s1248 + $0x10] sm:$0xff]
    %v1252 = vld [vmem:[%s1248 + $0x18] sm:$0xff]
    %s1253 = scalar_lea.vmem %s9, 1
    %v1254 = vld [vmem:[%s1253] sm:$0x1]
    %s1255 = scalar_lea.vmem [#allocation10], 32
    %v1256 = vld [vmem:[%s1255] sm:$0xff]
    %v1257 = vld [vmem:[%s1255 + $0x8] sm:$0xff]
    %v1258 = vld [vmem:[%s1255 + $0x10] sm:$0xff]
    %v1259 = vld [vmem:[%s1255 + $0x18] sm:$0xff]
    %s1260 = scalar_lea.vmem %s11, 1
    %v1261 = vld [vmem:[%s1260] sm:$0x1]
    %s1262 = scalar_lea.vmem %s12, 64
    %v1263 = vld [vmem:[%s1262] sm:$0xff]
    %v1264 = vld [vmem:[%s1262 + $0x8] sm:$0xff]
    %v1265 = vld [vmem:[%s1262 + $0x10] sm:$0xff]
    %v1266 = vld [vmem:[%s1262 + $0x18] sm:$0xff]
    %v1267 = vld [vmem:[%s1262 + $0x20] sm:$0xff]
    %v1268 = vld [vmem:[%s1262 + $0x28] sm:$0xff]
    %v1269 = vld [vmem:[%s1262 + $0x30] sm:$0xff]
    %v1270 = vld [vmem:[%s1262 + $0x38] sm:$0xff]
    %s1271 = scalar_lea.vmem %s13, 1
    %v1272 = vld [vmem:[%s1271] sm:$0x1]
    %v1274 = vperm.slane %v1233, 0
    %v1277 = vsel %vm213, %v1225, 0
    %v1280 = vsel %vm213, %v1226, 0
    %1282 = vmatpush.msra.mxu0 0.0
    %1283 = vmatpush.msra.mxu0 0.0
    %1284 = vmatpush.msra.mxu0 0.0
    %1285 = vmatpush.msra.mxu0 0.0
    %1286 = vmatpush.msra.mxu0 0.0
    %1287 = vmatpush.msra.mxu0 0.0
    %1288 = vmatpush.msra.mxu0 0.0
    %1289 = vmatpush.msra.mxu0 0.0
    %1290 = vmatpush.msra.mxu0 0.0
    %1291 = vmatpush.msra.mxu0 0.0
    %1292 = vmatpush.msra.mxu0 0.0
    %1293 = vmatpush.msra.mxu0 0.0
    %1294 = vmatpush.msra.mxu0 %v1231
    %1295 = vmatpush.msra.mxu0 %v1230
    %1296 = vmatpush.msra.mxu0 %v1229
    %1297 = vmatpush.msra.mxu0 %v1228
    %1298 = vmatmul.f32.gmra.mxu0 %v1277
    %v1299 = vpop.f32.mrf.mxu0
    %v1300 = vadd.f32 %v1274, %v1299
    %1301 = vmatmul.f32.gmra.mxu0 %v1280
    %v1302 = vpop.f32.mrf.mxu0
    %v1303 = vadd.f32 %v1274, %v1302
    %1304 = vdwg.mxu0
    %v1306 = vperm.slane %v1240, 0
    %1308 = vmatpush.msra.mxu0 0.0
    %1309 = vmatpush.msra.mxu0 0.0
    %1310 = vmatpush.msra.mxu0 0.0
    %1311 = vmatpush.msra.mxu0 0.0
    %1312 = vmatpush.msra.mxu0 0.0
    %1313 = vmatpush.msra.mxu0 0.0
    %1314 = vmatpush.msra.mxu0 0.0
    %1315 = vmatpush.msra.mxu0 0.0
    %1316 = vmatpush.msra.mxu0 0.0
    %1317 = vmatpush.msra.mxu0 0.0
    %1318 = vmatpush.msra.mxu0 0.0
    %1319 = vmatpush.msra.mxu0 0.0
    %1320 = vmatpush.msra.mxu0 %v1238
    %1321 = vmatpush.msra.mxu0 %v1237
    %1322 = vmatpush.msra.mxu0 %v1236
    %1323 = vmatpush.msra.mxu0 %v1235
    %1324 = vmatmul.f32.gmra.mxu0 %v1277
    %v1325 = vpop.f32.mrf.mxu0
    %v1326 = vadd.f32 %v1306, %v1325
    %1327 = vmatmul.f32.gmra.mxu0 %v1280
    %v1328 = vpop.f32.mrf.mxu0
    %v1329 = vadd.f32 %v1306, %v1328
    %1330 = vdwg.mxu0
    %v1332 = vperm.slane %v1247, 0
    %1334 = vmatpush.msra.mxu0 0.0
    %1335 = vmatpush.msra.mxu0 0.0
    %1336 = vmatpush.msra.mxu0 0.0
    %1337 = vmatpush.msra.mxu0 0.0
    %1338 = vmatpush.msra.mxu0 0.0
    %1339 = vmatpush.msra.mxu0 0.0
    %1340 = vmatpush.msra.mxu0 0.0
    %1341 = vmatpush.msra.mxu0 0.0
    %1342 = vmatpush.msra.mxu0 0.0
    %1343 = vmatpush.msra.mxu0 0.0
    %1344 = vmatpush.msra.mxu0 0.0
    %1345 = vmatpush.msra.mxu0 0.0
    %1346 = vmatpush.msra.mxu0 %v1245
    %1347 = vmatpush.msra.mxu0 %v1244
    %1348 = vmatpush.msra.mxu0 %v1243
    %1349 = vmatpush.msra.mxu0 %v1242
    %1350 = vmatmul.f32.gmra.mxu0 %v1277
    %v1351 = vpop.f32.mrf.mxu0
    %v1352 = vadd.f32 %v1332, %v1351
    %1353 = vmatmul.f32.gmra.mxu0 %v1280
    %v1354 = vpop.f32.mrf.mxu0
    %v1355 = vadd.f32 %v1332, %v1354
    %1356 = vdwg.mxu0
    %v1358 = vsel %vm295, %v1300, 0
    %v1361 = vsel %vm295, %v1326, 0
    %1363 = vmatpush.xpose.msra.mxu0 0.0
    %1364 = vmatpush.xpose.msra.mxu0 0.0
    %1365 = vmatpush.xpose.msra.mxu0 0.0
    %1366 = vmatpush.xpose.msra.mxu0 0.0
    %1367 = vmatpush.xpose.msra.mxu0 0.0
    %1368 = vmatpush.xpose.msra.mxu0 0.0
    %1369 = vmatpush.xpose.msra.mxu0 0.0
    %1370 = vmatpush.xpose.msra.mxu0 0.0
    %1371 = vmatpush.xpose.msra.mxu0 0.0
    %1372 = vmatpush.xpose.msra.mxu0 0.0
    %1373 = vmatpush.xpose.msra.mxu0 0.0
    %1374 = vmatpush.xpose.msra.mxu0 0.0
    %1375 = vmatpush.xpose.msra.mxu0 0.0
    %1376 = vmatpush.xpose.msra.mxu0 0.0
    %1377 = vmatpush.xpose.msra.mxu0 0.0
    %1378 = vmatpush.xpose.msra.mxu0 %v1361
    %1379 = vmatmul.f32.gmra.mxu0 %v1358
    %v1380 = vpop.f32.mrf.mxu0
    %v1381 = vadd.f32 %v175, %v1380
    %1382 = vdwg.mxu0
    %v1384 = vsel %vm295, %v1303, 0
    %v1387 = vsel %vm295, %v1329, 0
    %1389 = vmatpush.xpose.msra.mxu0 0.0
    %1390 = vmatpush.xpose.msra.mxu0 0.0
    %1391 = vmatpush.xpose.msra.mxu0 0.0
    %1392 = vmatpush.xpose.msra.mxu0 0.0
    %1393 = vmatpush.xpose.msra.mxu0 0.0
    %1394 = vmatpush.xpose.msra.mxu0 0.0
    %1395 = vmatpush.xpose.msra.mxu0 0.0
    %1396 = vmatpush.xpose.msra.mxu0 0.0
    %1397 = vmatpush.xpose.msra.mxu0 0.0
    %1398 = vmatpush.xpose.msra.mxu0 0.0
    %1399 = vmatpush.xpose.msra.mxu0 0.0
    %1400 = vmatpush.xpose.msra.mxu0 0.0
    %1401 = vmatpush.xpose.msra.mxu0 0.0
    %1402 = vmatpush.xpose.msra.mxu0 0.0
    %1403 = vmatpush.xpose.msra.mxu0 0.0
    %1404 = vmatpush.xpose.msra.mxu0 %v1387
    %1405 = vmatmul.f32.gmra.mxu0 %v1384
    %v1406 = vpop.f32.mrf.mxu0
    %v1407 = vadd.f32 %v175, %v1406
    %1408 = vdwg.mxu0
    %v1409 = vsel %vm295, %v1381, -inf
    %1410 = vmax.xlane.f32.xlu0 %v1409
    %v1411 = vpop.xlane.xlu0 %1410
    %v1412 = vsel %vm295, %v1407, -inf
    %1413 = vmax.xlane.f32.xlu0 %v1412
    %v1414 = vpop.xlane.xlu0 %1413
    %v1415 = vsub.f32 %v1381, %v1411
    %v1416 = vsub.f32 %v1407, %v1414
    %v1417 = vmul.f32 %v1415, 1.442695
    %v1418 = vpow.pop %v1417
    %v1419 = vmul.f32 %v1416, 1.442695
    %v1420 = vpow.pop %v1419
    %v1421 = vsel %vm295, %v1418, 0.0
    %1422 = vadd.xlane.f32.xlu0 %v1421
    %v1423 = vpop.xlane.xlu0 %1422
    %v1424 = vsel %vm295, %v1420, 0.0
    %1425 = vadd.xlane.f32.xlu0 %v1424
    %v1426 = vpop.xlane.xlu0 %1425
    %v1427 = vrcp.pop %v1423
    %v1428 = vmul.f32 %v1423, %v1427
    %v1429 = vsub.f32 1.0, %v1428
    %v1430 = vmul.f32 %v1427, %v1429
    %v1431 = vadd.f32 %v1427, %v1430
    %vm1432 = vweird.f32 %v1423
    %vm1433 = vweird.f32 %v1427
    %vm1434 = vmor %vm1432, %vm1433
    %v1435 = vsel %vm1434, %v1427, %v1431
    %v1436 = vand.u32 2147483647, %v1423
    %vm1437 = vcmp.eq.f32.partialorder %v1436, 8.507059e+37
    %v1438 = vand.u32 %v1423, 2147483648
    %v1439 = vor.u32 1.1754944e-38, %v1438
    %v1440 = vsel %vm1437, %v1439, %v1435
    %v1441 = vmul.f32 %v1418, %v1440
    %v1442 = vrcp.pop %v1426
    %v1443 = vmul.f32 %v1426, %v1442
    %v1444 = vsub.f32 1.0, %v1443
    %v1445 = vmul.f32 %v1442, %v1444
    %v1446 = vadd.f32 %v1442, %v1445
    %vm1447 = vweird.f32 %v1426
    %vm1448 = vweird.f32 %v1442
    %vm1449 = vmor %vm1447, %vm1448
    %v1450 = vsel %vm1449, %v1442, %v1446
    %v1451 = vand.u32 2147483647, %v1426
    %vm1452 = vcmp.eq.f32.partialorder %v1451, 8.507059e+37
    %v1453 = vand.u32 %v1426, 2147483648
    %v1454 = vor.u32 1.1754944e-38, %v1453
    %v1455 = vsel %vm1452, %v1454, %v1450
    %v1456 = vmul.f32 %v1420, %v1455
    %v1458 = vsel %vm295, %v1441, 0
    %1460 = vmatpush.msra.mxu0 0.0
    %1461 = vmatpush.msra.mxu0 0.0
    %1462 = vmatpush.msra.mxu0 0.0
    %1463 = vmatpush.msra.mxu0 0.0
    %1464 = vmatpush.msra.mxu0 0.0
    %1465 = vmatpush.msra.mxu0 0.0
    %1466 = vmatpush.msra.mxu0 0.0
    %1467 = vmatpush.msra.mxu0 0.0
    %1468 = vmatpush.msra.mxu0 0.0
    %1469 = vmatpush.msra.mxu0 0.0
    %1470 = vmatpush.msra.mxu0 0.0
    %1471 = vmatpush.msra.mxu0 0.0
    %1472 = vmatpush.msra.mxu0 0.0
    %1473 = vmatpush.msra.mxu0 0.0
    %1474 = vmatpush.msra.mxu0 0.0
    %1475 = vmatpush.msra.mxu0 %v1352
    %1476 = vmatmul.f32.gmra.mxu0 %v1458
    %v1477 = vpop.f32.mrf.mxu0
    %v1478 = vadd.f32 0.0, %v1477
    %1479 = vdwg.mxu0
    %v1481 = vsel %vm295, %v1456, 0
    %1483 = vmatpush.msra.mxu0 0.0
    %1484 = vmatpush.msra.mxu0 0.0
    %1485 = vmatpush.msra.mxu0 0.0
    %1486 = vmatpush.msra.mxu0 0.0
    %1487 = vmatpush.msra.mxu0 0.0
    %1488 = vmatpush.msra.mxu0 0.0
    %1489 = vmatpush.msra.mxu0 0.0
    %1490 = vmatpush.msra.mxu0 0.0
    %1491 = vmatpush.msra.mxu0 0.0
    %1492 = vmatpush.msra.mxu0 0.0
    %1493 = vmatpush.msra.mxu0 0.0
    %1494 = vmatpush.msra.mxu0 0.0
    %1495 = vmatpush.msra.mxu0 0.0
    %1496 = vmatpush.msra.mxu0 0.0
    %1497 = vmatpush.msra.mxu0 0.0
    %1498 = vmatpush.msra.mxu0 %v1355
    %1499 = vmatmul.f32.gmra.mxu0 %v1481
    %v1500 = vpop.f32.mrf.mxu0
    %v1501 = vadd.f32 0.0, %v1500
    %1502 = vdwg.mxu0
    %1503 = vrot.lane.b32.xlu0 %v1300, 120
    %v1504 = vpop.permute.xlu0 %1503
    %1505 = vrot.lane.b32.xlu0 %v1326, 120
    %v1506 = vpop.permute.xlu0 %1505
    %v1507 = vsel %vm295, %v1504, 0
    %v1509 = vsel %vm295, %v1506, 0
    %1511 = vmatpush.xpose.msra.mxu0 0.0
    %1512 = vmatpush.xpose.msra.mxu0 0.0
    %1513 = vmatpush.xpose.msra.mxu0 0.0
    %1514 = vmatpush.xpose.msra.mxu0 0.0
    %1515 = vmatpush.xpose.msra.mxu0 0.0
    %1516 = vmatpush.xpose.msra.mxu0 0.0
    %1517 = vmatpush.xpose.msra.mxu0 0.0
    %1518 = vmatpush.xpose.msra.mxu0 0.0
    %1519 = vmatpush.xpose.msra.mxu0 0.0
    %1520 = vmatpush.xpose.msra.mxu0 0.0
    %1521 = vmatpush.xpose.msra.mxu0 0.0
    %1522 = vmatpush.xpose.msra.mxu0 0.0
    %1523 = vmatpush.xpose.msra.mxu0 0.0
    %1524 = vmatpush.xpose.msra.mxu0 0.0
    %1525 = vmatpush.xpose.msra.mxu0 0.0
    %1526 = vmatpush.xpose.msra.mxu0 %v1509
    %1527 = vmatmul.f32.gmra.mxu0 %v1507
    %v1528 = vpop.f32.mrf.mxu0
    %v1529 = vadd.f32 %v175, %v1528
    %1530 = vdwg.mxu0
    %1531 = vrot.lane.b32.xlu0 %v1303, 120
    %v1532 = vpop.permute.xlu0 %1531
    %1533 = vrot.lane.b32.xlu0 %v1329, 120
    %v1534 = vpop.permute.xlu0 %1533
    %v1535 = vsel %vm295, %v1532, 0
    %v1537 = vsel %vm295, %v1534, 0
    %1539 = vmatpush.xpose.msra.mxu0 0.0
    %1540 = vmatpush.xpose.msra.mxu0 0.0
    %1541 = vmatpush.xpose.msra.mxu0 0.0
    %1542 = vmatpush.xpose.msra.mxu0 0.0
    %1543 = vmatpush.xpose.msra.mxu0 0.0
    %1544 = vmatpush.xpose.msra.mxu0 0.0
    %1545 = vmatpush.xpose.msra.mxu0 0.0
    %1546 = vmatpush.xpose.msra.mxu0 0.0
    %1547 = vmatpush.xpose.msra.mxu0 0.0
    %1548 = vmatpush.xpose.msra.mxu0 0.0
    %1549 = vmatpush.xpose.msra.mxu0 0.0
    %1550 = vmatpush.xpose.msra.mxu0 0.0
    %1551 = vmatpush.xpose.msra.mxu0 0.0
    %1552 = vmatpush.xpose.msra.mxu0 0.0
    %1553 = vmatpush.xpose.msra.mxu0 0.0
    %1554 = vmatpush.xpose.msra.mxu0 %v1537
    %1555 = vmatmul.f32.gmra.mxu0 %v1535
    %v1556 = vpop.f32.mrf.mxu0
    %v1557 = vadd.f32 %v175, %v1556
    %1558 = vdwg.mxu0
    %v1559 = vsel %vm295, %v1529, -inf
    %1560 = vmax.xlane.f32.xlu0 %v1559
    %v1561 = vpop.xlane.xlu0 %1560
    %v1562 = vsel %vm295, %v1557, -inf
    %1563 = vmax.xlane.f32.xlu0 %v1562
    %v1564 = vpop.xlane.xlu0 %1563
    %v1565 = vsub.f32 %v1529, %v1561
    %v1566 = vsub.f32 %v1557, %v1564
    %v1567 = vmul.f32 %v1565, 1.442695
    %v1568 = vpow.pop %v1567
    %v1569 = vmul.f32 %v1566, 1.442695
    %v1570 = vpow.pop %v1569
    %v1571 = vsel %vm295, %v1568, 0.0
    %1572 = vadd.xlane.f32.xlu0 %v1571
    %v1573 = vpop.xlane.xlu0 %1572
    %v1574 = vsel %vm295, %v1570, 0.0
    %1575 = vadd.xlane.f32.xlu0 %v1574
    %v1576 = vpop.xlane.xlu0 %1575
    %v1577 = vrcp.pop %v1573
    %v1578 = vmul.f32 %v1573, %v1577
    %v1579 = vsub.f32 1.0, %v1578
    %v1580 = vmul.f32 %v1577, %v1579
    %v1581 = vadd.f32 %v1577, %v1580
    %vm1582 = vweird.f32 %v1573
    %vm1583 = vweird.f32 %v1577
    %vm1584 = vmor %vm1582, %vm1583
    %v1585 = vsel %vm1584, %v1577, %v1581
    %v1586 = vand.u32 2147483647, %v1573
    %vm1587 = vcmp.eq.f32.partialorder %v1586, 8.507059e+37
    %v1588 = vand.u32 %v1573, 2147483648
    %v1589 = vor.u32 1.1754944e-38, %v1588
    %v1590 = vsel %vm1587, %v1589, %v1585
    %v1591 = vmul.f32 %v1568, %v1590
    %v1592 = vrcp.pop %v1576
    %v1593 = vmul.f32 %v1576, %v1592
    %v1594 = vsub.f32 1.0, %v1593
    %v1595 = vmul.f32 %v1592, %v1594
    %v1596 = vadd.f32 %v1592, %v1595
    %vm1597 = vweird.f32 %v1576
    %vm1598 = vweird.f32 %v1592
    %vm1599 = vmor %vm1597, %vm1598
    %v1600 = vsel %vm1599, %v1592, %v1596
    %v1601 = vand.u32 2147483647, %v1576
    %vm1602 = vcmp.eq.f32.partialorder %v1601, 8.507059e+37
    %v1603 = vand.u32 %v1576, 2147483648
    %v1604 = vor.u32 1.1754944e-38, %v1603
    %v1605 = vsel %vm1602, %v1604, %v1600
    %v1606 = vmul.f32 %v1570, %v1605
    %1608 = vrot.lane.b32.xlu0 %v1352, 120
    %v1609 = vpop.permute.xlu0 %1608
    %v1612 = vsel %vm295, %v1591, 0
    %1614 = vmatpush.msra.mxu0 0.0
    %1615 = vmatpush.msra.mxu0 0.0
    %1616 = vmatpush.msra.mxu0 0.0
    %1617 = vmatpush.msra.mxu0 0.0
    %1618 = vmatpush.msra.mxu0 0.0
    %1619 = vmatpush.msra.mxu0 0.0
    %1620 = vmatpush.msra.mxu0 0.0
    %1621 = vmatpush.msra.mxu0 0.0
    %1622 = vmatpush.msra.mxu0 0.0
    %1623 = vmatpush.msra.mxu0 0.0
    %1624 = vmatpush.msra.mxu0 0.0
    %1625 = vmatpush.msra.mxu0 0.0
    %1626 = vmatpush.msra.mxu0 0.0
    %1627 = vmatpush.msra.mxu0 0.0
    %1628 = vmatpush.msra.mxu0 0.0
    %1629 = vmatpush.msra.mxu0 %v1609
    %1630 = vmatmul.f32.gmra.mxu0 %v1612
    %v1631 = vpop.f32.mrf.mxu0
    %v1632 = vadd.f32 0.0, %v1631
    %1633 = vdwg.mxu0
    %1635 = vrot.lane.b32.xlu0 %v1355, 120
    %v1636 = vpop.permute.xlu0 %1635
    %v1639 = vsel %vm295, %v1606, 0
    %1641 = vmatpush.msra.mxu0 0.0
    %1642 = vmatpush.msra.mxu0 0.0
    %1643 = vmatpush.msra.mxu0 0.0
    %1644 = vmatpush.msra.mxu0 0.0
    %1645 = vmatpush.msra.mxu0 0.0
    %1646 = vmatpush.msra.mxu0 0.0
    %1647 = vmatpush.msra.mxu0 0.0
    %1648 = vmatpush.msra.mxu0 0.0
    %1649 = vmatpush.msra.mxu0 0.0
    %1650 = vmatpush.msra.mxu0 0.0
    %1651 = vmatpush.msra.mxu0 0.0
    %1652 = vmatpush.msra.mxu0 0.0
    %1653 = vmatpush.msra.mxu0 0.0
    %1654 = vmatpush.msra.mxu0 0.0
    %1655 = vmatpush.msra.mxu0 0.0
    %1656 = vmatpush.msra.mxu0 %v1636
    %1657 = vmatmul.f32.gmra.mxu0 %v1639
    %v1658 = vpop.f32.mrf.mxu0
    %v1659 = vadd.f32 0.0, %v1658
    %1660 = vdwg.mxu0
    %v1662 = vsel %vm295, %v1632, 0
    %v1665 = vsel %vm295, %v1659, 0
    %1667 = vmatpush.msra.mxu0 0.0
    %1668 = vmatpush.msra.mxu0 0.0
    %1669 = vmatpush.msra.mxu0 0.0
    %1670 = vmatpush.msra.mxu0 0.0
    %1671 = vmatpush.msra.mxu0 0.0
    %1672 = vmatpush.msra.mxu0 0.0
    %1673 = vmatpush.msra.mxu0 0.0
    %1674 = vmatpush.msra.mxu0 0.0
    %1675 = vmatpush.msra.mxu0 0.0
    %1676 = vmatpush.msra.mxu0 0.0
    %1677 = vmatpush.msra.mxu0 0.0
    %1678 = vmatpush.msra.mxu0 0.0
    %1679 = vmatpush.msra.mxu0 0.0
    %1680 = vmatpush.msra.mxu0 0.0
    %1681 = vmatpush.msra.mxu0 0.0
    %1682 = vmatpush.msra.mxu0 %v1250
    %1683 = vmatmul.f32.gmra.mxu0 %v1662
    %v1684 = vpop.f32.mrf.mxu0
    %v1685 = vadd.f32 0.0, %v1684
    %1686 = vmatmul.f32.gmra.mxu0 %v1665
    %v1687 = vpop.f32.mrf.mxu0
    %v1688 = vadd.f32 0.0, %v1687
    %1689 = vdwg.mxu0
    %v1691 = vsel %vm295, %v1478, 0
    %v1694 = vsel %vm295, %v1501, 0
    %1696 = vmatpush.msra.mxu0 0.0
    %1697 = vmatpush.msra.mxu0 0.0
    %1698 = vmatpush.msra.mxu0 0.0
    %1699 = vmatpush.msra.mxu0 0.0
    %1700 = vmatpush.msra.mxu0 0.0
    %1701 = vmatpush.msra.mxu0 0.0
    %1702 = vmatpush.msra.mxu0 0.0
    %1703 = vmatpush.msra.mxu0 0.0
    %1704 = vmatpush.msra.mxu0 0.0
    %1705 = vmatpush.msra.mxu0 0.0
    %1706 = vmatpush.msra.mxu0 0.0
    %1707 = vmatpush.msra.mxu0 0.0
    %1708 = vmatpush.msra.mxu0 0.0
    %1709 = vmatpush.msra.mxu0 0.0
    %1710 = vmatpush.msra.mxu0 0.0
    %1711 = vmatpush.msra.mxu0 %v1249
    %1712 = vmatmul.f32.gmra.mxu0 %v1691
    %v1713 = vpop.f32.mrf.mxu0
    %v1714 = vadd.f32 %v1685, %v1713
    %1715 = vmatmul.f32.gmra.mxu0 %v1694
    %v1716 = vpop.f32.mrf.mxu0
    %v1717 = vadd.f32 %v1688, %v1716
    %1718 = vdwg.mxu0
    %1719 = vrot.lane.b32.xlu0 %v1300, 112
    %v1720 = vpop.permute.xlu0 %1719
    %1721 = vrot.lane.b32.xlu0 %v1326, 112
    %v1722 = vpop.permute.xlu0 %1721
    %v1723 = vsel %vm295, %v1720, 0
    %v1725 = vsel %vm295, %v1722, 0
    %1727 = vmatpush.xpose.msra.mxu0 0.0
    %1728 = vmatpush.xpose.msra.mxu0 0.0
    %1729 = vmatpush.xpose.msra.mxu0 0.0
    %1730 = vmatpush.xpose.msra.mxu0 0.0
    %1731 = vmatpush.xpose.msra.mxu0 0.0
    %1732 = vmatpush.xpose.msra.mxu0 0.0
    %1733 = vmatpush.xpose.msra.mxu0 0.0
    %1734 = vmatpush.xpose.msra.mxu0 0.0
    %1735 = vmatpush.xpose.msra.mxu0 0.0
    %1736 = vmatpush.xpose.msra.mxu0 0.0
    %1737 = vmatpush.xpose.msra.mxu0 0.0
    %1738 = vmatpush.xpose.msra.mxu0 0.0
    %1739 = vmatpush.xpose.msra.mxu0 0.0
    %1740 = vmatpush.xpose.msra.mxu0 0.0
    %1741 = vmatpush.xpose.msra.mxu0 0.0
    %1742 = vmatpush.xpose.msra.mxu0 %v1725
    %1743 = vmatmul.f32.gmra.mxu0 %v1723
    %v1744 = vpop.f32.mrf.mxu0
    %v1745 = vadd.f32 %v175, %v1744
    %1746 = vdwg.mxu0
    %1747 = vrot.lane.b32.xlu0 %v1303, 112
    %v1748 = vpop.permute.xlu0 %1747
    %1749 = vrot.lane.b32.xlu0 %v1329, 112
    %v1750 = vpop.permute.xlu0 %1749
    %v1751 = vsel %vm295, %v1748, 0
    %v1753 = vsel %vm295, %v1750, 0
    %1755 = vmatpush.xpose.msra.mxu0 0.0
    %1756 = vmatpush.xpose.msra.mxu0 0.0
    %1757 = vmatpush.xpose.msra.mxu0 0.0
    %1758 = vmatpush.xpose.msra.mxu0 0.0
    %1759 = vmatpush.xpose.msra.mxu0 0.0
    %1760 = vmatpush.xpose.msra.mxu0 0.0
    %1761 = vmatpush.xpose.msra.mxu0 0.0
    %1762 = vmatpush.xpose.msra.mxu0 0.0
    %1763 = vmatpush.xpose.msra.mxu0 0.0
    %1764 = vmatpush.xpose.msra.mxu0 0.0
    %1765 = vmatpush.xpose.msra.mxu0 0.0
    %1766 = vmatpush.xpose.msra.mxu0 0.0
    %1767 = vmatpush.xpose.msra.mxu0 0.0
    %1768 = vmatpush.xpose.msra.mxu0 0.0
    %1769 = vmatpush.xpose.msra.mxu0 0.0
    %1770 = vmatpush.xpose.msra.mxu0 %v1753
    %1771 = vmatmul.f32.gmra.mxu0 %v1751
    %v1772 = vpop.f32.mrf.mxu0
    %v1773 = vadd.f32 %v175, %v1772
    %1774 = vdwg.mxu0
    %v1775 = vsel %vm295, %v1745, -inf
    %1776 = vmax.xlane.f32.xlu0 %v1775
    %v1777 = vpop.xlane.xlu0 %1776
    %v1778 = vsel %vm295, %v1773, -inf
    %1779 = vmax.xlane.f32.xlu0 %v1778
    %v1780 = vpop.xlane.xlu0 %1779
    %v1781 = vsub.f32 %v1745, %v1777
    %v1782 = vsub.f32 %v1773, %v1780
    %v1783 = vmul.f32 %v1781, 1.442695
    %v1784 = vpow.pop %v1783
    %v1785 = vmul.f32 %v1782, 1.442695
    %v1786 = vpow.pop %v1785
    %v1787 = vsel %vm295, %v1784, 0.0
    %1788 = vadd.xlane.f32.xlu0 %v1787
    %v1789 = vpop.xlane.xlu0 %1788
    %v1790 = vsel %vm295, %v1786, 0.0
    %1791 = vadd.xlane.f32.xlu0 %v1790
    %v1792 = vpop.xlane.xlu0 %1791
    %v1793 = vrcp.pop %v1789
    %v1794 = vmul.f32 %v1789, %v1793
    %v1795 = vsub.f32 1.0, %v1794
    %v1796 = vmul.f32 %v1793, %v1795
    %v1797 = vadd.f32 %v1793, %v1796
    %vm1798 = vweird.f32 %v1789
    %vm1799 = vweird.f32 %v1793
    %vm1800 = vmor %vm1798, %vm1799
    %v1801 = vsel %vm1800, %v1793, %v1797
    %v1802 = vand.u32 2147483647, %v1789
    %vm1803 = vcmp.eq.f32.partialorder %v1802, 8.507059e+37
    %v1804 = vand.u32 %v1789, 2147483648
    %v1805 = vor.u32 1.1754944e-38, %v1804
    %v1806 = vsel %vm1803, %v1805, %v1801
    %v1807 = vmul.f32 %v1784, %v1806
    %v1808 = vrcp.pop %v1792
    %v1809 = vmul.f32 %v1792, %v1808
    %v1810 = vsub.f32 1.0, %v1809
    %v1811 = vmul.f32 %v1808, %v1810
    %v1812 = vadd.f32 %v1808, %v1811
    %vm1813 = vweird.f32 %v1792
    %vm1814 = vweird.f32 %v1808
    %vm1815 = vmor %vm1813, %vm1814
    %v1816 = vsel %vm1815, %v1808, %v1812
    %v1817 = vand.u32 2147483647, %v1792
    %vm1818 = vcmp.eq.f32.partialorder %v1817, 8.507059e+37
    %v1819 = vand.u32 %v1792, 2147483648
    %v1820 = vor.u32 1.1754944e-38, %v1819
    %v1821 = vsel %vm1818, %v1820, %v1816
    %v1822 = vmul.f32 %v1786, %v1821
    %1823 = vrot.lane.b32.xlu0 %v1352, 112
    %v1824 = vpop.permute.xlu0 %1823
    %v1827 = vsel %vm295, %v1807, 0
    %1829 = vmatpush.msra.mxu0 0.0
    %1830 = vmatpush.msra.mxu0 0.0
    %1831 = vmatpush.msra.mxu0 0.0
    %1832 = vmatpush.msra.mxu0 0.0
    %1833 = vmatpush.msra.mxu0 0.0
    %1834 = vmatpush.msra.mxu0 0.0
    %1835 = vmatpush.msra.mxu0 0.0
    %1836 = vmatpush.msra.mxu0 0.0
    %1837 = vmatpush.msra.mxu0 0.0
    %1838 = vmatpush.msra.mxu0 0.0
    %1839 = vmatpush.msra.mxu0 0.0
    %1840 = vmatpush.msra.mxu0 0.0
    %1841 = vmatpush.msra.mxu0 0.0
    %1842 = vmatpush.msra.mxu0 0.0
    %1843 = vmatpush.msra.mxu0 0.0
    %1844 = vmatpush.msra.mxu0 %v1824
    %1845 = vmatmul.f32.gmra.mxu0 %v1827
    %v1846 = vpop.f32.mrf.mxu0
    %v1847 = vadd.f32 0.0, %v1846
    %1848 = vdwg.mxu0
    %1849 = vrot.lane.b32.xlu0 %v1355, 112
    %v1850 = vpop.permute.xlu0 %1849
    %v1853 = vsel %vm295, %v1822, 0
    %1855 = vmatpush.msra.mxu0 0.0
    %1856 = vmatpush.msra.mxu0 0.0
    %1857 = vmatpush.msra.mxu0 0.0
    %1858 = vmatpush.msra.mxu0 0.0
    %1859 = vmatpush.msra.mxu0 0.0
    %1860 = vmatpush.msra.mxu0 0.0
    %1861 = vmatpush.msra.mxu0 0.0
    %1862 = vmatpush.msra.mxu0 0.0
    %1863 = vmatpush.msra.mxu0 0.0
    %1864 = vmatpush.msra.mxu0 0.0
    %1865 = vmatpush.msra.mxu0 0.0
    %1866 = vmatpush.msra.mxu0 0.0
    %1867 = vmatpush.msra.mxu0 0.0
    %1868 = vmatpush.msra.mxu0 0.0
    %1869 = vmatpush.msra.mxu0 0.0
    %1870 = vmatpush.msra.mxu0 %v1850
    %1871 = vmatmul.f32.gmra.mxu0 %v1853
    %v1872 = vpop.f32.mrf.mxu0
    %v1873 = vadd.f32 0.0, %v1872
    %1874 = vdwg.mxu0
    %v1876 = vsel %vm295, %v1847, 0
    %v1879 = vsel %vm295, %v1873, 0
    %1881 = vmatpush.msra.mxu0 0.0
    %1882 = vmatpush.msra.mxu0 0.0
    %1883 = vmatpush.msra.mxu0 0.0
    %1884 = vmatpush.msra.mxu0 0.0
    %1885 = vmatpush.msra.mxu0 0.0
    %1886 = vmatpush.msra.mxu0 0.0
    %1887 = vmatpush.msra.mxu0 0.0
    %1888 = vmatpush.msra.mxu0 0.0
    %1889 = vmatpush.msra.mxu0 0.0
    %1890 = vmatpush.msra.mxu0 0.0
    %1891 = vmatpush.msra.mxu0 0.0
    %1892 = vmatpush.msra.mxu0 0.0
    %1893 = vmatpush.msra.mxu0 0.0
    %1894 = vmatpush.msra.mxu0 0.0
    %1895 = vmatpush.msra.mxu0 0.0
    %1896 = vmatpush.msra.mxu0 %v1251
    %1897 = vmatmul.f32.gmra.mxu0 %v1876
    %v1898 = vpop.f32.mrf.mxu0
    %v1899 = vadd.f32 0.0, %v1898
    %1900 = vmatmul.f32.gmra.mxu0 %v1879
    %v1901 = vpop.f32.mrf.mxu0
    %v1902 = vadd.f32 0.0, %v1901
    %1903 = vdwg.mxu0
    %v1904 = vadd.f32 %v1714, %v1899
    %v1905 = vadd.f32 %v1717, %v1902
    %1906 = vrot.lane.b32.xlu0 %v1300, 104
    %v1907 = vpop.permute.xlu0 %1906
    %1908 = vrot.lane.b32.xlu0 %v1326, 104
    %v1909 = vpop.permute.xlu0 %1908
    %v1910 = vsel %vm295, %v1907, 0
    %v1912 = vsel %vm295, %v1909, 0
    %1914 = vmatpush.xpose.msra.mxu0 0.0
    %1915 = vmatpush.xpose.msra.mxu0 0.0
    %1916 = vmatpush.xpose.msra.mxu0 0.0
    %1917 = vmatpush.xpose.msra.mxu0 0.0
    %1918 = vmatpush.xpose.msra.mxu0 0.0
    %1919 = vmatpush.xpose.msra.mxu0 0.0
    %1920 = vmatpush.xpose.msra.mxu0 0.0
    %1921 = vmatpush.xpose.msra.mxu0 0.0
    %1922 = vmatpush.xpose.msra.mxu0 0.0
    %1923 = vmatpush.xpose.msra.mxu0 0.0
    %1924 = vmatpush.xpose.msra.mxu0 0.0
    %1925 = vmatpush.xpose.msra.mxu0 0.0
    %1926 = vmatpush.xpose.msra.mxu0 0.0
    %1927 = vmatpush.xpose.msra.mxu0 0.0
    %1928 = vmatpush.xpose.msra.mxu0 0.0
    %1929 = vmatpush.xpose.msra.mxu0 %v1912
    %1930 = vmatmul.f32.gmra.mxu0 %v1910
    %v1931 = vpop.f32.mrf.mxu0
    %v1932 = vadd.f32 %v175, %v1931
    %1933 = vdwg.mxu0
    %1934 = vrot.lane.b32.xlu0 %v1303, 104
    %v1935 = vpop.permute.xlu0 %1934
    %1936 = vrot.lane.b32.xlu0 %v1329, 104
    %v1937 = vpop.permute.xlu0 %1936
    %v1938 = vsel %vm295, %v1935, 0
    %v1940 = vsel %vm295, %v1937, 0
    %1942 = vmatpush.xpose.msra.mxu0 0.0
    %1943 = vmatpush.xpose.msra.mxu0 0.0
    %1944 = vmatpush.xpose.msra.mxu0 0.0
    %1945 = vmatpush.xpose.msra.mxu0 0.0
    %1946 = vmatpush.xpose.msra.mxu0 0.0
    %1947 = vmatpush.xpose.msra.mxu0 0.0
    %1948 = vmatpush.xpose.msra.mxu0 0.0
    %1949 = vmatpush.xpose.msra.mxu0 0.0
    %1950 = vmatpush.xpose.msra.mxu0 0.0
    %1951 = vmatpush.xpose.msra.mxu0 0.0
    %1952 = vmatpush.xpose.msra.mxu0 0.0
    %1953 = vmatpush.xpose.msra.mxu0 0.0
    %1954 = vmatpush.xpose.msra.mxu0 0.0
    %1955 = vmatpush.xpose.msra.mxu0 0.0
    %1956 = vmatpush.xpose.msra.mxu0 0.0
    %1957 = vmatpush.xpose.msra.mxu0 %v1940
    %1958 = vmatmul.f32.gmra.mxu0 %v1938
    %v1959 = vpop.f32.mrf.mxu0
    %v1960 = vadd.f32 %v175, %v1959
    %1961 = vdwg.mxu0
    %v1962 = vsel %vm295, %v1932, -inf
    %1963 = vmax.xlane.f32.xlu0 %v1962
    %v1964 = vpop.xlane.xlu0 %1963
    %v1965 = vsel %vm295, %v1960, -inf
    %1966 = vmax.xlane.f32.xlu0 %v1965
    %v1967 = vpop.xlane.xlu0 %1966
    %v1968 = vsub.f32 %v1932, %v1964
    %v1969 = vsub.f32 %v1960, %v1967
    %v1970 = vmul.f32 %v1968, 1.442695
    %v1971 = vpow.pop %v1970
    %v1972 = vmul.f32 %v1969, 1.442695
    %v1973 = vpow.pop %v1972
    %v1974 = vsel %vm295, %v1971, 0.0
    %1975 = vadd.xlane.f32.xlu0 %v1974
    %v1976 = vpop.xlane.xlu0 %1975
    %v1977 = vsel %vm295, %v1973, 0.0
    %1978 = vadd.xlane.f32.xlu0 %v1977
    %v1979 = vpop.xlane.xlu0 %1978
    %v1980 = vrcp.pop %v1976
    %v1981 = vmul.f32 %v1976, %v1980
    %v1982 = vsub.f32 1.0, %v1981
    %v1983 = vmul.f32 %v1980, %v1982
    %v1984 = vadd.f32 %v1980, %v1983
    %vm1985 = vweird.f32 %v1976
    %vm1986 = vweird.f32 %v1980
    %vm1987 = vmor %vm1985, %vm1986
    %v1988 = vsel %vm1987, %v1980, %v1984
    %v1989 = vand.u32 2147483647, %v1976
    %vm1990 = vcmp.eq.f32.partialorder %v1989, 8.507059e+37
    %v1991 = vand.u32 %v1976, 2147483648
    %v1992 = vor.u32 1.1754944e-38, %v1991
    %v1993 = vsel %vm1990, %v1992, %v1988
    %v1994 = vmul.f32 %v1971, %v1993
    %v1995 = vrcp.pop %v1979
    %v1996 = vmul.f32 %v1979, %v1995
    %v1997 = vsub.f32 1.0, %v1996
    %v1998 = vmul.f32 %v1995, %v1997
    %v1999 = vadd.f32 %v1995, %v1998
    %vm2000 = vweird.f32 %v1979
    %vm2001 = vweird.f32 %v1995
    %vm2002 = vmor %vm2000, %vm2001
    %v2003 = vsel %vm2002, %v1995, %v1999
    %v2004 = vand.u32 2147483647, %v1979
    %vm2005 = vcmp.eq.f32.partialorder %v2004, 8.507059e+37
    %v2006 = vand.u32 %v1979, 2147483648
    %v2007 = vor.u32 1.1754944e-38, %v2006
    %v2008 = vsel %vm2005, %v2007, %v2003
    %v2009 = vmul.f32 %v1973, %v2008
    %2010 = vrot.lane.b32.xlu0 %v1352, 104
    %v2011 = vpop.permute.xlu0 %2010
    %v2014 = vsel %vm295, %v1994, 0
    %2016 = vmatpush.msra.mxu0 0.0
    %2017 = vmatpush.msra.mxu0 0.0
    %2018 = vmatpush.msra.mxu0 0.0
    %2019 = vmatpush.msra.mxu0 0.0
    %2020 = vmatpush.msra.mxu0 0.0
    %2021 = vmatpush.msra.mxu0 0.0
    %2022 = vmatpush.msra.mxu0 0.0
    %2023 = vmatpush.msra.mxu0 0.0
    %2024 = vmatpush.msra.mxu0 0.0
    %2025 = vmatpush.msra.mxu0 0.0
    %2026 = vmatpush.msra.mxu0 0.0
    %2027 = vmatpush.msra.mxu0 0.0
    %2028 = vmatpush.msra.mxu0 0.0
    %2029 = vmatpush.msra.mxu0 0.0
    %2030 = vmatpush.msra.mxu0 0.0
    %2031 = vmatpush.msra.mxu0 %v2011
    %2032 = vmatmul.f32.gmra.mxu0 %v2014
    %v2033 = vpop.f32.mrf.mxu0
    %v2034 = vadd.f32 0.0, %v2033
    %2035 = vdwg.mxu0
    %2036 = vrot.lane.b32.xlu0 %v1355, 104
    %v2037 = vpop.permute.xlu0 %2036
    %v2040 = vsel %vm295, %v2009, 0
    %2042 = vmatpush.msra.mxu0 0.0
    %2043 = vmatpush.msra.mxu0 0.0
    %2044 = vmatpush.msra.mxu0 0.0
    %2045 = vmatpush.msra.mxu0 0.0
    %2046 = vmatpush.msra.mxu0 0.0
    %2047 = vmatpush.msra.mxu0 0.0
    %2048 = vmatpush.msra.mxu0 0.0
    %2049 = vmatpush.msra.mxu0 0.0
    %2050 = vmatpush.msra.mxu0 0.0
    %2051 = vmatpush.msra.mxu0 0.0
    %2052 = vmatpush.msra.mxu0 0.0
    %2053 = vmatpush.msra.mxu0 0.0
    %2054 = vmatpush.msra.mxu0 0.0
    %2055 = vmatpush.msra.mxu0 0.0
    %2056 = vmatpush.msra.mxu0 0.0
    %2057 = vmatpush.msra.mxu0 %v2037
    %2058 = vmatmul.f32.gmra.mxu0 %v2040
    %v2059 = vpop.f32.mrf.mxu0
    %v2060 = vadd.f32 0.0, %v2059
    %2061 = vdwg.mxu0
    %v2063 = vsel %vm295, %v2034, 0
    %v2066 = vsel %vm295, %v2060, 0
    %2068 = vmatpush.msra.mxu0 0.0
    %2069 = vmatpush.msra.mxu0 0.0
    %2070 = vmatpush.msra.mxu0 0.0
    %2071 = vmatpush.msra.mxu0 0.0
    %2072 = vmatpush.msra.mxu0 0.0
    %2073 = vmatpush.msra.mxu0 0.0
    %2074 = vmatpush.msra.mxu0 0.0
    %2075 = vmatpush.msra.mxu0 0.0
    %2076 = vmatpush.msra.mxu0 0.0
    %2077 = vmatpush.msra.mxu0 0.0
    %2078 = vmatpush.msra.mxu0 0.0
    %2079 = vmatpush.msra.mxu0 0.0
    %2080 = vmatpush.msra.mxu0 0.0
    %2081 = vmatpush.msra.mxu0 0.0
    %2082 = vmatpush.msra.mxu0 0.0
    %2083 = vmatpush.msra.mxu0 %v1252
    %2084 = vmatmul.f32.gmra.mxu0 %v2063
    %v2085 = vpop.f32.mrf.mxu0
    %v2086 = vadd.f32 0.0, %v2085
    %2087 = vmatmul.f32.gmra.mxu0 %v2066
    %v2088 = vpop.f32.mrf.mxu0
    %v2089 = vadd.f32 0.0, %v2088
    %2090 = vdwg.mxu0
    %v2091 = vadd.f32 %v1904, %v2086
    %v2092 = vadd.f32 %v1905, %v2089
    %v2094 = vperm.slane %v1254, 0
    %v2096 = vadd.f32 %v2091, %v2094
    %v2097 = vadd.f32 %v2092, %v2094
    %v2098 = vadd.f32 %v1225, %v2096
    %v2099 = vadd.f32 %v1226, %v2097
    %s2100 = scalar_lea.vmem [#allocation11], 1
    %v2101 = vld [vmem:[%s2100] sm:$0x1]
    %s2102 = scalar_lea.vmem %s15, 1
    %v2103 = vld [vmem:[%s2102] sm:$0x1]
    %v2104 = vsel %vm213, %v2098, 0.0
    %2105 = vadd.xlane.f32.xlu0 %v2104
    %v2106 = vpop.xlane.xlu0 %2105
    %v2107 = vsel %vm213, %v2099, 0.0
    %2108 = vadd.xlane.f32.xlu0 %v2107
    %v2109 = vpop.xlane.xlu0 %2108
    %v2110 = vmul.f32 %v2106, %v1053
    %v2111 = vmul.f32 %v2109, %v1053
    %v2112 = vsub.f32 %v2098, %v2110
    %v2113 = vsub.f32 %v2099, %v2111
    %v2114 = vmul.f32 %v2112, %v2112
    %v2115 = vmul.f32 %v2113, %v2113
    %v2116 = vsel %vm213, %v2114, 0.0
    %2117 = vadd.xlane.f32.xlu0 %v2116
    %v2118 = vpop.xlane.xlu0 %2117
    %v2119 = vsel %vm213, %v2115, 0.0
    %2120 = vadd.xlane.f32.xlu0 %v2119
    %v2121 = vpop.xlane.xlu0 %2120
    %v2122 = vmul.f32 %v2118, %v1053
    %v2123 = vmul.f32 %v2121, %v1053
    %v2124 = vadd.f32 %v2122, 1e-05
    %v2125 = vadd.f32 %v2123, 1e-05
    %v2126 = vrsqrt.pop %v2124
    %v2127 = vmul.f32 %v2126, %v2124
    %v2128 = vmul.f32 %v2127, %v2126
    %v2129 = vmul.f32 0.5, %v2128
    %v2130 = vsub.f32 1.5, %v2129
    %v2131 = vmul.f32 %v2126, %v2130
    %vm2132 = vweird.f32 %v2124
    %vm2133 = vweird.f32 %v2126
    %vm2134 = vmor %vm2132, %vm2133
    %v2135 = vsel %vm2134, %v2126, %v2131
    %v2136 = vrsqrt.pop %v2125
    %v2137 = vmul.f32 %v2136, %v2125
    %v2138 = vmul.f32 %v2137, %v2136
    %v2139 = vmul.f32 0.5, %v2138
    %v2140 = vsub.f32 1.5, %v2139
    %v2141 = vmul.f32 %v2136, %v2140
    %vm2142 = vweird.f32 %v2125
    %vm2143 = vweird.f32 %v2136
    %vm2144 = vmor %vm2142, %vm2143
    %v2145 = vsel %vm2144, %v2136, %v2141
    %v2146 = vmul.f32 %v2112, %v2135
    %v2147 = vmul.f32 %v2113, %v2145
    %v2149 = vperm.slane %v2101, 0
    %v2151 = vmul.f32 %v2146, %v2149
    %v2152 = vmul.f32 %v2147, %v2149
    %v2154 = vperm.slane %v2103, 0
    %v2156 = vadd.f32 %v2151, %v2154
    %v2157 = vadd.f32 %v2152, %v2154
    %v2159 = vperm.slane %v1261, 0
    %v2162 = vsel %vm213, %v2156, 0
    %v2165 = vsel %vm213, %v2157, 0
    %2167 = vmatpush.msra.mxu0 0.0
    %2168 = vmatpush.msra.mxu0 0.0
    %2169 = vmatpush.msra.mxu0 0.0
    %2170 = vmatpush.msra.mxu0 0.0
    %2171 = vmatpush.msra.mxu0 0.0
    %2172 = vmatpush.msra.mxu0 0.0
    %2173 = vmatpush.msra.mxu0 0.0
    %2174 = vmatpush.msra.mxu0 0.0
    %2175 = vmatpush.msra.mxu0 0.0
    %2176 = vmatpush.msra.mxu0 0.0
    %2177 = vmatpush.msra.mxu0 0.0
    %2178 = vmatpush.msra.mxu0 0.0
    %2179 = vmatpush.msra.mxu0 %v1259
    %2180 = vmatpush.msra.mxu0 %v1258
    %2181 = vmatpush.msra.mxu0 %v1257
    %2182 = vmatpush.msra.mxu0 %v1256
    %2183 = vmatmul.f32.gmra.mxu0 %v2162
    %v2184 = vpop.f32.mrf.mxu0
    %v2185 = vadd.f32 %v2159, %v2184
    %2186 = vmatmul.f32.gmra.mxu0 %v2165
    %v2187 = vpop.f32.mrf.mxu0
    %v2188 = vadd.f32 %v2159, %v2187
    %2189 = vdwg.mxu0
    %v2190 = vmax.f32 %v2185, 0.0
    %v2191 = vmax.f32 %v2188, 0.0
    %v2193 = vperm.slane %v1272, 0
    %v2196 = vsel %vm1139, %v2190, 0
    %v2199 = vsel %vm1139, %v2191, 0
    %2201 = vmatpush.msra.mxu0 0.0
    %2202 = vmatpush.msra.mxu0 0.0
    %2203 = vmatpush.msra.mxu0 0.0
    %2204 = vmatpush.msra.mxu0 0.0
    %2205 = vmatpush.msra.mxu0 0.0
    %2206 = vmatpush.msra.mxu0 0.0
    %2207 = vmatpush.msra.mxu0 0.0
    %2208 = vmatpush.msra.mxu0 0.0
    %2209 = vmatpush.msra.mxu0 %v1270
    %2210 = vmatpush.msra.mxu0 %v1269
    %2211 = vmatpush.msra.mxu0 %v1268
    %2212 = vmatpush.msra.mxu0 %v1267
    %2213 = vmatpush.msra.mxu0 %v1266
    %2214 = vmatpush.msra.mxu0 %v1265
    %2215 = vmatpush.msra.mxu0 %v1264
    %2216 = vmatpush.msra.mxu0 %v1263
    %2217 = vmatmul.f32.gmra.mxu0 %v2196
    %v2218 = vpop.f32.mrf.mxu0
    %v2219 = vadd.f32 %v2193, %v2218
    %2220 = vmatmul.f32.gmra.mxu0 %v2199
    %v2221 = vpop.f32.mrf.mxu0
    %v2222 = vadd.f32 %v2193, %v2221
    %2223 = vdwg.mxu0
    %v2224 = vadd.f32 %v2156, %v2219
    %v2225 = vadd.f32 %v2157, %v2222
    %s2226 = scalar_lea.vmem %s16, 1
    %v2227 = vld [vmem:[%s2226] sm:$0x1]
    %s2228 = scalar_lea.vmem [#allocation13], 1
    %v2229 = vld [vmem:[%s2228] sm:$0x1]
    %v2230 = vsel %vm213, %v2224, 0.0
    %2231 = vadd.xlane.f32.xlu0 %v2230
    %v2232 = vpop.xlane.xlu0 %2231
    %v2233 = vsel %vm213, %v2225, 0.0
    %2234 = vadd.xlane.f32.xlu0 %v2233
    %v2235 = vpop.xlane.xlu0 %2234
    %v2236 = vmul.f32 %v2232, %v1053
    %v2237 = vmul.f32 %v2235, %v1053
    %v2238 = vsub.f32 %v2224, %v2236
    %v2239 = vsub.f32 %v2225, %v2237
    %v2240 = vmul.f32 %v2238, %v2238
    %v2241 = vmul.f32 %v2239, %v2239
    %v2242 = vsel %vm213, %v2240, 0.0
    %2243 = vadd.xlane.f32.xlu0 %v2242
    %v2244 = vpop.xlane.xlu0 %2243
    %v2245 = vsel %vm213, %v2241, 0.0
    %2246 = vadd.xlane.f32.xlu0 %v2245
    %v2247 = vpop.xlane.xlu0 %2246
    %v2248 = vmul.f32 %v2244, %v1053
    %v2249 = vmul.f32 %v2247, %v1053
    %v2250 = vadd.f32 %v2248, 1e-05
    %v2251 = vadd.f32 %v2249, 1e-05
    %v2252 = vrsqrt.pop %v2250
    %v2253 = vmul.f32 %v2252, %v2250
    %v2254 = vmul.f32 %v2253, %v2252
    %v2255 = vmul.f32 0.5, %v2254
    %v2256 = vsub.f32 1.5, %v2255
    %v2257 = vmul.f32 %v2252, %v2256
    %vm2258 = vweird.f32 %v2250
    %vm2259 = vweird.f32 %v2252
    %vm2260 = vmor %vm2258, %vm2259
    %v2261 = vsel %vm2260, %v2252, %v2257
    %v2262 = vrsqrt.pop %v2251
    %v2263 = vmul.f32 %v2262, %v2251
    %v2264 = vmul.f32 %v2263, %v2262
    %v2265 = vmul.f32 0.5, %v2264
    %v2266 = vsub.f32 1.5, %v2265
    %v2267 = vmul.f32 %v2262, %v2266
    %vm2268 = vweird.f32 %v2251
    %vm2269 = vweird.f32 %v2262
    %vm2270 = vmor %vm2268, %vm2269
    %v2271 = vsel %vm2270, %v2262, %v2267
    %v2272 = vmul.f32 %v2238, %v2261
    %v2273 = vmul.f32 %v2239, %v2271
    %v2275 = vperm.slane %v2227, 0
    %v2277 = vmul.f32 %v2272, %v2275
    %v2278 = vmul.f32 %v2273, %v2275
    %v2280 = vperm.slane %v2229, 0
    %v2282 = vadd.f32 %v2277, %v2280
    %v2283 = vadd.f32 %v2278, %v2280
    %v2284 = vld [vmem:[%s18] sm:$0x1]
    %v2285 = vld [vmem:[%s19] sm:$0x1]
    %v2286 = vsel %vm213, %v2282, 0.0
    %2287 = vadd.xlane.f32.xlu0 %v2286
    %v2288 = vpop.xlane.xlu0 %2287
    %v2289 = vsel %vm213, %v2283, 0.0
    %2290 = vadd.xlane.f32.xlu0 %v2289
    %v2291 = vpop.xlane.xlu0 %2290
    %v2292 = vmul.f32 %v2288, %v1053
    %v2293 = vmul.f32 %v2291, %v1053
    %v2294 = vsub.f32 %v2282, %v2292
    %v2295 = vsub.f32 %v2283, %v2293
    %v2296 = vmul.f32 %v2294, %v2294
    %v2297 = vmul.f32 %v2295, %v2295
    %v2298 = vsel %vm213, %v2296, 0.0
    %2299 = vadd.xlane.f32.xlu0 %v2298
    %v2300 = vpop.xlane.xlu0 %2299
    %v2301 = vsel %vm213, %v2297, 0.0
    %2302 = vadd.xlane.f32.xlu0 %v2301
    %v2303 = vpop.xlane.xlu0 %2302
    %v2304 = vmul.f32 %v2300, %v1053
    %v2305 = vmul.f32 %v2303, %v1053
    %v2306 = vadd.f32 %v2304, 1e-05
    %v2307 = vadd.f32 %v2305, 1e-05
    %v2308 = vrsqrt.pop %v2306
    %v2309 = vmul.f32 %v2308, %v2306
    %v2310 = vmul.f32 %v2309, %v2308
    %v2311 = vmul.f32 0.5, %v2310
    %v2312 = vsub.f32 1.5, %v2311
    %v2313 = vmul.f32 %v2308, %v2312
    %vm2314 = vweird.f32 %v2306
    %vm2315 = vweird.f32 %v2308
    %vm2316 = vmor %vm2314, %vm2315
    %v2317 = vsel %vm2316, %v2308, %v2313
    %v2318 = vrsqrt.pop %v2307
    %v2319 = vmul.f32 %v2318, %v2307
    %v2320 = vmul.f32 %v2319, %v2318
    %v2321 = vmul.f32 0.5, %v2320
    %v2322 = vsub.f32 1.5, %v2321
    %v2323 = vmul.f32 %v2318, %v2322
    %vm2324 = vweird.f32 %v2307
    %vm2325 = vweird.f32 %v2318
    %vm2326 = vmor %vm2324, %vm2325
    %v2327 = vsel %vm2326, %v2318, %v2323
    %v2328 = vmul.f32 %v2294, %v2317
    %v2329 = vmul.f32 %v2295, %v2327
    %v2331 = vperm.slane %v2284, 0
    %v2333 = vmul.f32 %v2328, %v2331
    %v2334 = vmul.f32 %v2329, %v2331
    %v2336 = vperm.slane %v2285, 0
    %v2338 = vadd.f32 %v2333, %v2336
    %v2339 = vadd.f32 %v2334, %v2336
    %2340 = vst.msk [vmem:[#allocation14] sm:$0xff] %vm213, %v2338
    %2341 = vst.msk [vmem:[#allocation14 + $0x8] sm:$0xff] %vm213, %v2339
    // Predicated region
    $region110: #{tpu_custom_call.1} parent=1 // pred_check
      _
    $region111: #{tpu_custom_call.1} parent=1 // pred_check_branch
      %2343 = sbr.rel (0) target = $region113
    $region112: #{tpu_custom_call.1} parent=1 // pred_region
      %2345 = vsyncadd [#allocation4], 0
      %s2346 = sshll.u32 [#allocation14], 4
      %s2347 = int_to_ptr.vmem [resolvable:$true] %s2346
      %s2348 = sshll.u32 %s20, 4
      %s2349 = int_to_ptr.hbm [resolvable:$true] %s2348
      %2354 = dma.vmem_to_hbm [thread:$0]  %s2347, 256, %s2349, [#allocation4], 128, 128, 8
    $region113: #{tpu_custom_call.1} parent=1 // pred_fallthru
      _
    // Predicated region
    $region114: #{tpu_custom_call.1} parent=1 // pred_check
      _
    $region115: #{tpu_custom_call.1} parent=1 // pred_check_branch
      %2356 = sbr.rel (0) target = $region117
    $region116: #{tpu_custom_call.1} parent=1 // pred_region
      %2358 = dma.done [#allocation4], 256
    $region117: #{tpu_custom_call.1} parent=1 // pred_fallthru
      _
    %2359 = vsyncpa [#allocation3], 1
    %2360 = vsyncpa [#allocation6], 1
    %2361 = vsyncpa [#allocation9], 1
    %2362 = vsyncpa [#allocation12], 1
    %2363 = vsyncpa [#allocation4], 1

</llo_original>
